<compile_context>
chip_gen: v6e
topology: v6e:2x2x1
jax: 0.10.0
libtpu: 0.0.40
codegen_flags: <defaults>
</compile_context>

<pallas_src>
import functools

import jax
import jax.numpy as jnp
from jax.experimental import pallas as pl
from jax.experimental.pallas import tpu as pltpu


def _round_up(x, m):
    return ((x + m - 1) // m) * m


def _conv_s2d_lrelu_kernel(x_ref, w_ref, b_ref, o_ref, *, alpha, Ho, Wo, Dh, Dw):
    # x_ref: (1, Hh, Wh, Ks) bf16  space-to-depth input block, one sample
    # w_ref: (G,  Ks, TN)    bf16  G = Dh*Dw regrouped conv taps (resident)
    # b_ref: (1,  TN)        f32   bias slab (resident)
    # o_ref: (1, Ho, Wo, TN) out   lane-dense output block (TN % 128 == 0)
    tn = o_ref.shape[-1]
    bias = b_ref[...]                                   # (1, TN) f32
    taps = [w_ref[g] for g in range(Dh * Dw)]           # hoisted (Ks, TN) loads
    # TODO(synk): for large Ho, wrap this loop in lax.fori_loop(unroll=k) to
    # bound compile time; for typical discriminator tiles Python unroll is fine.
    for ho in range(Ho):
        acc = jnp.zeros((Wo, tn), jnp.float32)
        for dh in range(Dh):
            for dw in range(Dw):
                patch = x_ref[0, ho + dh, dw:dw + Wo, :]        # (Wo, Ks) bf16
                acc = acc + jnp.dot(patch, taps[dh * Dw + dw],
                                    preferred_element_type=jnp.float32)
        acc = acc + bias
        acc = jnp.maximum(acc, alpha * acc)                      # LeakyReLU
        o_ref[0, ho, :, :] = acc.astype(o_ref.dtype)


def conv_lrelu(x, weight, bias, *, stride=2, padding=1, alpha=0.2,
               out_dtype=jnp.bfloat16):
    """ConvLReLU forward.  x: [N,C,H,W], weight: [O,C,kH,kW], bias: [O].

    Operands hit the MXU as bf16 with f32 accumulation; pass
    out_dtype=jnp.float32 for an f32 result array.  (For stacks of ConvLReLU
    layers, keep activations NHWC between layers and skip the final transpose.)
    """
    N, C, H, W = x.shape
    O, Cw, kH, kW = weight.shape
    assert Cw == C
    s = stride
    Ho = (H + 2 * padding - kH) // s + 1
    Wo = (W + 2 * padding - kW) // s + 1
    Dh = -(-kH // s)                      # ceil(kH / s)
    Dw = -(-kW // s)
    Hh = Ho + Dh - 1                      # space-to-depth rows the kernel reads
    Wh = Wo + Dw - 1
    Ks = s * s * C                        # channels after space-to-depth
    G = Dh * Dw

    # ---- glue: bf16 cast FIRST, then zero-pad and space-to-depth ----
    x_nhwc = jnp.transpose(x, (0, 2, 3, 1)).astype(jnp.bfloat16)
    Hin, Win = s * Hh, s * Wh             # exactly the padded extent the conv reads
    pad_b = max(Hin - H - padding, 0)
    pad_r = max(Win - W - padding, 0)
    xp = jnp.pad(x_nhwc, ((0, 0), (padding, pad_b), (padding, pad_r), (0, 0)))
    xp = xp[:, :Hin, :Win, :]
    xs = xp.reshape(N, Hh, s, Wh, s, C).transpose(0, 1, 3, 2, 4, 5)
    xs = xs.reshape(N, Hh, Wh, Ks)        # channel index = (pr*s + pc)*C + c

    # ---- weight -> (G, Ks, Opad): tap (kh,kw) = (s*dh+pr, s*dw+pc) lands in
    # group g = dh*Dw + dw at channel (pr*s+pc)*C + c; missing taps are zero ----
    Opad = _round_up(O, 128)              # lane-dense, unmasked output stores
    wp = jnp.pad(weight.astype(jnp.bfloat16),
                 ((0, 0), (0, 0), (0, Dh * s - kH), (0, Dw * s - kW)))
    wg = wp.reshape(O, C, Dh, s, Dw, s).transpose(2, 4, 3, 5, 1, 0)
    wg = wg.reshape(G, Ks, O)
    wg = jnp.pad(wg, ((0, 0), (0, 0), (0, Opad - O)))
    bg = jnp.pad(bias.astype(jnp.float32), (0, Opad - O)).reshape(1, Opad)

    # ---- O tiling keeps the resident weight slab bounded (v7x: 64 MiB/TC) ----
    if Opad <= 512:
        TN = Opad
    elif Opad % 512 == 0:
        TN = 512
    elif Opad % 256 == 0:
        TN = 256
    else:
        TN = 128
    n_ot = Opad // TN

    # ---- explicit VMEM budget from actual block footprint ----
    out_bytes = jnp.dtype(out_dtype).itemsize
    x_blk = Hh * Wh * Ks * 2
    w_blk = G * Ks * TN * 2
    o_blk = Ho * Wo * TN * out_bytes
    acc_b = Ho * Wo * TN * 4
    w_bufs = 1 if n_ot == 1 else 2
    needed = 2 * x_blk + w_bufs * w_blk + 2 * TN * 4 + 2 * o_blk + 2 * acc_b
    vmem_limit = int(min(max(2 * needed, 8 * 1024 * 1024), 64 * 1024 * 1024))

    cost = pl.CostEstimate(
        flops=2 * N * Ho * Wo * G * Ks * Opad,
        transcendentals=0,
        bytes_accessed=xs.size * 2 + wg.size * 2 + bg.size * 4
        + N * Ho * Wo * Opad * out_bytes,
    )

    kernel = functools.partial(_conv_s2d_lrelu_kernel, alpha=alpha,
                               Ho=Ho, Wo=Wo, Dh=Dh, Dw=Dw)
    x_map = lambda n, j: (n, 0, 0, 0)
    w_map = lambda n, j: (0, 0, j)
    b_map = lambda n, j: (0, j)
    o_map = lambda n, j: (n, 0, 0, j)

    def build(single_buffer_resident):
        if single_buffer_resident:
            # grid-invariant weight/bias: single buffer (halves their VMEM)
            w_spec = pl.BlockSpec((G, Ks, TN), w_map, pipeline_mode=pl.Buffered(1))
            b_spec = pl.BlockSpec((1, TN), b_map, pipeline_mode=pl.Buffered(1))
        else:
            w_spec = pl.BlockSpec((G, Ks, TN), w_map)
            b_spec = pl.BlockSpec((1, TN), b_map)
        return pl.pallas_call(
            kernel,
            out_shape=jax.ShapeDtypeStruct((N, Ho, Wo, Opad), out_dtype),
            grid=(N, n_ot),
            in_specs=[
                pl.BlockSpec((1, Hh, Wh, Ks), x_map),   # double-buffered input
                w_spec,
                b_spec,
            ],
            out_specs=pl.BlockSpec((1, Ho, Wo, TN), o_map),
            compiler_params=pltpu.CompilerParams(
                dimension_semantics=("parallel", "parallel"),
                vmem_limit_bytes=vmem_limit,
            ),
            cost_estimate=cost,
        )

    try:
        out = build(single_buffer_resident=(n_ot == 1))(xs, wg, bg)
    except Exception:
        # Fallback for JAX versions without pl.Buffered on pallas_call specs.
        out = build(single_buffer_resident=False)(xs, wg, bg)

    # strip channel padding; back to NCHW only at the API boundary
    y = jnp.transpose(out[..., :O], (0, 3, 1, 2))
    return y


if __name__ == "__main__":
    key = jax.random.PRNGKey(0)
    k_x, k_w, k_b = jax.random.split(key, 3)

    # Small shapes consistent with the module: N=2, C_in=4, H=W=16, C_out=8
    N, C_in, H, W = 2, 4, 16, 16
    C_out, kH, kW = 8, 4, 4
    stride, padding, alpha = 2, 1, 0.2

    x = jax.random.normal(k_x, (N, C_in, H, W), dtype=jnp.float32)

    # Deterministic init mimicking PyTorch Conv2d default (uniform +/- 1/sqrt(fan_in))
    fan_in = C_in * kH * kW
    bound = 1.0 / jnp.sqrt(jnp.float32(fan_in))
    weight = jax.random.uniform(k_w, (C_out, C_in, kH, kW), jnp.float32, -bound, bound)
    bias = jax.random.uniform(k_b, (C_out,), jnp.float32, -bound, bound)

    y = conv_lrelu(x, weight, bias, stride=stride, padding=padding, alpha=alpha)
    jax.block_until_ready(y)

    # Reference: XLA conv + leaky relu on the same bf16-quantized operands
    # (f32 accumulation).  Kernel output is bf16, so allow bf16 rounding slack.
    xq = x.astype(jnp.bfloat16).astype(jnp.float32)
    wq = weight.astype(jnp.bfloat16).astype(jnp.float32)
    ref = jax.lax.conv_general_dilated(
        xq, wq, window_strides=(stride, stride),
        padding=[(padding, padding), (padding, padding)],
        dimension_numbers=("NCHW", "OIHW", "NCHW"),
    ) + bias.reshape(1, C_out, 1, 1)
    ref = jnp.where(ref >= 0.0, ref, alpha * ref)

    assert y.shape == (N, C_out, H // 2, W // 2), y.shape
    err = float(jnp.max(jnp.abs(y.astype(jnp.float32) - ref)))
    assert err < 5e-2, err

    print("KERNEL_OK")
</pallas_src>

<mosaic_0001>
module attributes {stable_mosaic.version = 11 : i64} {
  func.func @_conv_s2d_lrelu_kernel(%arg0: i32, %arg1: i32, %arg2: memref<1x9x9x16xbf16, #tpu.memory_space<vmem>>, %arg3: memref<4x16x128xbf16, #tpu.memory_space<vmem>>, %arg4: memref<1x128xf32, #tpu.memory_space<vmem>>, %arg5: memref<1x8x8x128xbf16, #tpu.memory_space<vmem>>) attributes {dimension_semantics = [#tpu.dimension_semantics<parallel>, #tpu.dimension_semantics<parallel>], iteration_bounds = array<i64: 2, 1>, scalar_prefetch = 0 : i64, scratch_operands = 0 : i64, tpu.core_type = #tpu.core_type<tc>, window_params = [{transform_indices = @transform_0, window_bounds = array<i64: 1, 9, 9, 16>}, {pipeline_mode = #tpu.pipeline_mode<synchronous>, transform_indices = @transform_1, window_bounds = array<i64: 4, 16, 128>}, {pipeline_mode = #tpu.pipeline_mode<synchronous>, transform_indices = @transform_2, window_bounds = array<i64: 1, 128>}, {transform_indices = @transform_3, window_bounds = array<i64: 1, 8, 8, 128>}]} {
    %c0 = arith.constant 0 : index
    %c0_0 = arith.constant 0 : index
    %0 = vector.load %arg4[%c0, %c0_0] : memref<1x128xf32, #tpu.memory_space<vmem>>, vector<1x128xf32>
    %c0_1 = arith.constant 0 : index
    %c0_2 = arith.constant 0 : index
    %c0_3 = arith.constant 0 : index
    %1 = vector.load %arg3[%c0_1, %c0_2, %c0_3] : memref<4x16x128xbf16, #tpu.memory_space<vmem>>, vector<1x16x128xbf16>
    %2 = vector.shape_cast %1 : vector<1x16x128xbf16> to vector<16x128xbf16>
    %c1 = arith.constant 1 : index
    %c0_4 = arith.constant 0 : index
    %c0_5 = arith.constant 0 : index
    %3 = vector.load %arg3[%c1, %c0_4, %c0_5] : memref<4x16x128xbf16, #tpu.memory_space<vmem>>, vector<1x16x128xbf16>
    %4 = vector.shape_cast %3 : vector<1x16x128xbf16> to vector<16x128xbf16>
    %c2 = arith.constant 2 : index
    %c0_6 = arith.constant 0 : index
    %c0_7 = arith.constant 0 : index
    %5 = vector.load %arg3[%c2, %c0_6, %c0_7] : memref<4x16x128xbf16, #tpu.memory_space<vmem>>, vector<1x16x128xbf16>
    %6 = vector.shape_cast %5 : vector<1x16x128xbf16> to vector<16x128xbf16>
    %c3 = arith.constant 3 : index
    %c0_8 = arith.constant 0 : index
    %c0_9 = arith.constant 0 : index
    %7 = vector.load %arg3[%c3, %c0_8, %c0_9] : memref<4x16x128xbf16, #tpu.memory_space<vmem>>, vector<1x16x128xbf16>
    %8 = vector.shape_cast %7 : vector<1x16x128xbf16> to vector<16x128xbf16>
    %cst = arith.constant 0.000000e+00 : f32
    %9 = vector.broadcast %cst : f32 to vector<8x128xf32>
    %c0_10 = arith.constant 0 : index
    %c0_11 = arith.constant 0 : index
    %c0_12 = arith.constant 0 : index
    %c0_13 = arith.constant 0 : index
    %10 = vector.load %arg2[%c0_10, %c0_11, %c0_12, %c0_13] : memref<1x9x9x16xbf16, #tpu.memory_space<vmem>>, vector<1x1x8x16xbf16>
    %11 = vector.shape_cast %10 : vector<1x1x8x16xbf16> to vector<8x16xbf16>
    %cst_14 = arith.constant dense<0.000000e+00> : vector<8x128xf32>
    %12 = tpu.matmul %11, %2, %cst_14 {dimension_numbers = #tpu.dot_dimension_numbers<[1], [0], [0], [1], [0, 0, 1, 1], [], []>} : vector<8x16xbf16>, vector<16x128xbf16>, vector<8x128xf32> -> vector<8x128xf32>
    %13 = arith.addf %9, %12 : vector<8x128xf32>
    %c0_15 = arith.constant 0 : index
    %c0_16 = arith.constant 0 : index
    %c1_17 = arith.constant 1 : index
    %c0_18 = arith.constant 0 : index
    %14 = vector.load %arg2[%c0_15, %c0_16, %c1_17, %c0_18] : memref<1x9x9x16xbf16, #tpu.memory_space<vmem>>, vector<1x1x8x16xbf16>
    %15 = vector.shape_cast %14 : vector<1x1x8x16xbf16> to vector<8x16xbf16>
    %cst_19 = arith.constant dense<0.000000e+00> : vector<8x128xf32>
    %16 = tpu.matmul %15, %4, %cst_19 {dimension_numbers = #tpu.dot_dimension_numbers<[1], [0], [0], [1], [0, 0, 1, 1], [], []>} : vector<8x16xbf16>, vector<16x128xbf16>, vector<8x128xf32> -> vector<8x128xf32>
    %17 = arith.addf %13, %16 : vector<8x128xf32>
    %c0_20 = arith.constant 0 : index
    %c1_21 = arith.constant 1 : index
    %c0_22 = arith.constant 0 : index
    %c0_23 = arith.constant 0 : index
    %18 = vector.load %arg2[%c0_20, %c1_21, %c0_22, %c0_23] : memref<1x9x9x16xbf16, #tpu.memory_space<vmem>>, vector<1x1x8x16xbf16>
    %19 = vector.shape_cast %18 : vector<1x1x8x16xbf16> to vector<8x16xbf16>
    %cst_24 = arith.constant dense<0.000000e+00> : vector<8x128xf32>
    %20 = tpu.matmul %19, %6, %cst_24 {dimension_numbers = #tpu.dot_dimension_numbers<[1], [0], [0], [1], [0, 0, 1, 1], [], []>} : vector<8x16xbf16>, vector<16x128xbf16>, vector<8x128xf32> -> vector<8x128xf32>
    %21 = arith.addf %17, %20 : vector<8x128xf32>
    %c0_25 = arith.constant 0 : index
    %c1_26 = arith.constant 1 : index
    %c1_27 = arith.constant 1 : index
    %c0_28 = arith.constant 0 : index
    %22 = vector.load %arg2[%c0_25, %c1_26, %c1_27, %c0_28] : memref<1x9x9x16xbf16, #tpu.memory_space<vmem>>, vector<1x1x8x16xbf16>
    %23 = vector.shape_cast %22 : vector<1x1x8x16xbf16> to vector<8x16xbf16>
    %cst_29 = arith.constant dense<0.000000e+00> : vector<8x128xf32>
    %24 = tpu.matmul %23, %8, %cst_29 {dimension_numbers = #tpu.dot_dimension_numbers<[1], [0], [0], [1], [0, 0, 1, 1], [], []>} : vector<8x16xbf16>, vector<16x128xbf16>, vector<8x128xf32> -> vector<8x128xf32>
    %25 = arith.addf %21, %24 : vector<8x128xf32>
    %26 = vector.broadcast %0 : vector<1x128xf32> to vector<8x128xf32>
    %27 = arith.addf %25, %26 : vector<8x128xf32>
    %cst_30 = arith.constant 2.000000e-01 : f32
    %28 = vector.broadcast %cst_30 : f32 to vector<8x128xf32>
    %29 = arith.mulf %28, %27 : vector<8x128xf32>
    %30 = arith.maximumf %27, %29 : vector<8x128xf32>
    %31 = arith.truncf %30 : vector<8x128xf32> to vector<8x128xbf16>
    %c0_31 = arith.constant 0 : index
    %c0_32 = arith.constant 0 : index
    %c0_33 = arith.constant 0 : index
    %c0_34 = arith.constant 0 : index
    %32 = vector.load %arg5[%c0_31, %c0_32, %c0_33, %c0_34] : memref<1x8x8x128xbf16, #tpu.memory_space<vmem>>, vector<1x1x8x128xbf16>
    %33 = vector.shape_cast %32 : vector<1x1x8x128xbf16> to vector<8x128xbf16>
    %34 = vector.shape_cast %31 : vector<8x128xbf16> to vector<1x1x8x128xbf16>
    tpu.vector_store %arg5[%c0_31, %c0_32, %c0_33, %c0_34], %34 {strides = array<i32>} : memref<1x8x8x128xbf16, #tpu.memory_space<vmem>>, vector<1x1x8x128xbf16>,
    %cst_35 = arith.constant 0.000000e+00 : f32
    %35 = vector.broadcast %cst_35 : f32 to vector<8x128xf32>
    %c0_36 = arith.constant 0 : index
    %c1_37 = arith.constant 1 : index
    %c0_38 = arith.constant 0 : index
    %c0_39 = arith.constant 0 : index
    %36 = vector.load %arg2[%c0_36, %c1_37, %c0_38, %c0_39] : memref<1x9x9x16xbf16, #tpu.memory_space<vmem>>, vector<1x1x8x16xbf16>
    %37 = vector.shape_cast %36 : vector<1x1x8x16xbf16> to vector<8x16xbf16>
    %cst_40 = arith.constant dense<0.000000e+00> : vector<8x128xf32>
    %38 = tpu.matmul %37, %2, %cst_40 {dimension_numbers = #tpu.dot_dimension_numbers<[1], [0], [0], [1], [0, 0, 1, 1], [], []>} : vector<8x16xbf16>, vector<16x128xbf16>, vector<8x128xf32> -> vector<8x128xf32>
    %39 = arith.addf %35, %38 : vector<8x128xf32>
    %c0_41 = arith.constant 0 : index
    %c1_42 = arith.constant 1 : index
    %c1_43 = arith.constant 1 : index
    %c0_44 = arith.constant 0 : index
    %40 = vector.load %arg2[%c0_41, %c1_42, %c1_43, %c0_44] : memref<1x9x9x16xbf16, #tpu.memory_space<vmem>>, vector<1x1x8x16xbf16>
    %41 = vector.shape_cast %40 : vector<1x1x8x16xbf16> to vector<8x16xbf16>
    %cst_45 = arith.constant dense<0.000000e+00> : vector<8x128xf32>
    %42 = tpu.matmul %41, %4, %cst_45 {dimension_numbers = #tpu.dot_dimension_numbers<[1], [0], [0], [1], [0, 0, 1, 1], [], []>} : vector<8x16xbf16>, vector<16x128xbf16>, vector<8x128xf32> -> vector<8x128xf32>
    %43 = arith.addf %39, %42 : vector<8x128xf32>
    %c0_46 = arith.constant 0 : index
    %c2_47 = arith.constant 2 : index
    %c0_48 = arith.constant 0 : index
    %c0_49 = arith.constant 0 : index
    %44 = vector.load %arg2[%c0_46, %c2_47, %c0_48, %c0_49] : memref<1x9x9x16xbf16, #tpu.memory_space<vmem>>, vector<1x1x8x16xbf16>
    %45 = vector.shape_cast %44 : vector<1x1x8x16xbf16> to vector<8x16xbf16>
    %cst_50 = arith.constant dense<0.000000e+00> : vector<8x128xf32>
    %46 = tpu.matmul %45, %6, %cst_50 {dimension_numbers = #tpu.dot_dimension_numbers<[1], [0], [0], [1], [0, 0, 1, 1], [], []>} : vector<8x16xbf16>, vector<16x128xbf16>, vector<8x128xf32> -> vector<8x128xf32>
    %47 = arith.addf %43, %46 : vector<8x128xf32>
    %c0_51 = arith.constant 0 : index
    %c2_52 = arith.constant 2 : index
    %c1_53 = arith.constant 1 : index
    %c0_54 = arith.constant 0 : index
    %48 = vector.load %arg2[%c0_51, %c2_52, %c1_53, %c0_54] : memref<1x9x9x16xbf16, #tpu.memory_space<vmem>>, vector<1x1x8x16xbf16>
    %49 = vector.shape_cast %48 : vector<1x1x8x16xbf16> to vector<8x16xbf16>
    %cst_55 = arith.constant dense<0.000000e+00> : vector<8x128xf32>
    %50 = tpu.matmul %49, %8, %cst_55 {dimension_numbers = #tpu.dot_dimension_numbers<[1], [0], [0], [1], [0, 0, 1, 1], [], []>} : vector<8x16xbf16>, vector<16x128xbf16>, vector<8x128xf32> -> vector<8x128xf32>
    %51 = arith.addf %47, %50 : vector<8x128xf32>
    %52 = vector.broadcast %0 : vector<1x128xf32> to vector<8x128xf32>
    %53 = arith.addf %51, %52 : vector<8x128xf32>
    %cst_56 = arith.constant 2.000000e-01 : f32
    %54 = vector.broadcast %cst_56 : f32 to vector<8x128xf32>
    %55 = arith.mulf %54, %53 : vector<8x128xf32>
    %56 = arith.maximumf %53, %55 : vector<8x128xf32>
    %57 = arith.truncf %56 : vector<8x128xf32> to vector<8x128xbf16>
    %c0_57 = arith.constant 0 : index
    %c1_58 = arith.constant 1 : index
    %c0_59 = arith.constant 0 : index
    %c0_60 = arith.constant 0 : index
    %58 = vector.load %arg5[%c0_57, %c1_58, %c0_59, %c0_60] : memref<1x8x8x128xbf16, #tpu.memory_space<vmem>>, vector<1x1x8x128xbf16>
    %59 = vector.shape_cast %58 : vector<1x1x8x128xbf16> to vector<8x128xbf16>
    %60 = vector.shape_cast %57 : vector<8x128xbf16> to vector<1x1x8x128xbf16>
    tpu.vector_store %arg5[%c0_57, %c1_58, %c0_59, %c0_60], %60 {strides = array<i32>} : memref<1x8x8x128xbf16, #tpu.memory_space<vmem>>, vector<1x1x8x128xbf16>,
    %cst_61 = arith.constant 0.000000e+00 : f32
    %61 = vector.broadcast %cst_61 : f32 to vector<8x128xf32>
    %c0_62 = arith.constant 0 : index
    %c2_63 = arith.constant 2 : index
    %c0_64 = arith.constant 0 : index
    %c0_65 = arith.constant 0 : index
    %62 = vector.load %arg2[%c0_62, %c2_63, %c0_64, %c0_65] : memref<1x9x9x16xbf16, #tpu.memory_space<vmem>>, vector<1x1x8x16xbf16>
    %63 = vector.shape_cast %62 : vector<1x1x8x16xbf16> to vector<8x16xbf16>
    %cst_66 = arith.constant dense<0.000000e+00> : vector<8x128xf32>
    %64 = tpu.matmul %63, %2, %cst_66 {dimension_numbers = #tpu.dot_dimension_numbers<[1], [0], [0], [1], [0, 0, 1, 1], [], []>} : vector<8x16xbf16>, vector<16x128xbf16>, vector<8x128xf32> -> vector<8x128xf32>
    %65 = arith.addf %61, %64 : vector<8x128xf32>
    %c0_67 = arith.constant 0 : index
    %c2_68 = arith.constant 2 : index
    %c1_69 = arith.constant 1 : index
    %c0_70 = arith.constant 0 : index
    %66 = vector.load %arg2[%c0_67, %c2_68, %c1_69, %c0_70] : memref<1x9x9x16xbf16, #tpu.memory_space<vmem>>, vector<1x1x8x16xbf16>
    %67 = vector.shape_cast %66 : vector<1x1x8x16xbf16> to vector<8x16xbf16>
    %cst_71 = arith.constant dense<0.000000e+00> : vector<8x128xf32>
    %68 = tpu.matmul %67, %4, %cst_71 {dimension_numbers = #tpu.dot_dimension_numbers<[1], [0], [0], [1], [0, 0, 1, 1], [], []>} : vector<8x16xbf16>, vector<16x128xbf16>, vector<8x128xf32> -> vector<8x128xf32>
    %69 = arith.addf %65, %68 : vector<8x128xf32>
    %c0_72 = arith.constant 0 : index
    %c3_73 = arith.constant 3 : index
    %c0_74 = arith.constant 0 : index
    %c0_75 = arith.constant 0 : index
    %70 = vector.load %arg2[%c0_72, %c3_73, %c0_74, %c0_75] : memref<1x9x9x16xbf16, #tpu.memory_space<vmem>>, vector<1x1x8x16xbf16>
    %71 = vector.shape_cast %70 : vector<1x1x8x16xbf16> to vector<8x16xbf16>
    %cst_76 = arith.constant dense<0.000000e+00> : vector<8x128xf32>
    %72 = tpu.matmul %71, %6, %cst_76 {dimension_numbers = #tpu.dot_dimension_numbers<[1], [0], [0], [1], [0, 0, 1, 1], [], []>} : vector<8x16xbf16>, vector<16x128xbf16>, vector<8x128xf32> -> vector<8x128xf32>
    %73 = arith.addf %69, %72 : vector<8x128xf32>
    %c0_77 = arith.constant 0 : index
    %c3_78 = arith.constant 3 : index
    %c1_79 = arith.constant 1 : index
    %c0_80 = arith.constant 0 : index
    %74 = vector.load %arg2[%c0_77, %c3_78, %c1_79, %c0_80] : memref<1x9x9x16xbf16, #tpu.memory_space<vmem>>, vector<1x1x8x16xbf16>
    %75 = vector.shape_cast %74 : vector<1x1x8x16xbf16> to vector<8x16xbf16>
    %cst_81 = arith.constant dense<0.000000e+00> : vector<8x128xf32>
    %76 = tpu.matmul %75, %8, %cst_81 {dimension_numbers = #tpu.dot_dimension_numbers<[1], [0], [0], [1], [0, 0, 1, 1], [], []>} : vector<8x16xbf16>, vector<16x128xbf16>, vector<8x128xf32> -> vector<8x128xf32>
    %77 = arith.addf %73, %76 : vector<8x128xf32>
    %78 = vector.broadcast %0 : vector<1x128xf32> to vector<8x128xf32>
    %79 = arith.addf %77, %78 : vector<8x128xf32>
    %cst_82 = arith.constant 2.000000e-01 : f32
    %80 = vector.broadcast %cst_82 : f32 to vector<8x128xf32>
    %81 = arith.mulf %80, %79 : vector<8x128xf32>
    %82 = arith.maximumf %79, %81 : vector<8x128xf32>
    %83 = arith.truncf %82 : vector<8x128xf32> to vector<8x128xbf16>
    %c0_83 = arith.constant 0 : index
    %c2_84 = arith.constant 2 : index
    %c0_85 = arith.constant 0 : index
    %c0_86 = arith.constant 0 : index
    %84 = vector.load %arg5[%c0_83, %c2_84, %c0_85, %c0_86] : memref<1x8x8x128xbf16, #tpu.memory_space<vmem>>, vector<1x1x8x128xbf16>
    %85 = vector.shape_cast %84 : vector<1x1x8x128xbf16> to vector<8x128xbf16>
    %86 = vector.shape_cast %83 : vector<8x128xbf16> to vector<1x1x8x128xbf16>
    tpu.vector_store %arg5[%c0_83, %c2_84, %c0_85, %c0_86], %86 {strides = array<i32>} : memref<1x8x8x128xbf16, #tpu.memory_space<vmem>>, vector<1x1x8x128xbf16>,
    %cst_87 = arith.constant 0.000000e+00 : f32
    %87 = vector.broadcast %cst_87 : f32 to vector<8x128xf32>
    %c0_88 = arith.constant 0 : index
    %c3_89 = arith.constant 3 : index
    %c0_90 = arith.constant 0 : index
    %c0_91 = arith.constant 0 : index
    %88 = vector.load %arg2[%c0_88, %c3_89, %c0_90, %c0_91] : memref<1x9x9x16xbf16, #tpu.memory_space<vmem>>, vector<1x1x8x16xbf16>
    %89 = vector.shape_cast %88 : vector<1x1x8x16xbf16> to vector<8x16xbf16>
    %cst_92 = arith.constant dense<0.000000e+00> : vector<8x128xf32>
    %90 = tpu.matmul %89, %2, %cst_92 {dimension_numbers = #tpu.dot_dimension_numbers<[1], [0], [0], [1], [0, 0, 1, 1], [], []>} : vector<8x16xbf16>, vector<16x128xbf16>, vector<8x128xf32> -> vector<8x128xf32>
    %91 = arith.addf %87, %90 : vector<8x128xf32>
    %c0_93 = arith.constant 0 : index
    %c3_94 = arith.constant 3 : index
    %c1_95 = arith.constant 1 : index
    %c0_96 = arith.constant 0 : index
    %92 = vector.load %arg2[%c0_93, %c3_94, %c1_95, %c0_96] : memref<1x9x9x16xbf16, #tpu.memory_space<vmem>>, vector<1x1x8x16xbf16>
    %93 = vector.shape_cast %92 : vector<1x1x8x16xbf16> to vector<8x16xbf16>
    %cst_97 = arith.constant dense<0.000000e+00> : vector<8x128xf32>
    %94 = tpu.matmul %93, %4, %cst_97 {dimension_numbers = #tpu.dot_dimension_numbers<[1], [0], [0], [1], [0, 0, 1, 1], [], []>} : vector<8x16xbf16>, vector<16x128xbf16>, vector<8x128xf32> -> vector<8x128xf32>
    %95 = arith.addf %91, %94 : vector<8x128xf32>
    %c0_98 = arith.constant 0 : index
    %c4 = arith.constant 4 : index
    %c0_99 = arith.constant 0 : index
    %c0_100 = arith.constant 0 : index
    %96 = vector.load %arg2[%c0_98, %c4, %c0_99, %c0_100] : memref<1x9x9x16xbf16, #tpu.memory_space<vmem>>, vector<1x1x8x16xbf16>
    %97 = vector.shape_cast %96 : vector<1x1x8x16xbf16> to vector<8x16xbf16>
    %cst_101 = arith.constant dense<0.000000e+00> : vector<8x128xf32>
    %98 = tpu.matmul %97, %6, %cst_101 {dimension_numbers = #tpu.dot_dimension_numbers<[1], [0], [0], [1], [0, 0, 1, 1], [], []>} : vector<8x16xbf16>, vector<16x128xbf16>, vector<8x128xf32> -> vector<8x128xf32>
    %99 = arith.addf %95, %98 : vector<8x128xf32>
    %c0_102 = arith.constant 0 : index
    %c4_103 = arith.constant 4 : index
    %c1_104 = arith.constant 1 : index
    %c0_105 = arith.constant 0 : index
    %100 = vector.load %arg2[%c0_102, %c4_103, %c1_104, %c0_105] : memref<1x9x9x16xbf16, #tpu.memory_space<vmem>>, vector<1x1x8x16xbf16>
    %101 = vector.shape_cast %100 : vector<1x1x8x16xbf16> to vector<8x16xbf16>
    %cst_106 = arith.constant dense<0.000000e+00> : vector<8x128xf32>
    %102 = tpu.matmul %101, %8, %cst_106 {dimension_numbers = #tpu.dot_dimension_numbers<[1], [0], [0], [1], [0, 0, 1, 1], [], []>} : vector<8x16xbf16>, vector<16x128xbf16>, vector<8x128xf32> -> vector<8x128xf32>
    %103 = arith.addf %99, %102 : vector<8x128xf32>
    %104 = vector.broadcast %0 : vector<1x128xf32> to vector<8x128xf32>
    %105 = arith.addf %103, %104 : vector<8x128xf32>
    %cst_107 = arith.constant 2.000000e-01 : f32
    %106 = vector.broadcast %cst_107 : f32 to vector<8x128xf32>
    %107 = arith.mulf %106, %105 : vector<8x128xf32>
    %108 = arith.maximumf %105, %107 : vector<8x128xf32>
    %109 = arith.truncf %108 : vector<8x128xf32> to vector<8x128xbf16>
    %c0_108 = arith.constant 0 : index
    %c3_109 = arith.constant 3 : index
    %c0_110 = arith.constant 0 : index
    %c0_111 = arith.constant 0 : index
    %110 = vector.load %arg5[%c0_108, %c3_109, %c0_110, %c0_111] : memref<1x8x8x128xbf16, #tpu.memory_space<vmem>>, vector<1x1x8x128xbf16>
    %111 = vector.shape_cast %110 : vector<1x1x8x128xbf16> to vector<8x128xbf16>
    %112 = vector.shape_cast %109 : vector<8x128xbf16> to vector<1x1x8x128xbf16>
    tpu.vector_store %arg5[%c0_108, %c3_109, %c0_110, %c0_111], %112 {strides = array<i32>} : memref<1x8x8x128xbf16, #tpu.memory_space<vmem>>, vector<1x1x8x128xbf16>,
    %cst_112 = arith.constant 0.000000e+00 : f32
    %113 = vector.broadcast %cst_112 : f32 to vector<8x128xf32>
    %c0_113 = arith.constant 0 : index
    %c4_114 = arith.constant 4 : index
    %c0_115 = arith.constant 0 : index
    %c0_116 = arith.constant 0 : index
    %114 = vector.load %arg2[%c0_113, %c4_114, %c0_115, %c0_116] : memref<1x9x9x16xbf16, #tpu.memory_space<vmem>>, vector<1x1x8x16xbf16>
    %115 = vector.shape_cast %114 : vector<1x1x8x16xbf16> to vector<8x16xbf16>
    %cst_117 = arith.constant dense<0.000000e+00> : vector<8x128xf32>
    %116 = tpu.matmul %115, %2, %cst_117 {dimension_numbers = #tpu.dot_dimension_numbers<[1], [0], [0], [1], [0, 0, 1, 1], [], []>} : vector<8x16xbf16>, vector<16x128xbf16>, vector<8x128xf32> -> vector<8x128xf32>
    %117 = arith.addf %113, %116 : vector<8x128xf32>
    %c0_118 = arith.constant 0 : index
    %c4_119 = arith.constant 4 : index
    %c1_120 = arith.constant 1 : index
    %c0_121 = arith.constant 0 : index
    %118 = vector.load %arg2[%c0_118, %c4_119, %c1_120, %c0_121] : memref<1x9x9x16xbf16, #tpu.memory_space<vmem>>, vector<1x1x8x16xbf16>
    %119 = vector.shape_cast %118 : vector<1x1x8x16xbf16> to vector<8x16xbf16>
    %cst_122 = arith.constant dense<0.000000e+00> : vector<8x128xf32>
    %120 = tpu.matmul %119, %4, %cst_122 {dimension_numbers = #tpu.dot_dimension_numbers<[1], [0], [0], [1], [0, 0, 1, 1], [], []>} : vector<8x16xbf16>, vector<16x128xbf16>, vector<8x128xf32> -> vector<8x128xf32>
    %121 = arith.addf %117, %120 : vector<8x128xf32>
    %c0_123 = arith.constant 0 : index
    %c5 = arith.constant 5 : index
    %c0_124 = arith.constant 0 : index
    %c0_125 = arith.constant 0 : index
    %122 = vector.load %arg2[%c0_123, %c5, %c0_124, %c0_125] : memref<1x9x9x16xbf16, #tpu.memory_space<vmem>>, vector<1x1x8x16xbf16>
    %123 = vector.shape_cast %122 : vector<1x1x8x16xbf16> to vector<8x16xbf16>
    %cst_126 = arith.constant dense<0.000000e+00> : vector<8x128xf32>
    %124 = tpu.matmul %123, %6, %cst_126 {dimension_numbers = #tpu.dot_dimension_numbers<[1], [0], [0], [1], [0, 0, 1, 1], [], []>} : vector<8x16xbf16>, vector<16x128xbf16>, vector<8x128xf32> -> vector<8x128xf32>
    %125 = arith.addf %121, %124 : vector<8x128xf32>
    %c0_127 = arith.constant 0 : index
    %c5_128 = arith.constant 5 : index
    %c1_129 = arith.constant 1 : index
    %c0_130 = arith.constant 0 : index
    %126 = vector.load %arg2[%c0_127, %c5_128, %c1_129, %c0_130] : memref<1x9x9x16xbf16, #tpu.memory_space<vmem>>, vector<1x1x8x16xbf16>
    %127 = vector.shape_cast %126 : vector<1x1x8x16xbf16> to vector<8x16xbf16>
    %cst_131 = arith.constant dense<0.000000e+00> : vector<8x128xf32>
    %128 = tpu.matmul %127, %8, %cst_131 {dimension_numbers = #tpu.dot_dimension_numbers<[1], [0], [0], [1], [0, 0, 1, 1], [], []>} : vector<8x16xbf16>, vector<16x128xbf16>, vector<8x128xf32> -> vector<8x128xf32>
    %129 = arith.addf %125, %128 : vector<8x128xf32>
    %130 = vector.broadcast %0 : vector<1x128xf32> to vector<8x128xf32>
    %131 = arith.addf %129, %130 : vector<8x128xf32>
    %cst_132 = arith.constant 2.000000e-01 : f32
    %132 = vector.broadcast %cst_132 : f32 to vector<8x128xf32>
    %133 = arith.mulf %132, %131 : vector<8x128xf32>
    %134 = arith.maximumf %131, %133 : vector<8x128xf32>
    %135 = arith.truncf %134 : vector<8x128xf32> to vector<8x128xbf16>
    %c0_133 = arith.constant 0 : index
    %c4_134 = arith.constant 4 : index
    %c0_135 = arith.constant 0 : index
    %c0_136 = arith.constant 0 : index
    %136 = vector.load %arg5[%c0_133, %c4_134, %c0_135, %c0_136] : memref<1x8x8x128xbf16, #tpu.memory_space<vmem>>, vector<1x1x8x128xbf16>
    %137 = vector.shape_cast %136 : vector<1x1x8x128xbf16> to vector<8x128xbf16>
    %138 = vector.shape_cast %135 : vector<8x128xbf16> to vector<1x1x8x128xbf16>
    tpu.vector_store %arg5[%c0_133, %c4_134, %c0_135, %c0_136], %138 {strides = array<i32>} : memref<1x8x8x128xbf16, #tpu.memory_space<vmem>>, vector<1x1x8x128xbf16>,
    %cst_137 = arith.constant 0.000000e+00 : f32
    %139 = vector.broadcast %cst_137 : f32 to vector<8x128xf32>
    %c0_138 = arith.constant 0 : index
    %c5_139 = arith.constant 5 : index
    %c0_140 = arith.constant 0 : index
    %c0_141 = arith.constant 0 : index
    %140 = vector.load %arg2[%c0_138, %c5_139, %c0_140, %c0_141] : memref<1x9x9x16xbf16, #tpu.memory_space<vmem>>, vector<1x1x8x16xbf16>
    %141 = vector.shape_cast %140 : vector<1x1x8x16xbf16> to vector<8x16xbf16>
    %cst_142 = arith.constant dense<0.000000e+00> : vector<8x128xf32>
    %142 = tpu.matmul %141, %2, %cst_142 {dimension_numbers = #tpu.dot_dimension_numbers<[1], [0], [0], [1], [0, 0, 1, 1], [], []>} : vector<8x16xbf16>, vector<16x128xbf16>, vector<8x128xf32> -> vector<8x128xf32>
    %143 = arith.addf %139, %142 : vector<8x128xf32>
    %c0_143 = arith.constant 0 : index
    %c5_144 = arith.constant 5 : index
    %c1_145 = arith.constant 1 : index
    %c0_146 = arith.constant 0 : index
    %144 = vector.load %arg2[%c0_143, %c5_144, %c1_145, %c0_146] : memref<1x9x9x16xbf16, #tpu.memory_space<vmem>>, vector<1x1x8x16xbf16>
    %145 = vector.shape_cast %144 : vector<1x1x8x16xbf16> to vector<8x16xbf16>
    %cst_147 = arith.constant dense<0.000000e+00> : vector<8x128xf32>
    %146 = tpu.matmul %145, %4, %cst_147 {dimension_numbers = #tpu.dot_dimension_numbers<[1], [0], [0], [1], [0, 0, 1, 1], [], []>} : vector<8x16xbf16>, vector<16x128xbf16>, vector<8x128xf32> -> vector<8x128xf32>
    %147 = arith.addf %143, %146 : vector<8x128xf32>
    %c0_148 = arith.constant 0 : index
    %c6 = arith.constant 6 : index
    %c0_149 = arith.constant 0 : index
    %c0_150 = arith.constant 0 : index
    %148 = vector.load %arg2[%c0_148, %c6, %c0_149, %c0_150] : memref<1x9x9x16xbf16, #tpu.memory_space<vmem>>, vector<1x1x8x16xbf16>
    %149 = vector.shape_cast %148 : vector<1x1x8x16xbf16> to vector<8x16xbf16>
    %cst_151 = arith.constant dense<0.000000e+00> : vector<8x128xf32>
    %150 = tpu.matmul %149, %6, %cst_151 {dimension_numbers = #tpu.dot_dimension_numbers<[1], [0], [0], [1], [0, 0, 1, 1], [], []>} : vector<8x16xbf16>, vector<16x128xbf16>, vector<8x128xf32> -> vector<8x128xf32>
    %151 = arith.addf %147, %150 : vector<8x128xf32>
    %c0_152 = arith.constant 0 : index
    %c6_153 = arith.constant 6 : index
    %c1_154 = arith.constant 1 : index
    %c0_155 = arith.constant 0 : index
    %152 = vector.load %arg2[%c0_152, %c6_153, %c1_154, %c0_155] : memref<1x9x9x16xbf16, #tpu.memory_space<vmem>>, vector<1x1x8x16xbf16>
    %153 = vector.shape_cast %152 : vector<1x1x8x16xbf16> to vector<8x16xbf16>
    %cst_156 = arith.constant dense<0.000000e+00> : vector<8x128xf32>
    %154 = tpu.matmul %153, %8, %cst_156 {dimension_numbers = #tpu.dot_dimension_numbers<[1], [0], [0], [1], [0, 0, 1, 1], [], []>} : vector<8x16xbf16>, vector<16x128xbf16>, vector<8x128xf32> -> vector<8x128xf32>
    %155 = arith.addf %151, %154 : vector<8x128xf32>
    %156 = vector.broadcast %0 : vector<1x128xf32> to vector<8x128xf32>
    %157 = arith.addf %155, %156 : vector<8x128xf32>
    %cst_157 = arith.constant 2.000000e-01 : f32
    %158 = vector.broadcast %cst_157 : f32 to vector<8x128xf32>
    %159 = arith.mulf %158, %157 : vector<8x128xf32>
    %160 = arith.maximumf %157, %159 : vector<8x128xf32>
    %161 = arith.truncf %160 : vector<8x128xf32> to vector<8x128xbf16>
    %c0_158 = arith.constant 0 : index
    %c5_159 = arith.constant 5 : index
    %c0_160 = arith.constant 0 : index
    %c0_161 = arith.constant 0 : index
    %162 = vector.load %arg5[%c0_158, %c5_159, %c0_160, %c0_161] : memref<1x8x8x128xbf16, #tpu.memory_space<vmem>>, vector<1x1x8x128xbf16>
    %163 = vector.shape_cast %162 : vector<1x1x8x128xbf16> to vector<8x128xbf16>
    %164 = vector.shape_cast %161 : vector<8x128xbf16> to vector<1x1x8x128xbf16>
    tpu.vector_store %arg5[%c0_158, %c5_159, %c0_160, %c0_161], %164 {strides = array<i32>} : memref<1x8x8x128xbf16, #tpu.memory_space<vmem>>, vector<1x1x8x128xbf16>,
    %cst_162 = arith.constant 0.000000e+00 : f32
    %165 = vector.broadcast %cst_162 : f32 to vector<8x128xf32>
    %c0_163 = arith.constant 0 : index
    %c6_164 = arith.constant 6 : index
    %c0_165 = arith.constant 0 : index
    %c0_166 = arith.constant 0 : index
    %166 = vector.load %arg2[%c0_163, %c6_164, %c0_165, %c0_166] : memref<1x9x9x16xbf16, #tpu.memory_space<vmem>>, vector<1x1x8x16xbf16>
    %167 = vector.shape_cast %166 : vector<1x1x8x16xbf16> to vector<8x16xbf16>
    %cst_167 = arith.constant dense<0.000000e+00> : vector<8x128xf32>
    %168 = tpu.matmul %167, %2, %cst_167 {dimension_numbers = #tpu.dot_dimension_numbers<[1], [0], [0], [1], [0, 0, 1, 1], [], []>} : vector<8x16xbf16>, vector<16x128xbf16>, vector<8x128xf32> -> vector<8x128xf32>
    %169 = arith.addf %165, %168 : vector<8x128xf32>
    %c0_168 = arith.constant 0 : index
    %c6_169 = arith.constant 6 : index
    %c1_170 = arith.constant 1 : index
    %c0_171 = arith.constant 0 : index
    %170 = vector.load %arg2[%c0_168, %c6_169, %c1_170, %c0_171] : memref<1x9x9x16xbf16, #tpu.memory_space<vmem>>, vector<1x1x8x16xbf16>
    %171 = vector.shape_cast %170 : vector<1x1x8x16xbf16> to vector<8x16xbf16>
    %cst_172 = arith.constant dense<0.000000e+00> : vector<8x128xf32>
    %172 = tpu.matmul %171, %4, %cst_172 {dimension_numbers = #tpu.dot_dimension_numbers<[1], [0], [0], [1], [0, 0, 1, 1], [], []>} : vector<8x16xbf16>, vector<16x128xbf16>, vector<8x128xf32> -> vector<8x128xf32>
    %173 = arith.addf %169, %172 : vector<8x128xf32>
    %c0_173 = arith.constant 0 : index
    %c7 = arith.constant 7 : index
    %c0_174 = arith.constant 0 : index
    %c0_175 = arith.constant 0 : index
    %174 = vector.load %arg2[%c0_173, %c7, %c0_174, %c0_175] : memref<1x9x9x16xbf16, #tpu.memory_space<vmem>>, vector<1x1x8x16xbf16>
    %175 = vector.shape_cast %174 : vector<1x1x8x16xbf16> to vector<8x16xbf16>
    %cst_176 = arith.constant dense<0.000000e+00> : vector<8x128xf32>
    %176 = tpu.matmul %175, %6, %cst_176 {dimension_numbers = #tpu.dot_dimension_numbers<[1], [0], [0], [1], [0, 0, 1, 1], [], []>} : vector<8x16xbf16>, vector<16x128xbf16>, vector<8x128xf32> -> vector<8x128xf32>
    %177 = arith.addf %173, %176 : vector<8x128xf32>
    %c0_177 = arith.constant 0 : index
    %c7_178 = arith.constant 7 : index
    %c1_179 = arith.constant 1 : index
    %c0_180 = arith.constant 0 : index
    %178 = vector.load %arg2[%c0_177, %c7_178, %c1_179, %c0_180] : memref<1x9x9x16xbf16, #tpu.memory_space<vmem>>, vector<1x1x8x16xbf16>
    %179 = vector.shape_cast %178 : vector<1x1x8x16xbf16> to vector<8x16xbf16>
    %cst_181 = arith.constant dense<0.000000e+00> : vector<8x128xf32>
    %180 = tpu.matmul %179, %8, %cst_181 {dimension_numbers = #tpu.dot_dimension_numbers<[1], [0], [0], [1], [0, 0, 1, 1], [], []>} : vector<8x16xbf16>, vector<16x128xbf16>, vector<8x128xf32> -> vector<8x128xf32>
    %181 = arith.addf %177, %180 : vector<8x128xf32>
    %182 = vector.broadcast %0 : vector<1x128xf32> to vector<8x128xf32>
    %183 = arith.addf %181, %182 : vector<8x128xf32>
    %cst_182 = arith.constant 2.000000e-01 : f32
    %184 = vector.broadcast %cst_182 : f32 to vector<8x128xf32>
    %185 = arith.mulf %184, %183 : vector<8x128xf32>
    %186 = arith.maximumf %183, %185 : vector<8x128xf32>
    %187 = arith.truncf %186 : vector<8x128xf32> to vector<8x128xbf16>
    %c0_183 = arith.constant 0 : index
    %c6_184 = arith.constant 6 : index
    %c0_185 = arith.constant 0 : index
    %c0_186 = arith.constant 0 : index
    %188 = vector.load %arg5[%c0_183, %c6_184, %c0_185, %c0_186] : memref<1x8x8x128xbf16, #tpu.memory_space<vmem>>, vector<1x1x8x128xbf16>
    %189 = vector.shape_cast %188 : vector<1x1x8x128xbf16> to vector<8x128xbf16>
    %190 = vector.shape_cast %187 : vector<8x128xbf16> to vector<1x1x8x128xbf16>
    tpu.vector_store %arg5[%c0_183, %c6_184, %c0_185, %c0_186], %190 {strides = array<i32>} : memref<1x8x8x128xbf16, #tpu.memory_space<vmem>>, vector<1x1x8x128xbf16>,
    %cst_187 = arith.constant 0.000000e+00 : f32
    %191 = vector.broadcast %cst_187 : f32 to vector<8x128xf32>
    %c0_188 = arith.constant 0 : index
    %c7_189 = arith.constant 7 : index
    %c0_190 = arith.constant 0 : index
    %c0_191 = arith.constant 0 : index
    %192 = vector.load %arg2[%c0_188, %c7_189, %c0_190, %c0_191] : memref<1x9x9x16xbf16, #tpu.memory_space<vmem>>, vector<1x1x8x16xbf16>
    %193 = vector.shape_cast %192 : vector<1x1x8x16xbf16> to vector<8x16xbf16>
    %cst_192 = arith.constant dense<0.000000e+00> : vector<8x128xf32>
    %194 = tpu.matmul %193, %2, %cst_192 {dimension_numbers = #tpu.dot_dimension_numbers<[1], [0], [0], [1], [0, 0, 1, 1], [], []>} : vector<8x16xbf16>, vector<16x128xbf16>, vector<8x128xf32> -> vector<8x128xf32>
    %195 = arith.addf %191, %194 : vector<8x128xf32>
    %c0_193 = arith.constant 0 : index
    %c7_194 = arith.constant 7 : index
    %c1_195 = arith.constant 1 : index
    %c0_196 = arith.constant 0 : index
    %196 = vector.load %arg2[%c0_193, %c7_194, %c1_195, %c0_196] : memref<1x9x9x16xbf16, #tpu.memory_space<vmem>>, vector<1x1x8x16xbf16>
    %197 = vector.shape_cast %196 : vector<1x1x8x16xbf16> to vector<8x16xbf16>
    %cst_197 = arith.constant dense<0.000000e+00> : vector<8x128xf32>
    %198 = tpu.matmul %197, %4, %cst_197 {dimension_numbers = #tpu.dot_dimension_numbers<[1], [0], [0], [1], [0, 0, 1, 1], [], []>} : vector<8x16xbf16>, vector<16x128xbf16>, vector<8x128xf32> -> vector<8x128xf32>
    %199 = arith.addf %195, %198 : vector<8x128xf32>
    %c0_198 = arith.constant 0 : index
    %c8 = arith.constant 8 : index
    %c0_199 = arith.constant 0 : index
    %c0_200 = arith.constant 0 : index
    %200 = vector.load %arg2[%c0_198, %c8, %c0_199, %c0_200] : memref<1x9x9x16xbf16, #tpu.memory_space<vmem>>, vector<1x1x8x16xbf16>
    %201 = vector.shape_cast %200 : vector<1x1x8x16xbf16> to vector<8x16xbf16>
    %cst_201 = arith.constant dense<0.000000e+00> : vector<8x128xf32>
    %202 = tpu.matmul %201, %6, %cst_201 {dimension_numbers = #tpu.dot_dimension_numbers<[1], [0], [0], [1], [0, 0, 1, 1], [], []>} : vector<8x16xbf16>, vector<16x128xbf16>, vector<8x128xf32> -> vector<8x128xf32>
    %203 = arith.addf %199, %202 : vector<8x128xf32>
    %c0_202 = arith.constant 0 : index
    %c8_203 = arith.constant 8 : index
    %c1_204 = arith.constant 1 : index
    %c0_205 = arith.constant 0 : index
    %204 = vector.load %arg2[%c0_202, %c8_203, %c1_204, %c0_205] : memref<1x9x9x16xbf16, #tpu.memory_space<vmem>>, vector<1x1x8x16xbf16>
    %205 = vector.shape_cast %204 : vector<1x1x8x16xbf16> to vector<8x16xbf16>
    %cst_206 = arith.constant dense<0.000000e+00> : vector<8x128xf32>
    %206 = tpu.matmul %205, %8, %cst_206 {dimension_numbers = #tpu.dot_dimension_numbers<[1], [0], [0], [1], [0, 0, 1, 1], [], []>} : vector<8x16xbf16>, vector<16x128xbf16>, vector<8x128xf32> -> vector<8x128xf32>
    %207 = arith.addf %203, %206 : vector<8x128xf32>
    %208 = vector.broadcast %0 : vector<1x128xf32> to vector<8x128xf32>
    %209 = arith.addf %207, %208 : vector<8x128xf32>
    %cst_207 = arith.constant 2.000000e-01 : f32
    %210 = vector.broadcast %cst_207 : f32 to vector<8x128xf32>
    %211 = arith.mulf %210, %209 : vector<8x128xf32>
    %212 = arith.maximumf %209, %211 : vector<8x128xf32>
    %213 = arith.truncf %212 : vector<8x128xf32> to vector<8x128xbf16>
    %c0_208 = arith.constant 0 : index
    %c7_209 = arith.constant 7 : index
    %c0_210 = arith.constant 0 : index
    %c0_211 = arith.constant 0 : index
    %214 = vector.load %arg5[%c0_208, %c7_209, %c0_210, %c0_211] : memref<1x8x8x128xbf16, #tpu.memory_space<vmem>>, vector<1x1x8x128xbf16>
    %215 = vector.shape_cast %214 : vector<1x1x8x128xbf16> to vector<8x128xbf16>
    %216 = vector.shape_cast %213 : vector<8x128xbf16> to vector<1x1x8x128xbf16>
    tpu.vector_store %arg5[%c0_208, %c7_209, %c0_210, %c0_211], %216 {strides = array<i32>} : memref<1x8x8x128xbf16, #tpu.memory_space<vmem>>, vector<1x1x8x128xbf16>,
    return
  }
  func.func @transform_0(%arg0: i32, %arg1: i32) -> (i32, i32, i32, i32) {
    %c0_i32 = arith.constant 0 : i32
    %c0_i32_0 = arith.constant 0 : i32
    %c0_i32_1 = arith.constant 0 : i32
    %c0_i32_2 = arith.constant 0 : i32
    return %arg0, %c0_i32, %c0_i32_0, %c0_i32_1 : i32, i32, i32, i32
  }
  func.func @transform_1(%arg0: i32, %arg1: i32) -> (i32, i32, i32) {
    %c0_i32 = arith.constant 0 : i32
    %c0_i32_0 = arith.constant 0 : i32
    %c0_i32_1 = arith.constant 0 : i32
    return %c0_i32, %c0_i32_0, %arg1 : i32, i32, i32
  }
  func.func @transform_2(%arg0: i32, %arg1: i32) -> (i32, i32) {
    %c0_i32 = arith.constant 0 : i32
    %c0_i32_0 = arith.constant 0 : i32
    return %c0_i32, %arg1 : i32, i32
  }
  func.func @transform_3(%arg0: i32, %arg1: i32) -> (i32, i32, i32, i32) {
    %c0_i32 = arith.constant 0 : i32
    %c0_i32_0 = arith.constant 0 : i32
    %c0_i32_1 = arith.constant 0 : i32
    return %arg0, %c0_i32, %c0_i32_0, %arg1 : i32, i32, i32, i32
  }
}

module attributes {stable_mosaic.version = 11 : i64} {
  func.func @_conv_s2d_lrelu_kernel(%arg0: i32, %arg1: i32, %arg2: memref<1x9x9x16xbf16, #tpu.memory_space<vmem>>, %arg3: memref<4x16x128xbf16, #tpu.memory_space<vmem>>, %arg4: memref<1x128xf32, #tpu.memory_space<vmem>>, %arg5: memref<1x8x8x128xbf16, #tpu.memory_space<vmem>>) attributes {dimension_semantics = [#tpu.dimension_semantics<parallel>, #tpu.dimension_semantics<parallel>], iteration_bounds = array<i64: 2, 1>, scalar_prefetch = 0 : i64, scratch_operands = 0 : i64, tpu.core_type = #tpu.core_type<tc>, window_params = [{transform_indices = @transform_0, window_bounds = array<i64: 1, 9, 9, 16>}, {transform_indices = @transform_1, window_bounds = array<i64: 4, 16, 128>}, {transform_indices = @transform_2, window_bounds = array<i64: 1, 128>}, {transform_indices = @transform_3, window_bounds = array<i64: 1, 8, 8, 128>}]} {
    %c0 = arith.constant 0 : index
    %c0_0 = arith.constant 0 : index
    %0 = vector.load %arg4[%c0, %c0_0] : memref<1x128xf32, #tpu.memory_space<vmem>>, vector<1x128xf32>
    %c0_1 = arith.constant 0 : index
    %c0_2 = arith.constant 0 : index
    %c0_3 = arith.constant 0 : index
    %1 = vector.load %arg3[%c0_1, %c0_2, %c0_3] : memref<4x16x128xbf16, #tpu.memory_space<vmem>>, vector<1x16x128xbf16>
    %2 = vector.shape_cast %1 : vector<1x16x128xbf16> to vector<16x128xbf16>
    %c1 = arith.constant 1 : index
    %c0_4 = arith.constant 0 : index
    %c0_5 = arith.constant 0 : index
    %3 = vector.load %arg3[%c1, %c0_4, %c0_5] : memref<4x16x128xbf16, #tpu.memory_space<vmem>>, vector<1x16x128xbf16>
    %4 = vector.shape_cast %3 : vector<1x16x128xbf16> to vector<16x128xbf16>
    %c2 = arith.constant 2 : index
    %c0_6 = arith.constant 0 : index
    %c0_7 = arith.constant 0 : index
    %5 = vector.load %arg3[%c2, %c0_6, %c0_7] : memref<4x16x128xbf16, #tpu.memory_space<vmem>>, vector<1x16x128xbf16>
    %6 = vector.shape_cast %5 : vector<1x16x128xbf16> to vector<16x128xbf16>
    %c3 = arith.constant 3 : index
    %c0_8 = arith.constant 0 : index
    %c0_9 = arith.constant 0 : index
    %7 = vector.load %arg3[%c3, %c0_8, %c0_9] : memref<4x16x128xbf16, #tpu.memory_space<vmem>>, vector<1x16x128xbf16>
    %8 = vector.shape_cast %7 : vector<1x16x128xbf16> to vector<16x128xbf16>
    %cst = arith.constant 0.000000e+00 : f32
    %9 = vector.broadcast %cst : f32 to vector<8x128xf32>
    %c0_10 = arith.constant 0 : index
    %c0_11 = arith.constant 0 : index
    %c0_12 = arith.constant 0 : index
    %c0_13 = arith.constant 0 : index
    %10 = vector.load %arg2[%c0_10, %c0_11, %c0_12, %c0_13] : memref<1x9x9x16xbf16, #tpu.memory_space<vmem>>, vector<1x1x8x16xbf16>
    %11 = vector.shape_cast %10 : vector<1x1x8x16xbf16> to vector<8x16xbf16>
    %cst_14 = arith.constant dense<0.000000e+00> : vector<8x128xf32>
    %12 = tpu.matmul %11, %2, %cst_14 {dimension_numbers = #tpu.dot_dimension_numbers<[1], [0], [0], [1], [0, 0, 1, 1], [], []>} : vector<8x16xbf16>, vector<16x128xbf16>, vector<8x128xf32> -> vector<8x128xf32>
    %13 = arith.addf %9, %12 : vector<8x128xf32>
    %c0_15 = arith.constant 0 : index
    %c0_16 = arith.constant 0 : index
    %c1_17 = arith.constant 1 : index
    %c0_18 = arith.constant 0 : index
    %14 = vector.load %arg2[%c0_15, %c0_16, %c1_17, %c0_18] : memref<1x9x9x16xbf16, #tpu.memory_space<vmem>>, vector<1x1x8x16xbf16>
    %15 = vector.shape_cast %14 : vector<1x1x8x16xbf16> to vector<8x16xbf16>
    %cst_19 = arith.constant dense<0.000000e+00> : vector<8x128xf32>
    %16 = tpu.matmul %15, %4, %cst_19 {dimension_numbers = #tpu.dot_dimension_numbers<[1], [0], [0], [1], [0, 0, 1, 1], [], []>} : vector<8x16xbf16>, vector<16x128xbf16>, vector<8x128xf32> -> vector<8x128xf32>
    %17 = arith.addf %13, %16 : vector<8x128xf32>
    %c0_20 = arith.constant 0 : index
    %c1_21 = arith.constant 1 : index
    %c0_22 = arith.constant 0 : index
    %c0_23 = arith.constant 0 : index
    %18 = vector.load %arg2[%c0_20, %c1_21, %c0_22, %c0_23] : memref<1x9x9x16xbf16, #tpu.memory_space<vmem>>, vector<1x1x8x16xbf16>
    %19 = vector.shape_cast %18 : vector<1x1x8x16xbf16> to vector<8x16xbf16>
    %cst_24 = arith.constant dense<0.000000e+00> : vector<8x128xf32>
    %20 = tpu.matmul %19, %6, %cst_24 {dimension_numbers = #tpu.dot_dimension_numbers<[1], [0], [0], [1], [0, 0, 1, 1], [], []>} : vector<8x16xbf16>, vector<16x128xbf16>, vector<8x128xf32> -> vector<8x128xf32>
    %21 = arith.addf %17, %20 : vector<8x128xf32>
    %c0_25 = arith.constant 0 : index
    %c1_26 = arith.constant 1 : index
    %c1_27 = arith.constant 1 : index
    %c0_28 = arith.constant 0 : index
    %22 = vector.load %arg2[%c0_25, %c1_26, %c1_27, %c0_28] : memref<1x9x9x16xbf16, #tpu.memory_space<vmem>>, vector<1x1x8x16xbf16>
    %23 = vector.shape_cast %22 : vector<1x1x8x16xbf16> to vector<8x16xbf16>
    %cst_29 = arith.constant dense<0.000000e+00> : vector<8x128xf32>
    %24 = tpu.matmul %23, %8, %cst_29 {dimension_numbers = #tpu.dot_dimension_numbers<[1], [0], [0], [1], [0, 0, 1, 1], [], []>} : vector<8x16xbf16>, vector<16x128xbf16>, vector<8x128xf32> -> vector<8x128xf32>
    %25 = arith.addf %21, %24 : vector<8x128xf32>
    %26 = vector.broadcast %0 : vector<1x128xf32> to vector<8x128xf32>
    %27 = arith.addf %25, %26 : vector<8x128xf32>
    %cst_30 = arith.constant 2.000000e-01 : f32
    %28 = vector.broadcast %cst_30 : f32 to vector<8x128xf32>
    %29 = arith.mulf %28, %27 : vector<8x128xf32>
    %30 = arith.maximumf %27, %29 : vector<8x128xf32>
    %31 = arith.truncf %30 : vector<8x128xf32> to vector<8x128xbf16>
    %c0_31 = arith.constant 0 : index
    %c0_32 = arith.constant 0 : index
    %c0_33 = arith.constant 0 : index
    %c0_34 = arith.constant 0 : index
    %32 = vector.load %arg5[%c0_31, %c0_32, %c0_33, %c0_34] : memref<1x8x8x128xbf16, #tpu.memory_space<vmem>>, vector<1x1x8x128xbf16>
    %33 = vector.shape_cast %32 : vector<1x1x8x128xbf16> to vector<8x128xbf16>
    %34 = vector.shape_cast %31 : vector<8x128xbf16> to vector<1x1x8x128xbf16>
    tpu.vector_store %arg5[%c0_31, %c0_32, %c0_33, %c0_34], %34 {strides = array<i32>} : memref<1x8x8x128xbf16, #tpu.memory_space<vmem>>, vector<1x1x8x128xbf16>,
    %cst_35 = arith.constant 0.000000e+00 : f32
    %35 = vector.broadcast %cst_35 : f32 to vector<8x128xf32>
    %c0_36 = arith.constant 0 : index
    %c1_37 = arith.constant 1 : index
    %c0_38 = arith.constant 0 : index
    %c0_39 = arith.constant 0 : index
    %36 = vector.load %arg2[%c0_36, %c1_37, %c0_38, %c0_39] : memref<1x9x9x16xbf16, #tpu.memory_space<vmem>>, vector<1x1x8x16xbf16>
    %37 = vector.shape_cast %36 : vector<1x1x8x16xbf16> to vector<8x16xbf16>
    %cst_40 = arith.constant dense<0.000000e+00> : vector<8x128xf32>
    %38 = tpu.matmul %37, %2, %cst_40 {dimension_numbers = #tpu.dot_dimension_numbers<[1], [0], [0], [1], [0, 0, 1, 1], [], []>} : vector<8x16xbf16>, vector<16x128xbf16>, vector<8x128xf32> -> vector<8x128xf32>
    %39 = arith.addf %35, %38 : vector<8x128xf32>
    %c0_41 = arith.constant 0 : index
    %c1_42 = arith.constant 1 : index
    %c1_43 = arith.constant 1 : index
    %c0_44 = arith.constant 0 : index
    %40 = vector.load %arg2[%c0_41, %c1_42, %c1_43, %c0_44] : memref<1x9x9x16xbf16, #tpu.memory_space<vmem>>, vector<1x1x8x16xbf16>
    %41 = vector.shape_cast %40 : vector<1x1x8x16xbf16> to vector<8x16xbf16>
    %cst_45 = arith.constant dense<0.000000e+00> : vector<8x128xf32>
    %42 = tpu.matmul %41, %4, %cst_45 {dimension_numbers = #tpu.dot_dimension_numbers<[1], [0], [0], [1], [0, 0, 1, 1], [], []>} : vector<8x16xbf16>, vector<16x128xbf16>, vector<8x128xf32> -> vector<8x128xf32>
    %43 = arith.addf %39, %42 : vector<8x128xf32>
    %c0_46 = arith.constant 0 : index
    %c2_47 = arith.constant 2 : index
    %c0_48 = arith.constant 0 : index
    %c0_49 = arith.constant 0 : index
    %44 = vector.load %arg2[%c0_46, %c2_47, %c0_48, %c0_49] : memref<1x9x9x16xbf16, #tpu.memory_space<vmem>>, vector<1x1x8x16xbf16>
    %45 = vector.shape_cast %44 : vector<1x1x8x16xbf16> to vector<8x16xbf16>
    %cst_50 = arith.constant dense<0.000000e+00> : vector<8x128xf32>
    %46 = tpu.matmul %45, %6, %cst_50 {dimension_numbers = #tpu.dot_dimension_numbers<[1], [0], [0], [1], [0, 0, 1, 1], [], []>} : vector<8x16xbf16>, vector<16x128xbf16>, vector<8x128xf32> -> vector<8x128xf32>
    %47 = arith.addf %43, %46 : vector<8x128xf32>
    %c0_51 = arith.constant 0 : index
    %c2_52 = arith.constant 2 : index
    %c1_53 = arith.constant 1 : index
    %c0_54 = arith.constant 0 : index
    %48 = vector.load %arg2[%c0_51, %c2_52, %c1_53, %c0_54] : memref<1x9x9x16xbf16, #tpu.memory_space<vmem>>, vector<1x1x8x16xbf16>
    %49 = vector.shape_cast %48 : vector<1x1x8x16xbf16> to vector<8x16xbf16>
    %cst_55 = arith.constant dense<0.000000e+00> : vector<8x128xf32>
    %50 = tpu.matmul %49, %8, %cst_55 {dimension_numbers = #tpu.dot_dimension_numbers<[1], [0], [0], [1], [0, 0, 1, 1], [], []>} : vector<8x16xbf16>, vector<16x128xbf16>, vector<8x128xf32> -> vector<8x128xf32>
    %51 = arith.addf %47, %50 : vector<8x128xf32>
    %52 = vector.broadcast %0 : vector<1x128xf32> to vector<8x128xf32>
    %53 = arith.addf %51, %52 : vector<8x128xf32>
    %cst_56 = arith.constant 2.000000e-01 : f32
    %54 = vector.broadcast %cst_56 : f32 to vector<8x128xf32>
    %55 = arith.mulf %54, %53 : vector<8x128xf32>
    %56 = arith.maximumf %53, %55 : vector<8x128xf32>
    %57 = arith.truncf %56 : vector<8x128xf32> to vector<8x128xbf16>
    %c0_57 = arith.constant 0 : index
    %c1_58 = arith.constant 1 : index
    %c0_59 = arith.constant 0 : index
    %c0_60 = arith.constant 0 : index
    %58 = vector.load %arg5[%c0_57, %c1_58, %c0_59, %c0_60] : memref<1x8x8x128xbf16, #tpu.memory_space<vmem>>, vector<1x1x8x128xbf16>
    %59 = vector.shape_cast %58 : vector<1x1x8x128xbf16> to vector<8x128xbf16>
    %60 = vector.shape_cast %57 : vector<8x128xbf16> to vector<1x1x8x128xbf16>
    tpu.vector_store %arg5[%c0_57, %c1_58, %c0_59, %c0_60], %60 {strides = array<i32>} : memref<1x8x8x128xbf16, #tpu.memory_space<vmem>>, vector<1x1x8x128xbf16>,
    %cst_61 = arith.constant 0.000000e+00 : f32
    %61 = vector.broadcast %cst_61 : f32 to vector<8x128xf32>
    %c0_62 = arith.constant 0 : index
    %c2_63 = arith.constant 2 : index
    %c0_64 = arith.constant 0 : index
    %c0_65 = arith.constant 0 : index
    %62 = vector.load %arg2[%c0_62, %c2_63, %c0_64, %c0_65] : memref<1x9x9x16xbf16, #tpu.memory_space<vmem>>, vector<1x1x8x16xbf16>
    %63 = vector.shape_cast %62 : vector<1x1x8x16xbf16> to vector<8x16xbf16>
    %cst_66 = arith.constant dense<0.000000e+00> : vector<8x128xf32>
    %64 = tpu.matmul %63, %2, %cst_66 {dimension_numbers = #tpu.dot_dimension_numbers<[1], [0], [0], [1], [0, 0, 1, 1], [], []>} : vector<8x16xbf16>, vector<16x128xbf16>, vector<8x128xf32> -> vector<8x128xf32>
    %65 = arith.addf %61, %64 : vector<8x128xf32>
    %c0_67 = arith.constant 0 : index
    %c2_68 = arith.constant 2 : index
    %c1_69 = arith.constant 1 : index
    %c0_70 = arith.constant 0 : index
    %66 = vector.load %arg2[%c0_67, %c2_68, %c1_69, %c0_70] : memref<1x9x9x16xbf16, #tpu.memory_space<vmem>>, vector<1x1x8x16xbf16>
    %67 = vector.shape_cast %66 : vector<1x1x8x16xbf16> to vector<8x16xbf16>
    %cst_71 = arith.constant dense<0.000000e+00> : vector<8x128xf32>
    %68 = tpu.matmul %67, %4, %cst_71 {dimension_numbers = #tpu.dot_dimension_numbers<[1], [0], [0], [1], [0, 0, 1, 1], [], []>} : vector<8x16xbf16>, vector<16x128xbf16>, vector<8x128xf32> -> vector<8x128xf32>
    %69 = arith.addf %65, %68 : vector<8x128xf32>
    %c0_72 = arith.constant 0 : index
    %c3_73 = arith.constant 3 : index
    %c0_74 = arith.constant 0 : index
    %c0_75 = arith.constant 0 : index
    %70 = vector.load %arg2[%c0_72, %c3_73, %c0_74, %c0_75] : memref<1x9x9x16xbf16, #tpu.memory_space<vmem>>, vector<1x1x8x16xbf16>
    %71 = vector.shape_cast %70 : vector<1x1x8x16xbf16> to vector<8x16xbf16>
    %cst_76 = arith.constant dense<0.000000e+00> : vector<8x128xf32>
    %72 = tpu.matmul %71, %6, %cst_76 {dimension_numbers = #tpu.dot_dimension_numbers<[1], [0], [0], [1], [0, 0, 1, 1], [], []>} : vector<8x16xbf16>, vector<16x128xbf16>, vector<8x128xf32> -> vector<8x128xf32>
    %73 = arith.addf %69, %72 : vector<8x128xf32>
    %c0_77 = arith.constant 0 : index
    %c3_78 = arith.constant 3 : index
    %c1_79 = arith.constant 1 : index
    %c0_80 = arith.constant 0 : index
    %74 = vector.load %arg2[%c0_77, %c3_78, %c1_79, %c0_80] : memref<1x9x9x16xbf16, #tpu.memory_space<vmem>>, vector<1x1x8x16xbf16>
    %75 = vector.shape_cast %74 : vector<1x1x8x16xbf16> to vector<8x16xbf16>
    %cst_81 = arith.constant dense<0.000000e+00> : vector<8x128xf32>
    %76 = tpu.matmul %75, %8, %cst_81 {dimension_numbers = #tpu.dot_dimension_numbers<[1], [0], [0], [1], [0, 0, 1, 1], [], []>} : vector<8x16xbf16>, vector<16x128xbf16>, vector<8x128xf32> -> vector<8x128xf32>
    %77 = arith.addf %73, %76 : vector<8x128xf32>
    %78 = vector.broadcast %0 : vector<1x128xf32> to vector<8x128xf32>
    %79 = arith.addf %77, %78 : vector<8x128xf32>
    %cst_82 = arith.constant 2.000000e-01 : f32
    %80 = vector.broadcast %cst_82 : f32 to vector<8x128xf32>
    %81 = arith.mulf %80, %79 : vector<8x128xf32>
    %82 = arith.maximumf %79, %81 : vector<8x128xf32>
    %83 = arith.truncf %82 : vector<8x128xf32> to vector<8x128xbf16>
    %c0_83 = arith.constant 0 : index
    %c2_84 = arith.constant 2 : index
    %c0_85 = arith.constant 0 : index
    %c0_86 = arith.constant 0 : index
    %84 = vector.load %arg5[%c0_83, %c2_84, %c0_85, %c0_86] : memref<1x8x8x128xbf16, #tpu.memory_space<vmem>>, vector<1x1x8x128xbf16>
    %85 = vector.shape_cast %84 : vector<1x1x8x128xbf16> to vector<8x128xbf16>
    %86 = vector.shape_cast %83 : vector<8x128xbf16> to vector<1x1x8x128xbf16>
    tpu.vector_store %arg5[%c0_83, %c2_84, %c0_85, %c0_86], %86 {strides = array<i32>} : memref<1x8x8x128xbf16, #tpu.memory_space<vmem>>, vector<1x1x8x128xbf16>,
    %cst_87 = arith.constant 0.000000e+00 : f32
    %87 = vector.broadcast %cst_87 : f32 to vector<8x128xf32>
    %c0_88 = arith.constant 0 : index
    %c3_89 = arith.constant 3 : index
    %c0_90 = arith.constant 0 : index
    %c0_91 = arith.constant 0 : index
    %88 = vector.load %arg2[%c0_88, %c3_89, %c0_90, %c0_91] : memref<1x9x9x16xbf16, #tpu.memory_space<vmem>>, vector<1x1x8x16xbf16>
    %89 = vector.shape_cast %88 : vector<1x1x8x16xbf16> to vector<8x16xbf16>
    %cst_92 = arith.constant dense<0.000000e+00> : vector<8x128xf32>
    %90 = tpu.matmul %89, %2, %cst_92 {dimension_numbers = #tpu.dot_dimension_numbers<[1], [0], [0], [1], [0, 0, 1, 1], [], []>} : vector<8x16xbf16>, vector<16x128xbf16>, vector<8x128xf32> -> vector<8x128xf32>
    %91 = arith.addf %87, %90 : vector<8x128xf32>
    %c0_93 = arith.constant 0 : index
    %c3_94 = arith.constant 3 : index
    %c1_95 = arith.constant 1 : index
    %c0_96 = arith.constant 0 : index
    %92 = vector.load %arg2[%c0_93, %c3_94, %c1_95, %c0_96] : memref<1x9x9x16xbf16, #tpu.memory_space<vmem>>, vector<1x1x8x16xbf16>
    %93 = vector.shape_cast %92 : vector<1x1x8x16xbf16> to vector<8x16xbf16>
    %cst_97 = arith.constant dense<0.000000e+00> : vector<8x128xf32>
    %94 = tpu.matmul %93, %4, %cst_97 {dimension_numbers = #tpu.dot_dimension_numbers<[1], [0], [0], [1], [0, 0, 1, 1], [], []>} : vector<8x16xbf16>, vector<16x128xbf16>, vector<8x128xf32> -> vector<8x128xf32>
    %95 = arith.addf %91, %94 : vector<8x128xf32>
    %c0_98 = arith.constant 0 : index
    %c4 = arith.constant 4 : index
    %c0_99 = arith.constant 0 : index
    %c0_100 = arith.constant 0 : index
    %96 = vector.load %arg2[%c0_98, %c4, %c0_99, %c0_100] : memref<1x9x9x16xbf16, #tpu.memory_space<vmem>>, vector<1x1x8x16xbf16>
    %97 = vector.shape_cast %96 : vector<1x1x8x16xbf16> to vector<8x16xbf16>
    %cst_101 = arith.constant dense<0.000000e+00> : vector<8x128xf32>
    %98 = tpu.matmul %97, %6, %cst_101 {dimension_numbers = #tpu.dot_dimension_numbers<[1], [0], [0], [1], [0, 0, 1, 1], [], []>} : vector<8x16xbf16>, vector<16x128xbf16>, vector<8x128xf32> -> vector<8x128xf32>
    %99 = arith.addf %95, %98 : vector<8x128xf32>
    %c0_102 = arith.constant 0 : index
    %c4_103 = arith.constant 4 : index
    %c1_104 = arith.constant 1 : index
    %c0_105 = arith.constant 0 : index
    %100 = vector.load %arg2[%c0_102, %c4_103, %c1_104, %c0_105] : memref<1x9x9x16xbf16, #tpu.memory_space<vmem>>, vector<1x1x8x16xbf16>
    %101 = vector.shape_cast %100 : vector<1x1x8x16xbf16> to vector<8x16xbf16>
    %cst_106 = arith.constant dense<0.000000e+00> : vector<8x128xf32>
    %102 = tpu.matmul %101, %8, %cst_106 {dimension_numbers = #tpu.dot_dimension_numbers<[1], [0], [0], [1], [0, 0, 1, 1], [], []>} : vector<8x16xbf16>, vector<16x128xbf16>, vector<8x128xf32> -> vector<8x128xf32>
    %103 = arith.addf %99, %102 : vector<8x128xf32>
    %104 = vector.broadcast %0 : vector<1x128xf32> to vector<8x128xf32>
    %105 = arith.addf %103, %104 : vector<8x128xf32>
    %cst_107 = arith.constant 2.000000e-01 : f32
    %106 = vector.broadcast %cst_107 : f32 to vector<8x128xf32>
    %107 = arith.mulf %106, %105 : vector<8x128xf32>
    %108 = arith.maximumf %105, %107 : vector<8x128xf32>
    %109 = arith.truncf %108 : vector<8x128xf32> to vector<8x128xbf16>
    %c0_108 = arith.constant 0 : index
    %c3_109 = arith.constant 3 : index
    %c0_110 = arith.constant 0 : index
    %c0_111 = arith.constant 0 : index
    %110 = vector.load %arg5[%c0_108, %c3_109, %c0_110, %c0_111] : memref<1x8x8x128xbf16, #tpu.memory_space<vmem>>, vector<1x1x8x128xbf16>
    %111 = vector.shape_cast %110 : vector<1x1x8x128xbf16> to vector<8x128xbf16>
    %112 = vector.shape_cast %109 : vector<8x128xbf16> to vector<1x1x8x128xbf16>
    tpu.vector_store %arg5[%c0_108, %c3_109, %c0_110, %c0_111], %112 {strides = array<i32>} : memref<1x8x8x128xbf16, #tpu.memory_space<vmem>>, vector<1x1x8x128xbf16>,
    %cst_112 = arith.constant 0.000000e+00 : f32
    %113 = vector.broadcast %cst_112 : f32 to vector<8x128xf32>
    %c0_113 = arith.constant 0 : index
    %c4_114 = arith.constant 4 : index
    %c0_115 = arith.constant 0 : index
    %c0_116 = arith.constant 0 : index
    %114 = vector.load %arg2[%c0_113, %c4_114, %c0_115, %c0_116] : memref<1x9x9x16xbf16, #tpu.memory_space<vmem>>, vector<1x1x8x16xbf16>
    %115 = vector.shape_cast %114 : vector<1x1x8x16xbf16> to vector<8x16xbf16>
    %cst_117 = arith.constant dense<0.000000e+00> : vector<8x128xf32>
    %116 = tpu.matmul %115, %2, %cst_117 {dimension_numbers = #tpu.dot_dimension_numbers<[1], [0], [0], [1], [0, 0, 1, 1], [], []>} : vector<8x16xbf16>, vector<16x128xbf16>, vector<8x128xf32> -> vector<8x128xf32>
    %117 = arith.addf %113, %116 : vector<8x128xf32>
    %c0_118 = arith.constant 0 : index
    %c4_119 = arith.constant 4 : index
    %c1_120 = arith.constant 1 : index
    %c0_121 = arith.constant 0 : index
    %118 = vector.load %arg2[%c0_118, %c4_119, %c1_120, %c0_121] : memref<1x9x9x16xbf16, #tpu.memory_space<vmem>>, vector<1x1x8x16xbf16>
    %119 = vector.shape_cast %118 : vector<1x1x8x16xbf16> to vector<8x16xbf16>
    %cst_122 = arith.constant dense<0.000000e+00> : vector<8x128xf32>
    %120 = tpu.matmul %119, %4, %cst_122 {dimension_numbers = #tpu.dot_dimension_numbers<[1], [0], [0], [1], [0, 0, 1, 1], [], []>} : vector<8x16xbf16>, vector<16x128xbf16>, vector<8x128xf32> -> vector<8x128xf32>
    %121 = arith.addf %117, %120 : vector<8x128xf32>
    %c0_123 = arith.constant 0 : index
    %c5 = arith.constant 5 : index
    %c0_124 = arith.constant 0 : index
    %c0_125 = arith.constant 0 : index
    %122 = vector.load %arg2[%c0_123, %c5, %c0_124, %c0_125] : memref<1x9x9x16xbf16, #tpu.memory_space<vmem>>, vector<1x1x8x16xbf16>
    %123 = vector.shape_cast %122 : vector<1x1x8x16xbf16> to vector<8x16xbf16>
    %cst_126 = arith.constant dense<0.000000e+00> : vector<8x128xf32>
    %124 = tpu.matmul %123, %6, %cst_126 {dimension_numbers = #tpu.dot_dimension_numbers<[1], [0], [0], [1], [0, 0, 1, 1], [], []>} : vector<8x16xbf16>, vector<16x128xbf16>, vector<8x128xf32> -> vector<8x128xf32>
    %125 = arith.addf %121, %124 : vector<8x128xf32>
    %c0_127 = arith.constant 0 : index
    %c5_128 = arith.constant 5 : index
    %c1_129 = arith.constant 1 : index
    %c0_130 = arith.constant 0 : index
    %126 = vector.load %arg2[%c0_127, %c5_128, %c1_129, %c0_130] : memref<1x9x9x16xbf16, #tpu.memory_space<vmem>>, vector<1x1x8x16xbf16>
    %127 = vector.shape_cast %126 : vector<1x1x8x16xbf16> to vector<8x16xbf16>
    %cst_131 = arith.constant dense<0.000000e+00> : vector<8x128xf32>
    %128 = tpu.matmul %127, %8, %cst_131 {dimension_numbers = #tpu.dot_dimension_numbers<[1], [0], [0], [1], [0, 0, 1, 1], [], []>} : vector<8x16xbf16>, vector<16x128xbf16>, vector<8x128xf32> -> vector<8x128xf32>
    %129 = arith.addf %125, %128 : vector<8x128xf32>
    %130 = vector.broadcast %0 : vector<1x128xf32> to vector<8x128xf32>
    %131 = arith.addf %129, %130 : vector<8x128xf32>
    %cst_132 = arith.constant 2.000000e-01 : f32
    %132 = vector.broadcast %cst_132 : f32 to vector<8x128xf32>
    %133 = arith.mulf %132, %131 : vector<8x128xf32>
    %134 = arith.maximumf %131, %133 : vector<8x128xf32>
    %135 = arith.truncf %134 : vector<8x128xf32> to vector<8x128xbf16>
    %c0_133 = arith.constant 0 : index
    %c4_134 = arith.constant 4 : index
    %c0_135 = arith.constant 0 : index
    %c0_136 = arith.constant 0 : index
    %136 = vector.load %arg5[%c0_133, %c4_134, %c0_135, %c0_136] : memref<1x8x8x128xbf16, #tpu.memory_space<vmem>>, vector<1x1x8x128xbf16>
    %137 = vector.shape_cast %136 : vector<1x1x8x128xbf16> to vector<8x128xbf16>
    %138 = vector.shape_cast %135 : vector<8x128xbf16> to vector<1x1x8x128xbf16>
    tpu.vector_store %arg5[%c0_133, %c4_134, %c0_135, %c0_136], %138 {strides = array<i32>} : memref<1x8x8x128xbf16, #tpu.memory_space<vmem>>, vector<1x1x8x128xbf16>,
    %cst_137 = arith.constant 0.000000e+00 : f32
    %139 = vector.broadcast %cst_137 : f32 to vector<8x128xf32>
    %c0_138 = arith.constant 0 : index
    %c5_139 = arith.constant 5 : index
    %c0_140 = arith.constant 0 : index
    %c0_141 = arith.constant 0 : index
    %140 = vector.load %arg2[%c0_138, %c5_139, %c0_140, %c0_141] : memref<1x9x9x16xbf16, #tpu.memory_space<vmem>>, vector<1x1x8x16xbf16>
    %141 = vector.shape_cast %140 : vector<1x1x8x16xbf16> to vector<8x16xbf16>
    %cst_142 = arith.constant dense<0.000000e+00> : vector<8x128xf32>
    %142 = tpu.matmul %141, %2, %cst_142 {dimension_numbers = #tpu.dot_dimension_numbers<[1], [0], [0], [1], [0, 0, 1, 1], [], []>} : vector<8x16xbf16>, vector<16x128xbf16>, vector<8x128xf32> -> vector<8x128xf32>
    %143 = arith.addf %139, %142 : vector<8x128xf32>
    %c0_143 = arith.constant 0 : index
    %c5_144 = arith.constant 5 : index
    %c1_145 = arith.constant 1 : index
    %c0_146 = arith.constant 0 : index
    %144 = vector.load %arg2[%c0_143, %c5_144, %c1_145, %c0_146] : memref<1x9x9x16xbf16, #tpu.memory_space<vmem>>, vector<1x1x8x16xbf16>
    %145 = vector.shape_cast %144 : vector<1x1x8x16xbf16> to vector<8x16xbf16>
    %cst_147 = arith.constant dense<0.000000e+00> : vector<8x128xf32>
    %146 = tpu.matmul %145, %4, %cst_147 {dimension_numbers = #tpu.dot_dimension_numbers<[1], [0], [0], [1], [0, 0, 1, 1], [], []>} : vector<8x16xbf16>, vector<16x128xbf16>, vector<8x128xf32> -> vector<8x128xf32>
    %147 = arith.addf %143, %146 : vector<8x128xf32>
    %c0_148 = arith.constant 0 : index
    %c6 = arith.constant 6 : index
    %c0_149 = arith.constant 0 : index
    %c0_150 = arith.constant 0 : index
    %148 = vector.load %arg2[%c0_148, %c6, %c0_149, %c0_150] : memref<1x9x9x16xbf16, #tpu.memory_space<vmem>>, vector<1x1x8x16xbf16>
    %149 = vector.shape_cast %148 : vector<1x1x8x16xbf16> to vector<8x16xbf16>
    %cst_151 = arith.constant dense<0.000000e+00> : vector<8x128xf32>
    %150 = tpu.matmul %149, %6, %cst_151 {dimension_numbers = #tpu.dot_dimension_numbers<[1], [0], [0], [1], [0, 0, 1, 1], [], []>} : vector<8x16xbf16>, vector<16x128xbf16>, vector<8x128xf32> -> vector<8x128xf32>
    %151 = arith.addf %147, %150 : vector<8x128xf32>
    %c0_152 = arith.constant 0 : index
    %c6_153 = arith.constant 6 : index
    %c1_154 = arith.constant 1 : index
    %c0_155 = arith.constant 0 : index
    %152 = vector.load %arg2[%c0_152, %c6_153, %c1_154, %c0_155] : memref<1x9x9x16xbf16, #tpu.memory_space<vmem>>, vector<1x1x8x16xbf16>
    %153 = vector.shape_cast %152 : vector<1x1x8x16xbf16> to vector<8x16xbf16>
    %cst_156 = arith.constant dense<0.000000e+00> : vector<8x128xf32>
    %154 = tpu.matmul %153, %8, %cst_156 {dimension_numbers = #tpu.dot_dimension_numbers<[1], [0], [0], [1], [0, 0, 1, 1], [], []>} : vector<8x16xbf16>, vector<16x128xbf16>, vector<8x128xf32> -> vector<8x128xf32>
    %155 = arith.addf %151, %154 : vector<8x128xf32>
    %156 = vector.broadcast %0 : vector<1x128xf32> to vector<8x128xf32>
    %157 = arith.addf %155, %156 : vector<8x128xf32>
    %cst_157 = arith.constant 2.000000e-01 : f32
    %158 = vector.broadcast %cst_157 : f32 to vector<8x128xf32>
    %159 = arith.mulf %158, %157 : vector<8x128xf32>
    %160 = arith.maximumf %157, %159 : vector<8x128xf32>
    %161 = arith.truncf %160 : vector<8x128xf32> to vector<8x128xbf16>
    %c0_158 = arith.constant 0 : index
    %c5_159 = arith.constant 5 : index
    %c0_160 = arith.constant 0 : index
    %c0_161 = arith.constant 0 : index
    %162 = vector.load %arg5[%c0_158, %c5_159, %c0_160, %c0_161] : memref<1x8x8x128xbf16, #tpu.memory_space<vmem>>, vector<1x1x8x128xbf16>
    %163 = vector.shape_cast %162 : vector<1x1x8x128xbf16> to vector<8x128xbf16>
    %164 = vector.shape_cast %161 : vector<8x128xbf16> to vector<1x1x8x128xbf16>
    tpu.vector_store %arg5[%c0_158, %c5_159, %c0_160, %c0_161], %164 {strides = array<i32>} : memref<1x8x8x128xbf16, #tpu.memory_space<vmem>>, vector<1x1x8x128xbf16>,
    %cst_162 = arith.constant 0.000000e+00 : f32
    %165 = vector.broadcast %cst_162 : f32 to vector<8x128xf32>
    %c0_163 = arith.constant 0 : index
    %c6_164 = arith.constant 6 : index
    %c0_165 = arith.constant 0 : index
    %c0_166 = arith.constant 0 : index
    %166 = vector.load %arg2[%c0_163, %c6_164, %c0_165, %c0_166] : memref<1x9x9x16xbf16, #tpu.memory_space<vmem>>, vector<1x1x8x16xbf16>
    %167 = vector.shape_cast %166 : vector<1x1x8x16xbf16> to vector<8x16xbf16>
    %cst_167 = arith.constant dense<0.000000e+00> : vector<8x128xf32>
    %168 = tpu.matmul %167, %2, %cst_167 {dimension_numbers = #tpu.dot_dimension_numbers<[1], [0], [0], [1], [0, 0, 1, 1], [], []>} : vector<8x16xbf16>, vector<16x128xbf16>, vector<8x128xf32> -> vector<8x128xf32>
    %169 = arith.addf %165, %168 : vector<8x128xf32>
    %c0_168 = arith.constant 0 : index
    %c6_169 = arith.constant 6 : index
    %c1_170 = arith.constant 1 : index
    %c0_171 = arith.constant 0 : index
    %170 = vector.load %arg2[%c0_168, %c6_169, %c1_170, %c0_171] : memref<1x9x9x16xbf16, #tpu.memory_space<vmem>>, vector<1x1x8x16xbf16>
    %171 = vector.shape_cast %170 : vector<1x1x8x16xbf16> to vector<8x16xbf16>
    %cst_172 = arith.constant dense<0.000000e+00> : vector<8x128xf32>
    %172 = tpu.matmul %171, %4, %cst_172 {dimension_numbers = #tpu.dot_dimension_numbers<[1], [0], [0], [1], [0, 0, 1, 1], [], []>} : vector<8x16xbf16>, vector<16x128xbf16>, vector<8x128xf32> -> vector<8x128xf32>
    %173 = arith.addf %169, %172 : vector<8x128xf32>
    %c0_173 = arith.constant 0 : index
    %c7 = arith.constant 7 : index
    %c0_174 = arith.constant 0 : index
    %c0_175 = arith.constant 0 : index
    %174 = vector.load %arg2[%c0_173, %c7, %c0_174, %c0_175] : memref<1x9x9x16xbf16, #tpu.memory_space<vmem>>, vector<1x1x8x16xbf16>
    %175 = vector.shape_cast %174 : vector<1x1x8x16xbf16> to vector<8x16xbf16>
    %cst_176 = arith.constant dense<0.000000e+00> : vector<8x128xf32>
    %176 = tpu.matmul %175, %6, %cst_176 {dimension_numbers = #tpu.dot_dimension_numbers<[1], [0], [0], [1], [0, 0, 1, 1], [], []>} : vector<8x16xbf16>, vector<16x128xbf16>, vector<8x128xf32> -> vector<8x128xf32>
    %177 = arith.addf %173, %176 : vector<8x128xf32>
    %c0_177 = arith.constant 0 : index
    %c7_178 = arith.constant 7 : index
    %c1_179 = arith.constant 1 : index
    %c0_180 = arith.constant 0 : index
    %178 = vector.load %arg2[%c0_177, %c7_178, %c1_179, %c0_180] : memref<1x9x9x16xbf16, #tpu.memory_space<vmem>>, vector<1x1x8x16xbf16>
    %179 = vector.shape_cast %178 : vector<1x1x8x16xbf16> to vector<8x16xbf16>
    %cst_181 = arith.constant dense<0.000000e+00> : vector<8x128xf32>
    %180 = tpu.matmul %179, %8, %cst_181 {dimension_numbers = #tpu.dot_dimension_numbers<[1], [0], [0], [1], [0, 0, 1, 1], [], []>} : vector<8x16xbf16>, vector<16x128xbf16>, vector<8x128xf32> -> vector<8x128xf32>
    %181 = arith.addf %177, %180 : vector<8x128xf32>
    %182 = vector.broadcast %0 : vector<1x128xf32> to vector<8x128xf32>
    %183 = arith.addf %181, %182 : vector<8x128xf32>
    %cst_182 = arith.constant 2.000000e-01 : f32
    %184 = vector.broadcast %cst_182 : f32 to vector<8x128xf32>
    %185 = arith.mulf %184, %183 : vector<8x128xf32>
    %186 = arith.maximumf %183, %185 : vector<8x128xf32>
    %187 = arith.truncf %186 : vector<8x128xf32> to vector<8x128xbf16>
    %c0_183 = arith.constant 0 : index
    %c6_184 = arith.constant 6 : index
    %c0_185 = arith.constant 0 : index
    %c0_186 = arith.constant 0 : index
    %188 = vector.load %arg5[%c0_183, %c6_184, %c0_185, %c0_186] : memref<1x8x8x128xbf16, #tpu.memory_space<vmem>>, vector<1x1x8x128xbf16>
    %189 = vector.shape_cast %188 : vector<1x1x8x128xbf16> to vector<8x128xbf16>
    %190 = vector.shape_cast %187 : vector<8x128xbf16> to vector<1x1x8x128xbf16>
    tpu.vector_store %arg5[%c0_183, %c6_184, %c0_185, %c0_186], %190 {strides = array<i32>} : memref<1x8x8x128xbf16, #tpu.memory_space<vmem>>, vector<1x1x8x128xbf16>,
    %cst_187 = arith.constant 0.000000e+00 : f32
    %191 = vector.broadcast %cst_187 : f32 to vector<8x128xf32>
    %c0_188 = arith.constant 0 : index
    %c7_189 = arith.constant 7 : index
    %c0_190 = arith.constant 0 : index
    %c0_191 = arith.constant 0 : index
    %192 = vector.load %arg2[%c0_188, %c7_189, %c0_190, %c0_191] : memref<1x9x9x16xbf16, #tpu.memory_space<vmem>>, vector<1x1x8x16xbf16>
    %193 = vector.shape_cast %192 : vector<1x1x8x16xbf16> to vector<8x16xbf16>
    %cst_192 = arith.constant dense<0.000000e+00> : vector<8x128xf32>
    %194 = tpu.matmul %193, %2, %cst_192 {dimension_numbers = #tpu.dot_dimension_numbers<[1], [0], [0], [1], [0, 0, 1, 1], [], []>} : vector<8x16xbf16>, vector<16x128xbf16>, vector<8x128xf32> -> vector<8x128xf32>
    %195 = arith.addf %191, %194 : vector<8x128xf32>
    %c0_193 = arith.constant 0 : index
    %c7_194 = arith.constant 7 : index
    %c1_195 = arith.constant 1 : index
    %c0_196 = arith.constant 0 : index
    %196 = vector.load %arg2[%c0_193, %c7_194, %c1_195, %c0_196] : memref<1x9x9x16xbf16, #tpu.memory_space<vmem>>, vector<1x1x8x16xbf16>
    %197 = vector.shape_cast %196 : vector<1x1x8x16xbf16> to vector<8x16xbf16>
    %cst_197 = arith.constant dense<0.000000e+00> : vector<8x128xf32>
    %198 = tpu.matmul %197, %4, %cst_197 {dimension_numbers = #tpu.dot_dimension_numbers<[1], [0], [0], [1], [0, 0, 1, 1], [], []>} : vector<8x16xbf16>, vector<16x128xbf16>, vector<8x128xf32> -> vector<8x128xf32>
    %199 = arith.addf %195, %198 : vector<8x128xf32>
    %c0_198 = arith.constant 0 : index
    %c8 = arith.constant 8 : index
    %c0_199 = arith.constant 0 : index
    %c0_200 = arith.constant 0 : index
    %200 = vector.load %arg2[%c0_198, %c8, %c0_199, %c0_200] : memref<1x9x9x16xbf16, #tpu.memory_space<vmem>>, vector<1x1x8x16xbf16>
    %201 = vector.shape_cast %200 : vector<1x1x8x16xbf16> to vector<8x16xbf16>
    %cst_201 = arith.constant dense<0.000000e+00> : vector<8x128xf32>
    %202 = tpu.matmul %201, %6, %cst_201 {dimension_numbers = #tpu.dot_dimension_numbers<[1], [0], [0], [1], [0, 0, 1, 1], [], []>} : vector<8x16xbf16>, vector<16x128xbf16>, vector<8x128xf32> -> vector<8x128xf32>
    %203 = arith.addf %199, %202 : vector<8x128xf32>
    %c0_202 = arith.constant 0 : index
    %c8_203 = arith.constant 8 : index
    %c1_204 = arith.constant 1 : index
    %c0_205 = arith.constant 0 : index
    %204 = vector.load %arg2[%c0_202, %c8_203, %c1_204, %c0_205] : memref<1x9x9x16xbf16, #tpu.memory_space<vmem>>, vector<1x1x8x16xbf16>
    %205 = vector.shape_cast %204 : vector<1x1x8x16xbf16> to vector<8x16xbf16>
    %cst_206 = arith.constant dense<0.000000e+00> : vector<8x128xf32>
    %206 = tpu.matmul %205, %8, %cst_206 {dimension_numbers = #tpu.dot_dimension_numbers<[1], [0], [0], [1], [0, 0, 1, 1], [], []>} : vector<8x16xbf16>, vector<16x128xbf16>, vector<8x128xf32> -> vector<8x128xf32>
    %207 = arith.addf %203, %206 : vector<8x128xf32>
    %208 = vector.broadcast %0 : vector<1x128xf32> to vector<8x128xf32>
    %209 = arith.addf %207, %208 : vector<8x128xf32>
    %cst_207 = arith.constant 2.000000e-01 : f32
    %210 = vector.broadcast %cst_207 : f32 to vector<8x128xf32>
    %211 = arith.mulf %210, %209 : vector<8x128xf32>
    %212 = arith.maximumf %209, %211 : vector<8x128xf32>
    %213 = arith.truncf %212 : vector<8x128xf32> to vector<8x128xbf16>
    %c0_208 = arith.constant 0 : index
    %c7_209 = arith.constant 7 : index
    %c0_210 = arith.constant 0 : index
    %c0_211 = arith.constant 0 : index
    %214 = vector.load %arg5[%c0_208, %c7_209, %c0_210, %c0_211] : memref<1x8x8x128xbf16, #tpu.memory_space<vmem>>, vector<1x1x8x128xbf16>
    %215 = vector.shape_cast %214 : vector<1x1x8x128xbf16> to vector<8x128xbf16>
    %216 = vector.shape_cast %213 : vector<8x128xbf16> to vector<1x1x8x128xbf16>
    tpu.vector_store %arg5[%c0_208, %c7_209, %c0_210, %c0_211], %216 {strides = array<i32>} : memref<1x8x8x128xbf16, #tpu.memory_space<vmem>>, vector<1x1x8x128xbf16>,
    return
  }
  func.func @transform_0(%arg0: i32, %arg1: i32) -> (i32, i32, i32, i32) {
    %c0_i32 = arith.constant 0 : i32
    %c0_i32_0 = arith.constant 0 : i32
    %c0_i32_1 = arith.constant 0 : i32
    %c0_i32_2 = arith.constant 0 : i32
    return %arg0, %c0_i32, %c0_i32_0, %c0_i32_1 : i32, i32, i32, i32
  }
  func.func @transform_1(%arg0: i32, %arg1: i32) -> (i32, i32, i32) {
    %c0_i32 = arith.constant 0 : i32
    %c0_i32_0 = arith.constant 0 : i32
    %c0_i32_1 = arith.constant 0 : i32
    return %c0_i32, %c0_i32_0, %arg1 : i32, i32, i32
  }
  func.func @transform_2(%arg0: i32, %arg1: i32) -> (i32, i32) {
    %c0_i32 = arith.constant 0 : i32
    %c0_i32_0 = arith.constant 0 : i32
    return %c0_i32, %arg1 : i32, i32
  }
  func.func @transform_3(%arg0: i32, %arg1: i32) -> (i32, i32, i32, i32) {
    %c0_i32 = arith.constant 0 : i32
    %c0_i32_0 = arith.constant 0 : i32
    %c0_i32_1 = arith.constant 0 : i32
    return %arg0, %c0_i32, %c0_i32_0, %arg1 : i32, i32, i32, i32
  }
}

</mosaic_0001>

<llo_original>
// kernel: tpu_custom_call.1
$region0: #{tpu_custom_call.1}
  #allocation0 [shape = 'u32[]', space=smem, size = 0x4, offset = 0x4, fixed_abs, tag = 'smem constant byte address 0x4 - core index']
  #allocation1 [shape = 'u32[144,128]{1,0:T(1,128)}', space=vmem, size = 0x12000, scoped, tag = 'internal scratch']
  %s0 = inlined_call_operand.vmem [shape: bf16[2,9,9,16], index: 0, kind: input, shape index: {}]
  %s1 = inlined_call_operand.vmem [shape: bf16[4,16,128], index: 1, kind: input, shape index: {}]
  %s2 = inlined_call_operand.vmem [shape: f32[1,128], index: 2, kind: input, shape index: {}]
  %s3 = inlined_call_operand.hbm [shape: bf16[2,8,8,128], index: 3, kind: output, shape index: {}]
  %s4 = sld [smem:[#allocation0]]
  $region45: #{tpu_custom_call.1} parent=0
    _
  %s6 = ssub.s32 1, %s4
  %s7 = scalar_select 0, %s6, %s4
  $region1: #{tpu_custom_call.1} parent=0
    #allocation2 [shape = 'u8[32768]{0}', space=vmem, size = 0x8000, scoped, tag = 'output window, operand 0']
    #allocation3 [shape = 's32[2]{0}', space=sflag, size = 0x8, scoped, tag = 'scoped memory for tpu_custom_call.1']
    %8 = vsyncpa [#allocation3], 0
    %s9 = scalar_lea.sflag [#allocation3], 1
    %10 = vsyncpa %s9, 0
    loop: start=0, step=1, limit=4
    $region2: #{tpu_custom_call.1} parent=1 // loop_pre_header
      _
    $region3: #{tpu_custom_call.1} parent=1 // loop_header
      %s12 = sphi 0, %s16
      %p13 = scmp.ge.s32.totalorder %s12, 4
      %s19 = sphi 0, %s31
      %s20 = sphi 0, %s27
      %s21 = sphi 0, %s19
      %s22 = sphi 0, %s20
      %s23 = sphi 0, %s21
      %s24 = sphi 0, %s22
      %s34 = sphi 0, %s36
      %s37 = sphi 0, %s34
      %s38 = sphi 0, %s37
      %s54 = sphi 0, %s38
      %s60 = sphi 0, %s62
      %s63 = sphi 0, %s60
      %s64 = sphi 0, %s63
      %s80 = sphi 0, %s64
      %s86 = sphi 0, %s88
      %s89 = sphi 0, %s86
      %s90 = sphi 0, %s89
      %s106 = sphi 0, %s90
      %s114 = sphi 0, %s116
      %s117 = sphi 0, %s114
      %s118 = sphi 0, %s117
      %s134 = sphi 0, %s118
    $region4: #{tpu_custom_call.1} parent=1 // loop_header_branch
      %15 = sbr.rel (%p13) target = $region8
    $region5: #{tpu_custom_call.1} parent=1 // loop_body
      %s17 = ssub.s32 %s12, 1
      %s18 = ssub.s32 %s12, 2
      %s25 = sadd.s32 1, %s20
      %p26 = scmp.ge.s32.totalorder %s25, 1
      %s27 = scalar_select %p26, 0, %s25
      %s28 = sadd.s32 1, %s19
      %s29 = scalar_select %p26, %s28, %s19
      %p30 = scmp.ge.s32.totalorder %s29, 2
      %s31 = scalar_select %p30, 0, %s29
      %s32 = ssub.s32 %s19, %s31
      %p33 = scmp.eq.s32.totalorder %s32, 0
      %s35 = sadd.s32 %s34, 1
      %s36 = scalar_select %p33, %s34, %s35
      %p39 = pneg %p33
      %p40 = scmp.eq.s32.totalorder %s12, 1
      %p41 = por %p39, %p40
      %p42 = scmp.ne.s32.totalorder %s34, %s37
      %p43 = scmp.eq.s32.totalorder %s12, 0
      %p44 = por %p42, %p43
      %p45 = scmp.ne.s32.totalorder %s34, %s37
      %p46 = scmp.eq.s32.totalorder %s17, 1
      %p47 = por %p45, %p46
      %p48 = scmp.ne.s32.totalorder %s37, %s38
      %p49 = scmp.eq.s32.totalorder %s17, 0
      %p50 = por %p48, %p49
      %p51 = scmp.ne.s32.totalorder %s37, %s38
      %p52 = scmp.eq.s32.totalorder %s18, 1
      %p53 = por %p51, %p52
      %p55 = scmp.ne.s32.totalorder %s38, %s54
      %p56 = scmp.eq.s32.totalorder %s18, 0
      %p57 = por %p55, %p56
      %s58 = ssub.s32 %s20, %s27
      %p59 = scmp.eq.s32.totalorder %s58, 0
      %s61 = sadd.s32 %s60, 1
      %s62 = scalar_select %p59, %s60, %s61
      %p65 = pneg %p59
      %p66 = scmp.eq.s32.totalorder %s12, 1
      %p67 = por %p65, %p66
      %p68 = scmp.ne.s32.totalorder %s60, %s63
      %p69 = scmp.eq.s32.totalorder %s12, 0
      %p70 = por %p68, %p69
      %p71 = scmp.ne.s32.totalorder %s60, %s63
      %p72 = scmp.eq.s32.totalorder %s17, 1
      %p73 = por %p71, %p72
      %p74 = scmp.ne.s32.totalorder %s63, %s64
      %p75 = scmp.eq.s32.totalorder %s17, 0
      %p76 = por %p74, %p75
      %p77 = scmp.ne.s32.totalorder %s63, %s64
      %p78 = scmp.eq.s32.totalorder %s18, 1
      %p79 = por %p77, %p78
      %p81 = scmp.ne.s32.totalorder %s64, %s80
      %p82 = scmp.eq.s32.totalorder %s18, 0
      %p83 = por %p81, %p82
      %s84 = ssub.s32 %s20, %s27
      %p85 = scmp.eq.s32.totalorder %s84, 0
      %s87 = sadd.s32 %s86, 1
      %s88 = scalar_select %p85, %s86, %s87
      %p91 = pneg %p85
      %p92 = scmp.eq.s32.totalorder %s12, 1
      %p93 = por %p91, %p92
      %p94 = scmp.ne.s32.totalorder %s86, %s89
      %p95 = scmp.eq.s32.totalorder %s12, 0
      %p96 = por %p94, %p95
      %p97 = scmp.ne.s32.totalorder %s86, %s89
      %p98 = scmp.eq.s32.totalorder %s17, 1
      %p99 = por %p97, %p98
      %p100 = scmp.ne.s32.totalorder %s89, %s90
      %p101 = scmp.eq.s32.totalorder %s17, 0
      %p102 = por %p100, %p101
      %p103 = scmp.ne.s32.totalorder %s89, %s90
      %p104 = scmp.eq.s32.totalorder %s18, 1
      %p105 = por %p103, %p104
      %p107 = scmp.ne.s32.totalorder %s90, %s106
      %p108 = scmp.eq.s32.totalorder %s18, 0
      %p109 = por %p107, %p108
      %s110 = ssub.s32 %s19, %s31
      %s111 = ssub.s32 %s20, %s27
      %s112 = sor.u32 %s110, %s111
      %p113 = scmp.eq.s32.totalorder %s112, 0
      %s115 = sadd.s32 %s114, 1
      %s116 = scalar_select %p113, %s114, %s115
      %p119 = pneg %p113
      %p120 = scmp.eq.s32.totalorder %s12, 1
      %p121 = por %p119, %p120
      %p122 = scmp.ne.s32.totalorder %s114, %s117
      %p123 = scmp.eq.s32.totalorder %s12, 0
      %p124 = por %p122, %p123
      %p125 = scmp.ne.s32.totalorder %s114, %s117
      %p126 = scmp.eq.s32.totalorder %s17, 1
      %p127 = por %p125, %p126
      %p128 = scmp.ne.s32.totalorder %s117, %s118
      %p129 = scmp.eq.s32.totalorder %s17, 0
      %p130 = por %p128, %p129
      %p131 = scmp.ne.s32.totalorder %s117, %s118
      %p132 = scmp.eq.s32.totalorder %s18, 1
      %p133 = por %p131, %p132
      %p135 = scmp.ne.s32.totalorder %s118, %s134
      %p136 = scmp.eq.s32.totalorder %s18, 0
      %p137 = por %p135, %p136
      %p138 = scmp.le.s32.totalorder 1, %s12
      %p139 = scmp.lt.s32.totalorder %s12, 3
      %p140 = pnand %p138, %p139
      %p141 = pneg %p140
      // Predicated region
      $region9: #{tpu_custom_call.1} parent=5 // pred_check
        _
      $region10: #{tpu_custom_call.1} parent=5 // pred_check_branch
        %143 = sbr.rel (%p140) target = $region12
      $region11: #{tpu_custom_call.1} parent=5 // pred_region
        %s144 = ssub.s32 %s12, 1
        // Predicated region
        $region13: #{tpu_custom_call.1} parent=11 // pred_check
          %p145 = pneg %p76
        $region14: #{tpu_custom_call.1} parent=11 // pred_check_branch
          %147 = sbr.rel (%p145) target = $region16
        $region15: #{tpu_custom_call.1} parent=11 // pred_region
          %p148 = scmp.lt.s32.totalorder %s22, 0
          %s149 = scalar_select %p148, %s22, 0
          %s150 = smul.addr %s149, 4
          %s151 = scalar_lea.vmem %s1, %s150
        $region16: #{tpu_custom_call.1} parent=11 // pred_fallthru
          _
        // Predicated region
        $region17: #{tpu_custom_call.1} parent=11 // pred_check
          %p152 = pneg %p102
        $region18: #{tpu_custom_call.1} parent=11 // pred_check_branch
          %154 = sbr.rel (%p152) target = $region20
        $region19: #{tpu_custom_call.1} parent=11 // pred_region
          %p155 = scmp.lt.s32.totalorder %s22, 0
          %s156 = scalar_select %p155, %s22, 0
          %s157 = scalar_lea.vmem %s2, %s156
        $region20: #{tpu_custom_call.1} parent=11 // pred_fallthru
          _
      $region12: #{tpu_custom_call.1} parent=5 // pred_fallthru
        _
      %p158 = scmp.lt.s32.totalorder %s12, 2
      // Predicated region
      $region21: #{tpu_custom_call.1} parent=5 // pred_check
        %p159 = pneg %p158
      $region22: #{tpu_custom_call.1} parent=5 // pred_check_branch
        %161 = sbr.rel (%p159) target = $region24
      $region23: #{tpu_custom_call.1} parent=5 // pred_region
        // Predicated region
        $region25: #{tpu_custom_call.1} parent=23 // pred_check
          %p162 = pneg %p44
        $region26: #{tpu_custom_call.1} parent=23 // pred_check_branch
          %164 = sbr.rel (%p162) target = $region28
        $region27: #{tpu_custom_call.1} parent=23 // pred_region
          %p165 = scmp.lt.s32.totalorder %s19, 1
          %s166 = scalar_select %p165, %s19, 1
          %s167 = smul.addr %s166, 18
          %s168 = smul.addr %s167, 4
          %s169 = scalar_lea.vmem %s0, %s168
        $region28: #{tpu_custom_call.1} parent=23 // pred_fallthru
          _
      $region24: #{tpu_custom_call.1} parent=5 // pred_fallthru
        _
      %p170 = scmp.le.s32.totalorder 1, %s12
      %p171 = scmp.lt.s32.totalorder %s12, 3
      %p172 = pnand %p170, %p171
      %p173 = pneg %p172
      // Predicated region
      $region29: #{tpu_custom_call.1} parent=5 // pred_check
        _
      $region30: #{tpu_custom_call.1} parent=5 // pred_check_branch
        %175 = sbr.rel (%p172) target = $region32
      $region31: #{tpu_custom_call.1} parent=5 // pred_region
        %s176 = ssub.s32 %s12, 1
        %p177 = scmp.lt.s32.totalorder %s21, 1
        %s178 = scalar_select %p177, %s21, 1
        %s179 = smul.addr %s178, 18
        %s180 = smul.addr %s179, 4
        %s181 = scalar_lea.vmem %s0, %s180
        %p182 = pneg %p50
        %p183 = pneg %p47
        %p184 = scmp.lt.s32.totalorder %s22, 0
        %s185 = scalar_select %p184, %s22, 0
        %s186 = smul.addr %s185, 4
        %s187 = scalar_lea.vmem %s1, %s186
        %p188 = pneg %p76
        %p189 = pneg %p73
        %p190 = scmp.lt.s32.totalorder %s22, 0
        %s191 = scalar_select %p190, %s22, 0
        %s192 = scalar_lea.vmem %s2, %s191
        %p193 = pneg %p102
        %p194 = pneg %p99
        %p195 = pneg %p130
        %p196 = pneg %p127
        %s197 = sand.u32 %s117, 1
        %s198 = scalar_lea.sflag [#allocation3], %s197
        %s199 = sand.u32 %s117, 1
        %s200 = smul.addr %s199, 32
        %s201 = scalar_lea.vmem [#allocation2], %s200
        %p202 = scmp.lt.s32.totalorder %s21, 1
        %s203 = scalar_select %p202, %s21, 1
        %s204 = smul.addr %s203, 18
        %s205 = smul.addr %s204, 4
        %s206 = scalar_lea.vmem %s0, %s205
        %p207 = scmp.lt.s32.totalorder %s22, 0
        %s208 = scalar_select %p207, %s22, 0
        %s209 = smul.addr %s208, 4
        %s210 = scalar_lea.vmem %s1, %s209
        %p211 = scmp.lt.s32.totalorder %s22, 0
        %s212 = scalar_select %p211, %s22, 0
        %s213 = scalar_lea.vmem %s2, %s212
        %v215 = vld [vmem:[%s213] sm:$0x1]
        %v216 = vld [vmem:[%s210] sm:$0xf]
        %v217 = vld [vmem:[%s210 + $0x4] sm:$0xf]
        %s218 = scalar_lea.vmem %s210, 8
        %v219 = vld [vmem:[%s218] sm:$0xf]
        %v220 = vld [vmem:[%s218 + $0x4] sm:$0xf]
        %s221 = scalar_lea.vmem %s210, 16
        %v222 = vld [vmem:[%s221] sm:$0xf]
        %v223 = vld [vmem:[%s221 + $0x4] sm:$0xf]
        %s224 = scalar_lea.vmem %s210, 24
        %v225 = vld [vmem:[%s224] sm:$0xf]
        %v226 = vld [vmem:[%s224 + $0x4] sm:$0xf]
        %v227 = vld [vmem:[%s206] sm:$0xf]
        %v228 = vld [vmem:[%s206 + $0x4] sm:$0x1]
        %v231 = vunpack.c.l.b16 %v227
        %v232 = vunpack.c.l.b16 %v228
        %v233 = vpack.c.b16 %v232, %v231
        %v235 = vshrl.u32 %v233, 16
        %v237 = vshll.u32 %v233, 16
        %v239 = vrot.slane %v237, 1
        %v240 = vor.u32 %v235, %v239
        %v243 = vunpack.c.l.b16 %v219
        %v244 = vunpack.c.l.b16 %v220
        %v245 = vpack.c.b16 %v244, %v243
        %vm247 = vcmask 130048
        %v249 = vsel %vm247, %v240, 0
        %251 = vmatprep.subr.bf16.mxu0 0
        %252 = vmatpush1.bf16.msra.mxu0 0
        %253 = vmatprep.subr.bf16.mxu0 0
        %254 = vmatpush1.bf16.msra.mxu0 0
        %255 = vmatprep.subr.bf16.mxu0 0
        %256 = vmatpush1.bf16.msra.mxu0 0
        %257 = vmatprep.subr.bf16.mxu0 0
        %258 = vmatpush1.bf16.msra.mxu0 0
        %259 = vmatprep.subr.bf16.mxu0 0
        %260 = vmatpush1.bf16.msra.mxu0 0
        %261 = vmatprep.subr.bf16.mxu0 0
        %262 = vmatpush1.bf16.msra.mxu0 0
        %263 = vmatprep.subr.bf16.mxu0 0
        %264 = vmatpush1.bf16.msra.mxu0 0
        %265 = vmatprep.subr.bf16.mxu0 0
        %266 = vmatpush1.bf16.msra.mxu0 %v245
        %267 = vmatprep.subr.bf16.mxu0 0
        %268 = vmatpush2.bf16.msra.mxu0 0
        %269 = vmatprep.subr.bf16.mxu0 0
        %270 = vmatpush2.bf16.msra.mxu0 0
        %271 = vmatprep.subr.bf16.mxu0 0
        %272 = vmatpush2.bf16.msra.mxu0 0
        %273 = vmatprep.subr.bf16.mxu0 0
        %274 = vmatpush2.bf16.msra.mxu0 0
        %275 = vmatprep.subr.bf16.mxu0 0
        %276 = vmatpush2.bf16.msra.mxu0 0
        %277 = vmatprep.subr.bf16.mxu0 0
        %278 = vmatpush2.bf16.msra.mxu0 0
        %279 = vmatprep.subr.bf16.mxu0 0
        %280 = vmatpush2.bf16.msra.mxu0 0
        %281 = vmatprep.subr.bf16.mxu0 0
        %282 = vmatpush2.bf16.msra.mxu0 0
        %283 = vmatprep.mubr.bf16.mxu0 0
        %284 = vmatmul.mubr.bf16.gmra.mxu0 %v249
        %v285 = vpop.f32.mrf.mxu0
        %v286 = vadd.f32 0.0, %v285
        %v287 = vpop.f32.mrf.mxu0
        %v288 = vpop.f32.mrf.mxu0
        %v289 = vpop.f32.mrf.mxu0
        %290 = vdwg.mxu0
        %v293 = vunpack.c.l.b16 %v216
        %v294 = vunpack.c.l.b16 %v217
        %v295 = vpack.c.b16 %v294, %v293
        %v298 = vsel %vm247, %v227, 0
        %300 = vmatprep.subr.bf16.mxu0 0
        %301 = vmatpush1.bf16.msra.mxu0 0
        %302 = vmatprep.subr.bf16.mxu0 0
        %303 = vmatpush1.bf16.msra.mxu0 0
        %304 = vmatprep.subr.bf16.mxu0 0
        %305 = vmatpush1.bf16.msra.mxu0 0
        %306 = vmatprep.subr.bf16.mxu0 0
        %307 = vmatpush1.bf16.msra.mxu0 0
        %308 = vmatprep.subr.bf16.mxu0 0
        %309 = vmatpush1.bf16.msra.mxu0 0
        %310 = vmatprep.subr.bf16.mxu0 0
        %311 = vmatpush1.bf16.msra.mxu0 0
        %312 = vmatprep.subr.bf16.mxu0 0
        %313 = vmatpush1.bf16.msra.mxu0 0
        %314 = vmatprep.subr.bf16.mxu0 0
        %315 = vmatpush1.bf16.msra.mxu0 %v295
        %316 = vmatprep.subr.bf16.mxu0 0
        %317 = vmatpush2.bf16.msra.mxu0 0
        %318 = vmatprep.subr.bf16.mxu0 0
        %319 = vmatpush2.bf16.msra.mxu0 0
        %320 = vmatprep.subr.bf16.mxu0 0
        %321 = vmatpush2.bf16.msra.mxu0 0
        %322 = vmatprep.subr.bf16.mxu0 0
        %323 = vmatpush2.bf16.msra.mxu0 0
        %324 = vmatprep.subr.bf16.mxu0 0
        %325 = vmatpush2.bf16.msra.mxu0 0
        %326 = vmatprep.subr.bf16.mxu0 0
        %327 = vmatpush2.bf16.msra.mxu0 0
        %328 = vmatprep.subr.bf16.mxu0 0
        %329 = vmatpush2.bf16.msra.mxu0 0
        %330 = vmatprep.subr.bf16.mxu0 0
        %331 = vmatpush2.bf16.msra.mxu0 0
        %332 = vmatprep.mubr.bf16.mxu0 0
        %333 = vmatmul.mubr.bf16.gmra.mxu0 %v298
        %v334 = vpop.f32.mrf.mxu0
        %v335 = vadd.f32 %v286, %v334
        %v336 = vpop.f32.mrf.mxu0
        %v337 = vpop.f32.mrf.mxu0
        %v338 = vpop.f32.mrf.mxu0
        %339 = vdwg.mxu0
        %s340 = scalar_lea.vmem %s206, 8
        %v341 = vld [vmem:[%s340] sm:$0xf]
        %v344 = vunpack.c.l.b16 %v222
        %v345 = vunpack.c.l.b16 %v223
        %v346 = vpack.c.b16 %v345, %v344
        %v349 = vsel %vm247, %v341, 0
        %351 = vmatprep.subr.bf16.mxu0 0
        %352 = vmatpush1.bf16.msra.mxu0 0
        %353 = vmatprep.subr.bf16.mxu0 0
        %354 = vmatpush1.bf16.msra.mxu0 0
        %355 = vmatprep.subr.bf16.mxu0 0
        %356 = vmatpush1.bf16.msra.mxu0 0
        %357 = vmatprep.subr.bf16.mxu0 0
        %358 = vmatpush1.bf16.msra.mxu0 0
        %359 = vmatprep.subr.bf16.mxu0 0
        %360 = vmatpush1.bf16.msra.mxu0 0
        %361 = vmatprep.subr.bf16.mxu0 0
        %362 = vmatpush1.bf16.msra.mxu0 0
        %363 = vmatprep.subr.bf16.mxu0 0
        %364 = vmatpush1.bf16.msra.mxu0 0
        %365 = vmatprep.subr.bf16.mxu0 0
        %366 = vmatpush1.bf16.msra.mxu0 %v346
        %367 = vmatprep.subr.bf16.mxu0 0
        %368 = vmatpush2.bf16.msra.mxu0 0
        %369 = vmatprep.subr.bf16.mxu0 0
        %370 = vmatpush2.bf16.msra.mxu0 0
        %371 = vmatprep.subr.bf16.mxu0 0
        %372 = vmatpush2.bf16.msra.mxu0 0
        %373 = vmatprep.subr.bf16.mxu0 0
        %374 = vmatpush2.bf16.msra.mxu0 0
        %375 = vmatprep.subr.bf16.mxu0 0
        %376 = vmatpush2.bf16.msra.mxu0 0
        %377 = vmatprep.subr.bf16.mxu0 0
        %378 = vmatpush2.bf16.msra.mxu0 0
        %379 = vmatprep.subr.bf16.mxu0 0
        %380 = vmatpush2.bf16.msra.mxu0 0
        %381 = vmatprep.subr.bf16.mxu0 0
        %382 = vmatpush2.bf16.msra.mxu0 0
        %383 = vmatprep.mubr.bf16.mxu0 0
        %384 = vmatmul.mubr.bf16.gmra.mxu0 %v349
        %v385 = vpop.f32.mrf.mxu0
        %v386 = vadd.f32 0.0, %v385
        %v387 = vpop.f32.mrf.mxu0
        %v388 = vpop.f32.mrf.mxu0
        %v389 = vpop.f32.mrf.mxu0
        %390 = vdwg.mxu0
        %v391 = vadd.f32 %v335, %v386
        %v392 = vld [vmem:[%s340] sm:$0xf]
        %v393 = vld [vmem:[%s340 + $0x4] sm:$0x1]
        %v396 = vunpack.c.l.b16 %v392
        %v397 = vunpack.c.l.b16 %v393
        %v398 = vpack.c.b16 %v397, %v396
        %v400 = vshrl.u32 %v398, 16
        %v402 = vshll.u32 %v398, 16
        %v404 = vrot.slane %v402, 1
        %v405 = vor.u32 %v400, %v404
        %v408 = vunpack.c.l.b16 %v225
        %v409 = vunpack.c.l.b16 %v226
        %v410 = vpack.c.b16 %v409, %v408
        %v413 = vsel %vm247, %v405, 0
        %415 = vmatprep.subr.bf16.mxu0 0
        %416 = vmatpush1.bf16.msra.mxu0 0
        %417 = vmatprep.subr.bf16.mxu0 0
        %418 = vmatpush1.bf16.msra.mxu0 0
        %419 = vmatprep.subr.bf16.mxu0 0
        %420 = vmatpush1.bf16.msra.mxu0 0
        %421 = vmatprep.subr.bf16.mxu0 0
        %422 = vmatpush1.bf16.msra.mxu0 0
        %423 = vmatprep.subr.bf16.mxu0 0
        %424 = vmatpush1.bf16.msra.mxu0 0
        %425 = vmatprep.subr.bf16.mxu0 0
        %426 = vmatpush1.bf16.msra.mxu0 0
        %427 = vmatprep.subr.bf16.mxu0 0
        %428 = vmatpush1.bf16.msra.mxu0 0
        %429 = vmatprep.subr.bf16.mxu0 0
        %430 = vmatpush1.bf16.msra.mxu0 %v410
        %431 = vmatprep.subr.bf16.mxu0 0
        %432 = vmatpush2.bf16.msra.mxu0 0
        %433 = vmatprep.subr.bf16.mxu0 0
        %434 = vmatpush2.bf16.msra.mxu0 0
        %435 = vmatprep.subr.bf16.mxu0 0
        %436 = vmatpush2.bf16.msra.mxu0 0
        %437 = vmatprep.subr.bf16.mxu0 0
        %438 = vmatpush2.bf16.msra.mxu0 0
        %439 = vmatprep.subr.bf16.mxu0 0
        %440 = vmatpush2.bf16.msra.mxu0 0
        %441 = vmatprep.subr.bf16.mxu0 0
        %442 = vmatpush2.bf16.msra.mxu0 0
        %443 = vmatprep.subr.bf16.mxu0 0
        %444 = vmatpush2.bf16.msra.mxu0 0
        %445 = vmatprep.subr.bf16.mxu0 0
        %446 = vmatpush2.bf16.msra.mxu0 0
        %447 = vmatprep.mubr.bf16.mxu0 0
        %448 = vmatmul.mubr.bf16.gmra.mxu0 %v413
        %v449 = vpop.f32.mrf.mxu0
        %v450 = vadd.f32 0.0, %v449
        %v451 = vpop.f32.mrf.mxu0
        %v452 = vpop.f32.mrf.mxu0
        %v453 = vpop.f32.mrf.mxu0
        %454 = vdwg.mxu0
        %v455 = vadd.f32 %v391, %v450
        %v457 = vlaneseq
        %v458 = vshrl.u32 %v457, 7
        %v459 = vsub.s32 0, %v458
        %v460 = vrot.slane %v215, %v459
        %v462 = vadd.f32 %v455, %v460
        %v463 = vmul.f32 %v462, 0.2
        %v464 = vmax.f32 %v462, %v463
        %v465 = vpack.c.bf16 %v464, %v464
        %466 = vst [vmem:[%s201] sm:$0xf] %v465
        %v467 = vld [vmem:[%s340] sm:$0xf]
        %v468 = vld [vmem:[%s340 + $0x4] sm:$0x1]
        %v471 = vunpack.c.l.b16 %v467
        %v472 = vunpack.c.l.b16 %v468
        %v473 = vpack.c.b16 %v472, %v471
        %v475 = vshrl.u32 %v473, 16
        %v477 = vshll.u32 %v473, 16
        %v479 = vrot.slane %v477, 1
        %v480 = vor.u32 %v475, %v479
        %v482 = vsel %vm247, %v480, 0
        %484 = vmatprep.subr.bf16.mxu0 0
        %485 = vmatpush1.bf16.msra.mxu0 0
        %486 = vmatprep.subr.bf16.mxu0 0
        %487 = vmatpush1.bf16.msra.mxu0 0
        %488 = vmatprep.subr.bf16.mxu0 0
        %489 = vmatpush1.bf16.msra.mxu0 0
        %490 = vmatprep.subr.bf16.mxu0 0
        %491 = vmatpush1.bf16.msra.mxu0 0
        %492 = vmatprep.subr.bf16.mxu0 0
        %493 = vmatpush1.bf16.msra.mxu0 0
        %494 = vmatprep.subr.bf16.mxu0 0
        %495 = vmatpush1.bf16.msra.mxu0 0
        %496 = vmatprep.subr.bf16.mxu0 0
        %497 = vmatpush1.bf16.msra.mxu0 0
        %498 = vmatprep.subr.bf16.mxu0 0
        %499 = vmatpush1.bf16.msra.mxu0 %v245
        %500 = vmatprep.subr.bf16.mxu0 0
        %501 = vmatpush2.bf16.msra.mxu0 0
        %502 = vmatprep.subr.bf16.mxu0 0
        %503 = vmatpush2.bf16.msra.mxu0 0
        %504 = vmatprep.subr.bf16.mxu0 0
        %505 = vmatpush2.bf16.msra.mxu0 0
        %506 = vmatprep.subr.bf16.mxu0 0
        %507 = vmatpush2.bf16.msra.mxu0 0
        %508 = vmatprep.subr.bf16.mxu0 0
        %509 = vmatpush2.bf16.msra.mxu0 0
        %510 = vmatprep.subr.bf16.mxu0 0
        %511 = vmatpush2.bf16.msra.mxu0 0
        %512 = vmatprep.subr.bf16.mxu0 0
        %513 = vmatpush2.bf16.msra.mxu0 0
        %514 = vmatprep.subr.bf16.mxu0 0
        %515 = vmatpush2.bf16.msra.mxu0 0
        %516 = vmatprep.mubr.bf16.mxu0 0
        %517 = vmatmul.mubr.bf16.gmra.mxu0 %v482
        %v518 = vpop.f32.mrf.mxu0
        %v519 = vadd.f32 0.0, %v518
        %v520 = vpop.f32.mrf.mxu0
        %v521 = vpop.f32.mrf.mxu0
        %v522 = vpop.f32.mrf.mxu0
        %523 = vdwg.mxu0
        %v525 = vsel %vm247, %v467, 0
        %527 = vmatprep.subr.bf16.mxu0 0
        %528 = vmatpush1.bf16.msra.mxu0 0
        %529 = vmatprep.subr.bf16.mxu0 0
        %530 = vmatpush1.bf16.msra.mxu0 0
        %531 = vmatprep.subr.bf16.mxu0 0
        %532 = vmatpush1.bf16.msra.mxu0 0
        %533 = vmatprep.subr.bf16.mxu0 0
        %534 = vmatpush1.bf16.msra.mxu0 0
        %535 = vmatprep.subr.bf16.mxu0 0
        %536 = vmatpush1.bf16.msra.mxu0 0
        %537 = vmatprep.subr.bf16.mxu0 0
        %538 = vmatpush1.bf16.msra.mxu0 0
        %539 = vmatprep.subr.bf16.mxu0 0
        %540 = vmatpush1.bf16.msra.mxu0 0
        %541 = vmatprep.subr.bf16.mxu0 0
        %542 = vmatpush1.bf16.msra.mxu0 %v295
        %543 = vmatprep.subr.bf16.mxu0 0
        %544 = vmatpush2.bf16.msra.mxu0 0
        %545 = vmatprep.subr.bf16.mxu0 0
        %546 = vmatpush2.bf16.msra.mxu0 0
        %547 = vmatprep.subr.bf16.mxu0 0
        %548 = vmatpush2.bf16.msra.mxu0 0
        %549 = vmatprep.subr.bf16.mxu0 0
        %550 = vmatpush2.bf16.msra.mxu0 0
        %551 = vmatprep.subr.bf16.mxu0 0
        %552 = vmatpush2.bf16.msra.mxu0 0
        %553 = vmatprep.subr.bf16.mxu0 0
        %554 = vmatpush2.bf16.msra.mxu0 0
        %555 = vmatprep.subr.bf16.mxu0 0
        %556 = vmatpush2.bf16.msra.mxu0 0
        %557 = vmatprep.subr.bf16.mxu0 0
        %558 = vmatpush2.bf16.msra.mxu0 0
        %559 = vmatprep.mubr.bf16.mxu0 0
        %560 = vmatmul.mubr.bf16.gmra.mxu0 %v525
        %v561 = vpop.f32.mrf.mxu0
        %v562 = vadd.f32 %v519, %v561
        %v563 = vpop.f32.mrf.mxu0
        %v564 = vpop.f32.mrf.mxu0
        %v565 = vpop.f32.mrf.mxu0
        %566 = vdwg.mxu0
        %s567 = scalar_lea.vmem %s206, 16
        %v568 = vld [vmem:[%s567] sm:$0xf]
        %v570 = vsel %vm247, %v568, 0
        %572 = vmatprep.subr.bf16.mxu0 0
        %573 = vmatpush1.bf16.msra.mxu0 0
        %574 = vmatprep.subr.bf16.mxu0 0
        %575 = vmatpush1.bf16.msra.mxu0 0
        %576 = vmatprep.subr.bf16.mxu0 0
        %577 = vmatpush1.bf16.msra.mxu0 0
        %578 = vmatprep.subr.bf16.mxu0 0
        %579 = vmatpush1.bf16.msra.mxu0 0
        %580 = vmatprep.subr.bf16.mxu0 0
        %581 = vmatpush1.bf16.msra.mxu0 0
        %582 = vmatprep.subr.bf16.mxu0 0
        %583 = vmatpush1.bf16.msra.mxu0 0
        %584 = vmatprep.subr.bf16.mxu0 0
        %585 = vmatpush1.bf16.msra.mxu0 0
        %586 = vmatprep.subr.bf16.mxu0 0
        %587 = vmatpush1.bf16.msra.mxu0 %v346
        %588 = vmatprep.subr.bf16.mxu0 0
        %589 = vmatpush2.bf16.msra.mxu0 0
        %590 = vmatprep.subr.bf16.mxu0 0
        %591 = vmatpush2.bf16.msra.mxu0 0
        %592 = vmatprep.subr.bf16.mxu0 0
        %593 = vmatpush2.bf16.msra.mxu0 0
        %594 = vmatprep.subr.bf16.mxu0 0
        %595 = vmatpush2.bf16.msra.mxu0 0
        %596 = vmatprep.subr.bf16.mxu0 0
        %597 = vmatpush2.bf16.msra.mxu0 0
        %598 = vmatprep.subr.bf16.mxu0 0
        %599 = vmatpush2.bf16.msra.mxu0 0
        %600 = vmatprep.subr.bf16.mxu0 0
        %601 = vmatpush2.bf16.msra.mxu0 0
        %602 = vmatprep.subr.bf16.mxu0 0
        %603 = vmatpush2.bf16.msra.mxu0 0
        %604 = vmatprep.mubr.bf16.mxu0 0
        %605 = vmatmul.mubr.bf16.gmra.mxu0 %v570
        %v606 = vpop.f32.mrf.mxu0
        %v607 = vadd.f32 0.0, %v606
        %v608 = vpop.f32.mrf.mxu0
        %v609 = vpop.f32.mrf.mxu0
        %v610 = vpop.f32.mrf.mxu0
        %611 = vdwg.mxu0
        %v612 = vadd.f32 %v562, %v607
        %v613 = vld [vmem:[%s567] sm:$0xf]
        %v614 = vld [vmem:[%s567 + $0x4] sm:$0x1]
        %v617 = vunpack.c.l.b16 %v613
        %v618 = vunpack.c.l.b16 %v614
        %v619 = vpack.c.b16 %v618, %v617
        %v621 = vshrl.u32 %v619, 16
        %v623 = vshll.u32 %v619, 16
        %v625 = vrot.slane %v623, 1
        %v626 = vor.u32 %v621, %v625
        %v628 = vsel %vm247, %v626, 0
        %630 = vmatprep.subr.bf16.mxu0 0
        %631 = vmatpush1.bf16.msra.mxu0 0
        %632 = vmatprep.subr.bf16.mxu0 0
        %633 = vmatpush1.bf16.msra.mxu0 0
        %634 = vmatprep.subr.bf16.mxu0 0
        %635 = vmatpush1.bf16.msra.mxu0 0
        %636 = vmatprep.subr.bf16.mxu0 0
        %637 = vmatpush1.bf16.msra.mxu0 0
        %638 = vmatprep.subr.bf16.mxu0 0
        %639 = vmatpush1.bf16.msra.mxu0 0
        %640 = vmatprep.subr.bf16.mxu0 0
        %641 = vmatpush1.bf16.msra.mxu0 0
        %642 = vmatprep.subr.bf16.mxu0 0
        %643 = vmatpush1.bf16.msra.mxu0 0
        %644 = vmatprep.subr.bf16.mxu0 0
        %645 = vmatpush1.bf16.msra.mxu0 %v410
        %646 = vmatprep.subr.bf16.mxu0 0
        %647 = vmatpush2.bf16.msra.mxu0 0
        %648 = vmatprep.subr.bf16.mxu0 0
        %649 = vmatpush2.bf16.msra.mxu0 0
        %650 = vmatprep.subr.bf16.mxu0 0
        %651 = vmatpush2.bf16.msra.mxu0 0
        %652 = vmatprep.subr.bf16.mxu0 0
        %653 = vmatpush2.bf16.msra.mxu0 0
        %654 = vmatprep.subr.bf16.mxu0 0
        %655 = vmatpush2.bf16.msra.mxu0 0
        %656 = vmatprep.subr.bf16.mxu0 0
        %657 = vmatpush2.bf16.msra.mxu0 0
        %658 = vmatprep.subr.bf16.mxu0 0
        %659 = vmatpush2.bf16.msra.mxu0 0
        %660 = vmatprep.subr.bf16.mxu0 0
        %661 = vmatpush2.bf16.msra.mxu0 0
        %662 = vmatprep.mubr.bf16.mxu0 0
        %663 = vmatmul.mubr.bf16.gmra.mxu0 %v628
        %v664 = vpop.f32.mrf.mxu0
        %v665 = vadd.f32 0.0, %v664
        %v666 = vpop.f32.mrf.mxu0
        %v667 = vpop.f32.mrf.mxu0
        %v668 = vpop.f32.mrf.mxu0
        %669 = vdwg.mxu0
        %v670 = vadd.f32 %v612, %v665
        %v671 = vadd.f32 %v670, %v460
        %v672 = vmul.f32 %v671, 0.2
        %v673 = vmax.f32 %v671, %v672
        %v674 = vpack.c.bf16 %v673, %v673
        %s675 = scalar_lea.vmem %s201, 4 [#allocation2]
        %676 = vst [vmem:[%s675] sm:$0xf] %v674
        %v677 = vld [vmem:[%s567] sm:$0xf]
        %v678 = vld [vmem:[%s567 + $0x4] sm:$0x1]
        %v681 = vunpack.c.l.b16 %v677
        %v682 = vunpack.c.l.b16 %v678
        %v683 = vpack.c.b16 %v682, %v681
        %v685 = vshrl.u32 %v683, 16
        %v687 = vshll.u32 %v683, 16
        %v689 = vrot.slane %v687, 1
        %v690 = vor.u32 %v685, %v689
        %v692 = vsel %vm247, %v690, 0
        %694 = vmatprep.subr.bf16.mxu0 0
        %695 = vmatpush1.bf16.msra.mxu0 0
        %696 = vmatprep.subr.bf16.mxu0 0
        %697 = vmatpush1.bf16.msra.mxu0 0
        %698 = vmatprep.subr.bf16.mxu0 0
        %699 = vmatpush1.bf16.msra.mxu0 0
        %700 = vmatprep.subr.bf16.mxu0 0
        %701 = vmatpush1.bf16.msra.mxu0 0
        %702 = vmatprep.subr.bf16.mxu0 0
        %703 = vmatpush1.bf16.msra.mxu0 0
        %704 = vmatprep.subr.bf16.mxu0 0
        %705 = vmatpush1.bf16.msra.mxu0 0
        %706 = vmatprep.subr.bf16.mxu0 0
        %707 = vmatpush1.bf16.msra.mxu0 0
        %708 = vmatprep.subr.bf16.mxu0 0
        %709 = vmatpush1.bf16.msra.mxu0 %v245
        %710 = vmatprep.subr.bf16.mxu0 0
        %711 = vmatpush2.bf16.msra.mxu0 0
        %712 = vmatprep.subr.bf16.mxu0 0
        %713 = vmatpush2.bf16.msra.mxu0 0
        %714 = vmatprep.subr.bf16.mxu0 0
        %715 = vmatpush2.bf16.msra.mxu0 0
        %716 = vmatprep.subr.bf16.mxu0 0
        %717 = vmatpush2.bf16.msra.mxu0 0
        %718 = vmatprep.subr.bf16.mxu0 0
        %719 = vmatpush2.bf16.msra.mxu0 0
        %720 = vmatprep.subr.bf16.mxu0 0
        %721 = vmatpush2.bf16.msra.mxu0 0
        %722 = vmatprep.subr.bf16.mxu0 0
        %723 = vmatpush2.bf16.msra.mxu0 0
        %724 = vmatprep.subr.bf16.mxu0 0
        %725 = vmatpush2.bf16.msra.mxu0 0
        %726 = vmatprep.mubr.bf16.mxu0 0
        %727 = vmatmul.mubr.bf16.gmra.mxu0 %v692
        %v728 = vpop.f32.mrf.mxu0
        %v729 = vadd.f32 0.0, %v728
        %v730 = vpop.f32.mrf.mxu0
        %v731 = vpop.f32.mrf.mxu0
        %v732 = vpop.f32.mrf.mxu0
        %733 = vdwg.mxu0
        %v735 = vsel %vm247, %v677, 0
        %737 = vmatprep.subr.bf16.mxu0 0
        %738 = vmatpush1.bf16.msra.mxu0 0
        %739 = vmatprep.subr.bf16.mxu0 0
        %740 = vmatpush1.bf16.msra.mxu0 0
        %741 = vmatprep.subr.bf16.mxu0 0
        %742 = vmatpush1.bf16.msra.mxu0 0
        %743 = vmatprep.subr.bf16.mxu0 0
        %744 = vmatpush1.bf16.msra.mxu0 0
        %745 = vmatprep.subr.bf16.mxu0 0
        %746 = vmatpush1.bf16.msra.mxu0 0
        %747 = vmatprep.subr.bf16.mxu0 0
        %748 = vmatpush1.bf16.msra.mxu0 0
        %749 = vmatprep.subr.bf16.mxu0 0
        %750 = vmatpush1.bf16.msra.mxu0 0
        %751 = vmatprep.subr.bf16.mxu0 0
        %752 = vmatpush1.bf16.msra.mxu0 %v295
        %753 = vmatprep.subr.bf16.mxu0 0
        %754 = vmatpush2.bf16.msra.mxu0 0
        %755 = vmatprep.subr.bf16.mxu0 0
        %756 = vmatpush2.bf16.msra.mxu0 0
        %757 = vmatprep.subr.bf16.mxu0 0
        %758 = vmatpush2.bf16.msra.mxu0 0
        %759 = vmatprep.subr.bf16.mxu0 0
        %760 = vmatpush2.bf16.msra.mxu0 0
        %761 = vmatprep.subr.bf16.mxu0 0
        %762 = vmatpush2.bf16.msra.mxu0 0
        %763 = vmatprep.subr.bf16.mxu0 0
        %764 = vmatpush2.bf16.msra.mxu0 0
        %765 = vmatprep.subr.bf16.mxu0 0
        %766 = vmatpush2.bf16.msra.mxu0 0
        %767 = vmatprep.subr.bf16.mxu0 0
        %768 = vmatpush2.bf16.msra.mxu0 0
        %769 = vmatprep.mubr.bf16.mxu0 0
        %770 = vmatmul.mubr.bf16.gmra.mxu0 %v735
        %v771 = vpop.f32.mrf.mxu0
        %v772 = vadd.f32 %v729, %v771
        %v773 = vpop.f32.mrf.mxu0
        %v774 = vpop.f32.mrf.mxu0
        %v775 = vpop.f32.mrf.mxu0
        %776 = vdwg.mxu0
        %s777 = scalar_lea.vmem %s206, 24
        %v778 = vld [vmem:[%s777] sm:$0xf]
        %v780 = vsel %vm247, %v778, 0
        %782 = vmatprep.subr.bf16.mxu0 0
        %783 = vmatpush1.bf16.msra.mxu0 0
        %784 = vmatprep.subr.bf16.mxu0 0
        %785 = vmatpush1.bf16.msra.mxu0 0
        %786 = vmatprep.subr.bf16.mxu0 0
        %787 = vmatpush1.bf16.msra.mxu0 0
        %788 = vmatprep.subr.bf16.mxu0 0
        %789 = vmatpush1.bf16.msra.mxu0 0
        %790 = vmatprep.subr.bf16.mxu0 0
        %791 = vmatpush1.bf16.msra.mxu0 0
        %792 = vmatprep.subr.bf16.mxu0 0
        %793 = vmatpush1.bf16.msra.mxu0 0
        %794 = vmatprep.subr.bf16.mxu0 0
        %795 = vmatpush1.bf16.msra.mxu0 0
        %796 = vmatprep.subr.bf16.mxu0 0
        %797 = vmatpush1.bf16.msra.mxu0 %v346
        %798 = vmatprep.subr.bf16.mxu0 0
        %799 = vmatpush2.bf16.msra.mxu0 0
        %800 = vmatprep.subr.bf16.mxu0 0
        %801 = vmatpush2.bf16.msra.mxu0 0
        %802 = vmatprep.subr.bf16.mxu0 0
        %803 = vmatpush2.bf16.msra.mxu0 0
        %804 = vmatprep.subr.bf16.mxu0 0
        %805 = vmatpush2.bf16.msra.mxu0 0
        %806 = vmatprep.subr.bf16.mxu0 0
        %807 = vmatpush2.bf16.msra.mxu0 0
        %808 = vmatprep.subr.bf16.mxu0 0
        %809 = vmatpush2.bf16.msra.mxu0 0
        %810 = vmatprep.subr.bf16.mxu0 0
        %811 = vmatpush2.bf16.msra.mxu0 0
        %812 = vmatprep.subr.bf16.mxu0 0
        %813 = vmatpush2.bf16.msra.mxu0 0
        %814 = vmatprep.mubr.bf16.mxu0 0
        %815 = vmatmul.mubr.bf16.gmra.mxu0 %v780
        %v816 = vpop.f32.mrf.mxu0
        %v817 = vadd.f32 0.0, %v816
        %v818 = vpop.f32.mrf.mxu0
        %v819 = vpop.f32.mrf.mxu0
        %v820 = vpop.f32.mrf.mxu0
        %821 = vdwg.mxu0
        %v822 = vadd.f32 %v772, %v817
        %v823 = vld [vmem:[%s777] sm:$0xf]
        %v824 = vld [vmem:[%s777 + $0x4] sm:$0x1]
        %v827 = vunpack.c.l.b16 %v823
        %v828 = vunpack.c.l.b16 %v824
        %v829 = vpack.c.b16 %v828, %v827
        %v831 = vshrl.u32 %v829, 16
        %v833 = vshll.u32 %v829, 16
        %v835 = vrot.slane %v833, 1
        %v836 = vor.u32 %v831, %v835
        %v838 = vsel %vm247, %v836, 0
        %840 = vmatprep.subr.bf16.mxu0 0
        %841 = vmatpush1.bf16.msra.mxu0 0
        %842 = vmatprep.subr.bf16.mxu0 0
        %843 = vmatpush1.bf16.msra.mxu0 0
        %844 = vmatprep.subr.bf16.mxu0 0
        %845 = vmatpush1.bf16.msra.mxu0 0
        %846 = vmatprep.subr.bf16.mxu0 0
        %847 = vmatpush1.bf16.msra.mxu0 0
        %848 = vmatprep.subr.bf16.mxu0 0
        %849 = vmatpush1.bf16.msra.mxu0 0
        %850 = vmatprep.subr.bf16.mxu0 0
        %851 = vmatpush1.bf16.msra.mxu0 0
        %852 = vmatprep.subr.bf16.mxu0 0
        %853 = vmatpush1.bf16.msra.mxu0 0
        %854 = vmatprep.subr.bf16.mxu0 0
        %855 = vmatpush1.bf16.msra.mxu0 %v410
        %856 = vmatprep.subr.bf16.mxu0 0
        %857 = vmatpush2.bf16.msra.mxu0 0
        %858 = vmatprep.subr.bf16.mxu0 0
        %859 = vmatpush2.bf16.msra.mxu0 0
        %860 = vmatprep.subr.bf16.mxu0 0
        %861 = vmatpush2.bf16.msra.mxu0 0
        %862 = vmatprep.subr.bf16.mxu0 0
        %863 = vmatpush2.bf16.msra.mxu0 0
        %864 = vmatprep.subr.bf16.mxu0 0
        %865 = vmatpush2.bf16.msra.mxu0 0
        %866 = vmatprep.subr.bf16.mxu0 0
        %867 = vmatpush2.bf16.msra.mxu0 0
        %868 = vmatprep.subr.bf16.mxu0 0
        %869 = vmatpush2.bf16.msra.mxu0 0
        %870 = vmatprep.subr.bf16.mxu0 0
        %871 = vmatpush2.bf16.msra.mxu0 0
        %872 = vmatprep.mubr.bf16.mxu0 0
        %873 = vmatmul.mubr.bf16.gmra.mxu0 %v838
        %v874 = vpop.f32.mrf.mxu0
        %v875 = vadd.f32 0.0, %v874
        %v876 = vpop.f32.mrf.mxu0
        %v877 = vpop.f32.mrf.mxu0
        %v878 = vpop.f32.mrf.mxu0
        %879 = vdwg.mxu0
        %v880 = vadd.f32 %v822, %v875
        %v881 = vadd.f32 %v880, %v460
        %v882 = vmul.f32 %v881, 0.2
        %v883 = vmax.f32 %v881, %v882
        %v884 = vpack.c.bf16 %v883, %v883
        %s885 = scalar_lea.vmem %s201, 8 [#allocation2]
        %886 = vst [vmem:[%s885] sm:$0xf] %v884
        %v887 = vld [vmem:[%s777] sm:$0xf]
        %v888 = vld [vmem:[%s777 + $0x4] sm:$0x1]
        %v891 = vunpack.c.l.b16 %v887
        %v892 = vunpack.c.l.b16 %v888
        %v893 = vpack.c.b16 %v892, %v891
        %v895 = vshrl.u32 %v893, 16
        %v897 = vshll.u32 %v893, 16
        %v899 = vrot.slane %v897, 1
        %v900 = vor.u32 %v895, %v899
        %v902 = vsel %vm247, %v900, 0
        %904 = vmatprep.subr.bf16.mxu0 0
        %905 = vmatpush1.bf16.msra.mxu0 0
        %906 = vmatprep.subr.bf16.mxu0 0
        %907 = vmatpush1.bf16.msra.mxu0 0
        %908 = vmatprep.subr.bf16.mxu0 0
        %909 = vmatpush1.bf16.msra.mxu0 0
        %910 = vmatprep.subr.bf16.mxu0 0
        %911 = vmatpush1.bf16.msra.mxu0 0
        %912 = vmatprep.subr.bf16.mxu0 0
        %913 = vmatpush1.bf16.msra.mxu0 0
        %914 = vmatprep.subr.bf16.mxu0 0
        %915 = vmatpush1.bf16.msra.mxu0 0
        %916 = vmatprep.subr.bf16.mxu0 0
        %917 = vmatpush1.bf16.msra.mxu0 0
        %918 = vmatprep.subr.bf16.mxu0 0
        %919 = vmatpush1.bf16.msra.mxu0 %v245
        %920 = vmatprep.subr.bf16.mxu0 0
        %921 = vmatpush2.bf16.msra.mxu0 0
        %922 = vmatprep.subr.bf16.mxu0 0
        %923 = vmatpush2.bf16.msra.mxu0 0
        %924 = vmatprep.subr.bf16.mxu0 0
        %925 = vmatpush2.bf16.msra.mxu0 0
        %926 = vmatprep.subr.bf16.mxu0 0
        %927 = vmatpush2.bf16.msra.mxu0 0
        %928 = vmatprep.subr.bf16.mxu0 0
        %929 = vmatpush2.bf16.msra.mxu0 0
        %930 = vmatprep.subr.bf16.mxu0 0
        %931 = vmatpush2.bf16.msra.mxu0 0
        %932 = vmatprep.subr.bf16.mxu0 0
        %933 = vmatpush2.bf16.msra.mxu0 0
        %934 = vmatprep.subr.bf16.mxu0 0
        %935 = vmatpush2.bf16.msra.mxu0 0
        %936 = vmatprep.mubr.bf16.mxu0 0
        %937 = vmatmul.mubr.bf16.gmra.mxu0 %v902
        %v938 = vpop.f32.mrf.mxu0
        %v939 = vadd.f32 0.0, %v938
        %v940 = vpop.f32.mrf.mxu0
        %v941 = vpop.f32.mrf.mxu0
        %v942 = vpop.f32.mrf.mxu0
        %943 = vdwg.mxu0
        %v945 = vsel %vm247, %v887, 0
        %947 = vmatprep.subr.bf16.mxu0 0
        %948 = vmatpush1.bf16.msra.mxu0 0
        %949 = vmatprep.subr.bf16.mxu0 0
        %950 = vmatpush1.bf16.msra.mxu0 0
        %951 = vmatprep.subr.bf16.mxu0 0
        %952 = vmatpush1.bf16.msra.mxu0 0
        %953 = vmatprep.subr.bf16.mxu0 0
        %954 = vmatpush1.bf16.msra.mxu0 0
        %955 = vmatprep.subr.bf16.mxu0 0
        %956 = vmatpush1.bf16.msra.mxu0 0
        %957 = vmatprep.subr.bf16.mxu0 0
        %958 = vmatpush1.bf16.msra.mxu0 0
        %959 = vmatprep.subr.bf16.mxu0 0
        %960 = vmatpush1.bf16.msra.mxu0 0
        %961 = vmatprep.subr.bf16.mxu0 0
        %962 = vmatpush1.bf16.msra.mxu0 %v295
        %963 = vmatprep.subr.bf16.mxu0 0
        %964 = vmatpush2.bf16.msra.mxu0 0
        %965 = vmatprep.subr.bf16.mxu0 0
        %966 = vmatpush2.bf16.msra.mxu0 0
        %967 = vmatprep.subr.bf16.mxu0 0
        %968 = vmatpush2.bf16.msra.mxu0 0
        %969 = vmatprep.subr.bf16.mxu0 0
        %970 = vmatpush2.bf16.msra.mxu0 0
        %971 = vmatprep.subr.bf16.mxu0 0
        %972 = vmatpush2.bf16.msra.mxu0 0
        %973 = vmatprep.subr.bf16.mxu0 0
        %974 = vmatpush2.bf16.msra.mxu0 0
        %975 = vmatprep.subr.bf16.mxu0 0
        %976 = vmatpush2.bf16.msra.mxu0 0
        %977 = vmatprep.subr.bf16.mxu0 0
        %978 = vmatpush2.bf16.msra.mxu0 0
        %979 = vmatprep.mubr.bf16.mxu0 0
        %980 = vmatmul.mubr.bf16.gmra.mxu0 %v945
        %v981 = vpop.f32.mrf.mxu0
        %v982 = vadd.f32 %v939, %v981
        %v983 = vpop.f32.mrf.mxu0
        %v984 = vpop.f32.mrf.mxu0
        %v985 = vpop.f32.mrf.mxu0
        %986 = vdwg.mxu0
        %s987 = scalar_lea.vmem %s206, 32
        %v988 = vld [vmem:[%s987] sm:$0xf]
        %v990 = vsel %vm247, %v988, 0
        %992 = vmatprep.subr.bf16.mxu0 0
        %993 = vmatpush1.bf16.msra.mxu0 0
        %994 = vmatprep.subr.bf16.mxu0 0
        %995 = vmatpush1.bf16.msra.mxu0 0
        %996 = vmatprep.subr.bf16.mxu0 0
        %997 = vmatpush1.bf16.msra.mxu0 0
        %998 = vmatprep.subr.bf16.mxu0 0
        %999 = vmatpush1.bf16.msra.mxu0 0
        %1000 = vmatprep.subr.bf16.mxu0 0
        %1001 = vmatpush1.bf16.msra.mxu0 0
        %1002 = vmatprep.subr.bf16.mxu0 0
        %1003 = vmatpush1.bf16.msra.mxu0 0
        %1004 = vmatprep.subr.bf16.mxu0 0
        %1005 = vmatpush1.bf16.msra.mxu0 0
        %1006 = vmatprep.subr.bf16.mxu0 0
        %1007 = vmatpush1.bf16.msra.mxu0 %v346
        %1008 = vmatprep.subr.bf16.mxu0 0
        %1009 = vmatpush2.bf16.msra.mxu0 0
        %1010 = vmatprep.subr.bf16.mxu0 0
        %1011 = vmatpush2.bf16.msra.mxu0 0
        %1012 = vmatprep.subr.bf16.mxu0 0
        %1013 = vmatpush2.bf16.msra.mxu0 0
        %1014 = vmatprep.subr.bf16.mxu0 0
        %1015 = vmatpush2.bf16.msra.mxu0 0
        %1016 = vmatprep.subr.bf16.mxu0 0
        %1017 = vmatpush2.bf16.msra.mxu0 0
        %1018 = vmatprep.subr.bf16.mxu0 0
        %1019 = vmatpush2.bf16.msra.mxu0 0
        %1020 = vmatprep.subr.bf16.mxu0 0
        %1021 = vmatpush2.bf16.msra.mxu0 0
        %1022 = vmatprep.subr.bf16.mxu0 0
        %1023 = vmatpush2.bf16.msra.mxu0 0
        %1024 = vmatprep.mubr.bf16.mxu0 0
        %1025 = vmatmul.mubr.bf16.gmra.mxu0 %v990
        %v1026 = vpop.f32.mrf.mxu0
        %v1027 = vadd.f32 0.0, %v1026
        %v1028 = vpop.f32.mrf.mxu0
        %v1029 = vpop.f32.mrf.mxu0
        %v1030 = vpop.f32.mrf.mxu0
        %1031 = vdwg.mxu0
        %v1032 = vadd.f32 %v982, %v1027
        %v1033 = vld [vmem:[%s987] sm:$0xf]
        %v1034 = vld [vmem:[%s987 + $0x4] sm:$0x1]
        %v1037 = vunpack.c.l.b16 %v1033
        %v1038 = vunpack.c.l.b16 %v1034
        %v1039 = vpack.c.b16 %v1038, %v1037
        %v1041 = vshrl.u32 %v1039, 16
        %v1043 = vshll.u32 %v1039, 16
        %v1045 = vrot.slane %v1043, 1
        %v1046 = vor.u32 %v1041, %v1045
        %v1048 = vsel %vm247, %v1046, 0
        %1050 = vmatprep.subr.bf16.mxu0 0
        %1051 = vmatpush1.bf16.msra.mxu0 0
        %1052 = vmatprep.subr.bf16.mxu0 0
        %1053 = vmatpush1.bf16.msra.mxu0 0
        %1054 = vmatprep.subr.bf16.mxu0 0
        %1055 = vmatpush1.bf16.msra.mxu0 0
        %1056 = vmatprep.subr.bf16.mxu0 0
        %1057 = vmatpush1.bf16.msra.mxu0 0
        %1058 = vmatprep.subr.bf16.mxu0 0
        %1059 = vmatpush1.bf16.msra.mxu0 0
        %1060 = vmatprep.subr.bf16.mxu0 0
        %1061 = vmatpush1.bf16.msra.mxu0 0
        %1062 = vmatprep.subr.bf16.mxu0 0
        %1063 = vmatpush1.bf16.msra.mxu0 0
        %1064 = vmatprep.subr.bf16.mxu0 0
        %1065 = vmatpush1.bf16.msra.mxu0 %v410
        %1066 = vmatprep.subr.bf16.mxu0 0
        %1067 = vmatpush2.bf16.msra.mxu0 0
        %1068 = vmatprep.subr.bf16.mxu0 0
        %1069 = vmatpush2.bf16.msra.mxu0 0
        %1070 = vmatprep.subr.bf16.mxu0 0
        %1071 = vmatpush2.bf16.msra.mxu0 0
        %1072 = vmatprep.subr.bf16.mxu0 0
        %1073 = vmatpush2.bf16.msra.mxu0 0
        %1074 = vmatprep.subr.bf16.mxu0 0
        %1075 = vmatpush2.bf16.msra.mxu0 0
        %1076 = vmatprep.subr.bf16.mxu0 0
        %1077 = vmatpush2.bf16.msra.mxu0 0
        %1078 = vmatprep.subr.bf16.mxu0 0
        %1079 = vmatpush2.bf16.msra.mxu0 0
        %1080 = vmatprep.subr.bf16.mxu0 0
        %1081 = vmatpush2.bf16.msra.mxu0 0
        %1082 = vmatprep.mubr.bf16.mxu0 0
        %1083 = vmatmul.mubr.bf16.gmra.mxu0 %v1048
        %v1084 = vpop.f32.mrf.mxu0
        %v1085 = vadd.f32 0.0, %v1084
        %v1086 = vpop.f32.mrf.mxu0
        %v1087 = vpop.f32.mrf.mxu0
        %v1088 = vpop.f32.mrf.mxu0
        %1089 = vdwg.mxu0
        %v1090 = vadd.f32 %v1032, %v1085
        %v1091 = vadd.f32 %v1090, %v460
        %v1092 = vmul.f32 %v1091, 0.2
        %v1093 = vmax.f32 %v1091, %v1092
        %v1094 = vpack.c.bf16 %v1093, %v1093
        %s1095 = scalar_lea.vmem %s201, 12 [#allocation2]
        %1096 = vst [vmem:[%s1095] sm:$0xf] %v1094
        %v1097 = vld [vmem:[%s987] sm:$0xf]
        %v1098 = vld [vmem:[%s987 + $0x4] sm:$0x1]
        %v1101 = vunpack.c.l.b16 %v1097
        %v1102 = vunpack.c.l.b16 %v1098
        %v1103 = vpack.c.b16 %v1102, %v1101
        %v1105 = vshrl.u32 %v1103, 16
        %v1107 = vshll.u32 %v1103, 16
        %v1109 = vrot.slane %v1107, 1
        %v1110 = vor.u32 %v1105, %v1109
        %v1112 = vsel %vm247, %v1110, 0
        %1114 = vmatprep.subr.bf16.mxu0 0
        %1115 = vmatpush1.bf16.msra.mxu0 0
        %1116 = vmatprep.subr.bf16.mxu0 0
        %1117 = vmatpush1.bf16.msra.mxu0 0
        %1118 = vmatprep.subr.bf16.mxu0 0
        %1119 = vmatpush1.bf16.msra.mxu0 0
        %1120 = vmatprep.subr.bf16.mxu0 0
        %1121 = vmatpush1.bf16.msra.mxu0 0
        %1122 = vmatprep.subr.bf16.mxu0 0
        %1123 = vmatpush1.bf16.msra.mxu0 0
        %1124 = vmatprep.subr.bf16.mxu0 0
        %1125 = vmatpush1.bf16.msra.mxu0 0
        %1126 = vmatprep.subr.bf16.mxu0 0
        %1127 = vmatpush1.bf16.msra.mxu0 0
        %1128 = vmatprep.subr.bf16.mxu0 0
        %1129 = vmatpush1.bf16.msra.mxu0 %v245
        %1130 = vmatprep.subr.bf16.mxu0 0
        %1131 = vmatpush2.bf16.msra.mxu0 0
        %1132 = vmatprep.subr.bf16.mxu0 0
        %1133 = vmatpush2.bf16.msra.mxu0 0
        %1134 = vmatprep.subr.bf16.mxu0 0
        %1135 = vmatpush2.bf16.msra.mxu0 0
        %1136 = vmatprep.subr.bf16.mxu0 0
        %1137 = vmatpush2.bf16.msra.mxu0 0
        %1138 = vmatprep.subr.bf16.mxu0 0
        %1139 = vmatpush2.bf16.msra.mxu0 0
        %1140 = vmatprep.subr.bf16.mxu0 0
        %1141 = vmatpush2.bf16.msra.mxu0 0
        %1142 = vmatprep.subr.bf16.mxu0 0
        %1143 = vmatpush2.bf16.msra.mxu0 0
        %1144 = vmatprep.subr.bf16.mxu0 0
        %1145 = vmatpush2.bf16.msra.mxu0 0
        %1146 = vmatprep.mubr.bf16.mxu0 0
        %1147 = vmatmul.mubr.bf16.gmra.mxu0 %v1112
        %v1148 = vpop.f32.mrf.mxu0
        %v1149 = vadd.f32 0.0, %v1148
        %v1150 = vpop.f32.mrf.mxu0
        %v1151 = vpop.f32.mrf.mxu0
        %v1152 = vpop.f32.mrf.mxu0
        %1153 = vdwg.mxu0
        %v1155 = vsel %vm247, %v1097, 0
        %1157 = vmatprep.subr.bf16.mxu0 0
        %1158 = vmatpush1.bf16.msra.mxu0 0
        %1159 = vmatprep.subr.bf16.mxu0 0
        %1160 = vmatpush1.bf16.msra.mxu0 0
        %1161 = vmatprep.subr.bf16.mxu0 0
        %1162 = vmatpush1.bf16.msra.mxu0 0
        %1163 = vmatprep.subr.bf16.mxu0 0
        %1164 = vmatpush1.bf16.msra.mxu0 0
        %1165 = vmatprep.subr.bf16.mxu0 0
        %1166 = vmatpush1.bf16.msra.mxu0 0
        %1167 = vmatprep.subr.bf16.mxu0 0
        %1168 = vmatpush1.bf16.msra.mxu0 0
        %1169 = vmatprep.subr.bf16.mxu0 0
        %1170 = vmatpush1.bf16.msra.mxu0 0
        %1171 = vmatprep.subr.bf16.mxu0 0
        %1172 = vmatpush1.bf16.msra.mxu0 %v295
        %1173 = vmatprep.subr.bf16.mxu0 0
        %1174 = vmatpush2.bf16.msra.mxu0 0
        %1175 = vmatprep.subr.bf16.mxu0 0
        %1176 = vmatpush2.bf16.msra.mxu0 0
        %1177 = vmatprep.subr.bf16.mxu0 0
        %1178 = vmatpush2.bf16.msra.mxu0 0
        %1179 = vmatprep.subr.bf16.mxu0 0
        %1180 = vmatpush2.bf16.msra.mxu0 0
        %1181 = vmatprep.subr.bf16.mxu0 0
        %1182 = vmatpush2.bf16.msra.mxu0 0
        %1183 = vmatprep.subr.bf16.mxu0 0
        %1184 = vmatpush2.bf16.msra.mxu0 0
        %1185 = vmatprep.subr.bf16.mxu0 0
        %1186 = vmatpush2.bf16.msra.mxu0 0
        %1187 = vmatprep.subr.bf16.mxu0 0
        %1188 = vmatpush2.bf16.msra.mxu0 0
        %1189 = vmatprep.mubr.bf16.mxu0 0
        %1190 = vmatmul.mubr.bf16.gmra.mxu0 %v1155
        %v1191 = vpop.f32.mrf.mxu0
        %v1192 = vadd.f32 %v1149, %v1191
        %v1193 = vpop.f32.mrf.mxu0
        %v1194 = vpop.f32.mrf.mxu0
        %v1195 = vpop.f32.mrf.mxu0
        %1196 = vdwg.mxu0
        %s1197 = scalar_lea.vmem %s206, 40
        %v1198 = vld [vmem:[%s1197] sm:$0xf]
        %v1200 = vsel %vm247, %v1198, 0
        %1202 = vmatprep.subr.bf16.mxu0 0
        %1203 = vmatpush1.bf16.msra.mxu0 0
        %1204 = vmatprep.subr.bf16.mxu0 0
        %1205 = vmatpush1.bf16.msra.mxu0 0
        %1206 = vmatprep.subr.bf16.mxu0 0
        %1207 = vmatpush1.bf16.msra.mxu0 0
        %1208 = vmatprep.subr.bf16.mxu0 0
        %1209 = vmatpush1.bf16.msra.mxu0 0
        %1210 = vmatprep.subr.bf16.mxu0 0
        %1211 = vmatpush1.bf16.msra.mxu0 0
        %1212 = vmatprep.subr.bf16.mxu0 0
        %1213 = vmatpush1.bf16.msra.mxu0 0
        %1214 = vmatprep.subr.bf16.mxu0 0
        %1215 = vmatpush1.bf16.msra.mxu0 0
        %1216 = vmatprep.subr.bf16.mxu0 0
        %1217 = vmatpush1.bf16.msra.mxu0 %v346
        %1218 = vmatprep.subr.bf16.mxu0 0
        %1219 = vmatpush2.bf16.msra.mxu0 0
        %1220 = vmatprep.subr.bf16.mxu0 0
        %1221 = vmatpush2.bf16.msra.mxu0 0
        %1222 = vmatprep.subr.bf16.mxu0 0
        %1223 = vmatpush2.bf16.msra.mxu0 0
        %1224 = vmatprep.subr.bf16.mxu0 0
        %1225 = vmatpush2.bf16.msra.mxu0 0
        %1226 = vmatprep.subr.bf16.mxu0 0
        %1227 = vmatpush2.bf16.msra.mxu0 0
        %1228 = vmatprep.subr.bf16.mxu0 0
        %1229 = vmatpush2.bf16.msra.mxu0 0
        %1230 = vmatprep.subr.bf16.mxu0 0
        %1231 = vmatpush2.bf16.msra.mxu0 0
        %1232 = vmatprep.subr.bf16.mxu0 0
        %1233 = vmatpush2.bf16.msra.mxu0 0
        %1234 = vmatprep.mubr.bf16.mxu0 0
        %1235 = vmatmul.mubr.bf16.gmra.mxu0 %v1200
        %v1236 = vpop.f32.mrf.mxu0
        %v1237 = vadd.f32 0.0, %v1236
        %v1238 = vpop.f32.mrf.mxu0
        %v1239 = vpop.f32.mrf.mxu0
        %v1240 = vpop.f32.mrf.mxu0
        %1241 = vdwg.mxu0
        %v1242 = vadd.f32 %v1192, %v1237
        %v1243 = vld [vmem:[%s1197] sm:$0xf]
        %v1244 = vld [vmem:[%s1197 + $0x4] sm:$0x1]
        %v1247 = vunpack.c.l.b16 %v1243
        %v1248 = vunpack.c.l.b16 %v1244
        %v1249 = vpack.c.b16 %v1248, %v1247
        %v1251 = vshrl.u32 %v1249, 16
        %v1253 = vshll.u32 %v1249, 16
        %v1255 = vrot.slane %v1253, 1
        %v1256 = vor.u32 %v1251, %v1255
        %v1258 = vsel %vm247, %v1256, 0
        %1260 = vmatprep.subr.bf16.mxu0 0
        %1261 = vmatpush1.bf16.msra.mxu0 0
        %1262 = vmatprep.subr.bf16.mxu0 0
        %1263 = vmatpush1.bf16.msra.mxu0 0
        %1264 = vmatprep.subr.bf16.mxu0 0
        %1265 = vmatpush1.bf16.msra.mxu0 0
        %1266 = vmatprep.subr.bf16.mxu0 0
        %1267 = vmatpush1.bf16.msra.mxu0 0
        %1268 = vmatprep.subr.bf16.mxu0 0
        %1269 = vmatpush1.bf16.msra.mxu0 0
        %1270 = vmatprep.subr.bf16.mxu0 0
        %1271 = vmatpush1.bf16.msra.mxu0 0
        %1272 = vmatprep.subr.bf16.mxu0 0
        %1273 = vmatpush1.bf16.msra.mxu0 0
        %1274 = vmatprep.subr.bf16.mxu0 0
        %1275 = vmatpush1.bf16.msra.mxu0 %v410
        %1276 = vmatprep.subr.bf16.mxu0 0
        %1277 = vmatpush2.bf16.msra.mxu0 0
        %1278 = vmatprep.subr.bf16.mxu0 0
        %1279 = vmatpush2.bf16.msra.mxu0 0
        %1280 = vmatprep.subr.bf16.mxu0 0
        %1281 = vmatpush2.bf16.msra.mxu0 0
        %1282 = vmatprep.subr.bf16.mxu0 0
        %1283 = vmatpush2.bf16.msra.mxu0 0
        %1284 = vmatprep.subr.bf16.mxu0 0
        %1285 = vmatpush2.bf16.msra.mxu0 0
        %1286 = vmatprep.subr.bf16.mxu0 0
        %1287 = vmatpush2.bf16.msra.mxu0 0
        %1288 = vmatprep.subr.bf16.mxu0 0
        %1289 = vmatpush2.bf16.msra.mxu0 0
        %1290 = vmatprep.subr.bf16.mxu0 0
        %1291 = vmatpush2.bf16.msra.mxu0 0
        %1292 = vmatprep.mubr.bf16.mxu0 0
        %1293 = vmatmul.mubr.bf16.gmra.mxu0 %v1258
        %v1294 = vpop.f32.mrf.mxu0
        %v1295 = vadd.f32 0.0, %v1294
        %v1296 = vpop.f32.mrf.mxu0
        %v1297 = vpop.f32.mrf.mxu0
        %v1298 = vpop.f32.mrf.mxu0
        %1299 = vdwg.mxu0
        %v1300 = vadd.f32 %v1242, %v1295
        %v1301 = vadd.f32 %v1300, %v460
        %v1302 = vmul.f32 %v1301, 0.2
        %v1303 = vmax.f32 %v1301, %v1302
        %v1304 = vpack.c.bf16 %v1303, %v1303
        %s1305 = scalar_lea.vmem %s201, 16 [#allocation2]
        %1306 = vst [vmem:[%s1305] sm:$0xf] %v1304
        %v1307 = vld [vmem:[%s1197] sm:$0xf]
        %v1308 = vld [vmem:[%s1197 + $0x4] sm:$0x1]
        %v1311 = vunpack.c.l.b16 %v1307
        %v1312 = vunpack.c.l.b16 %v1308
        %v1313 = vpack.c.b16 %v1312, %v1311
        %v1315 = vshrl.u32 %v1313, 16
        %v1317 = vshll.u32 %v1313, 16
        %v1319 = vrot.slane %v1317, 1
        %v1320 = vor.u32 %v1315, %v1319
        %v1322 = vsel %vm247, %v1320, 0
        %1324 = vmatprep.subr.bf16.mxu0 0
        %1325 = vmatpush1.bf16.msra.mxu0 0
        %1326 = vmatprep.subr.bf16.mxu0 0
        %1327 = vmatpush1.bf16.msra.mxu0 0
        %1328 = vmatprep.subr.bf16.mxu0 0
        %1329 = vmatpush1.bf16.msra.mxu0 0
        %1330 = vmatprep.subr.bf16.mxu0 0
        %1331 = vmatpush1.bf16.msra.mxu0 0
        %1332 = vmatprep.subr.bf16.mxu0 0
        %1333 = vmatpush1.bf16.msra.mxu0 0
        %1334 = vmatprep.subr.bf16.mxu0 0
        %1335 = vmatpush1.bf16.msra.mxu0 0
        %1336 = vmatprep.subr.bf16.mxu0 0
        %1337 = vmatpush1.bf16.msra.mxu0 0
        %1338 = vmatprep.subr.bf16.mxu0 0
        %1339 = vmatpush1.bf16.msra.mxu0 %v245
        %1340 = vmatprep.subr.bf16.mxu0 0
        %1341 = vmatpush2.bf16.msra.mxu0 0
        %1342 = vmatprep.subr.bf16.mxu0 0
        %1343 = vmatpush2.bf16.msra.mxu0 0
        %1344 = vmatprep.subr.bf16.mxu0 0
        %1345 = vmatpush2.bf16.msra.mxu0 0
        %1346 = vmatprep.subr.bf16.mxu0 0
        %1347 = vmatpush2.bf16.msra.mxu0 0
        %1348 = vmatprep.subr.bf16.mxu0 0
        %1349 = vmatpush2.bf16.msra.mxu0 0
        %1350 = vmatprep.subr.bf16.mxu0 0
        %1351 = vmatpush2.bf16.msra.mxu0 0
        %1352 = vmatprep.subr.bf16.mxu0 0
        %1353 = vmatpush2.bf16.msra.mxu0 0
        %1354 = vmatprep.subr.bf16.mxu0 0
        %1355 = vmatpush2.bf16.msra.mxu0 0
        %1356 = vmatprep.mubr.bf16.mxu0 0
        %1357 = vmatmul.mubr.bf16.gmra.mxu0 %v1322
        %v1358 = vpop.f32.mrf.mxu0
        %v1359 = vadd.f32 0.0, %v1358
        %v1360 = vpop.f32.mrf.mxu0
        %v1361 = vpop.f32.mrf.mxu0
        %v1362 = vpop.f32.mrf.mxu0
        %1363 = vdwg.mxu0
        %v1365 = vsel %vm247, %v1307, 0
        %1367 = vmatprep.subr.bf16.mxu0 0
        %1368 = vmatpush1.bf16.msra.mxu0 0
        %1369 = vmatprep.subr.bf16.mxu0 0
        %1370 = vmatpush1.bf16.msra.mxu0 0
        %1371 = vmatprep.subr.bf16.mxu0 0
        %1372 = vmatpush1.bf16.msra.mxu0 0
        %1373 = vmatprep.subr.bf16.mxu0 0
        %1374 = vmatpush1.bf16.msra.mxu0 0
        %1375 = vmatprep.subr.bf16.mxu0 0
        %1376 = vmatpush1.bf16.msra.mxu0 0
        %1377 = vmatprep.subr.bf16.mxu0 0
        %1378 = vmatpush1.bf16.msra.mxu0 0
        %1379 = vmatprep.subr.bf16.mxu0 0
        %1380 = vmatpush1.bf16.msra.mxu0 0
        %1381 = vmatprep.subr.bf16.mxu0 0
        %1382 = vmatpush1.bf16.msra.mxu0 %v295
        %1383 = vmatprep.subr.bf16.mxu0 0
        %1384 = vmatpush2.bf16.msra.mxu0 0
        %1385 = vmatprep.subr.bf16.mxu0 0
        %1386 = vmatpush2.bf16.msra.mxu0 0
        %1387 = vmatprep.subr.bf16.mxu0 0
        %1388 = vmatpush2.bf16.msra.mxu0 0
        %1389 = vmatprep.subr.bf16.mxu0 0
        %1390 = vmatpush2.bf16.msra.mxu0 0
        %1391 = vmatprep.subr.bf16.mxu0 0
        %1392 = vmatpush2.bf16.msra.mxu0 0
        %1393 = vmatprep.subr.bf16.mxu0 0
        %1394 = vmatpush2.bf16.msra.mxu0 0
        %1395 = vmatprep.subr.bf16.mxu0 0
        %1396 = vmatpush2.bf16.msra.mxu0 0
        %1397 = vmatprep.subr.bf16.mxu0 0
        %1398 = vmatpush2.bf16.msra.mxu0 0
        %1399 = vmatprep.mubr.bf16.mxu0 0
        %1400 = vmatmul.mubr.bf16.gmra.mxu0 %v1365
        %v1401 = vpop.f32.mrf.mxu0
        %v1402 = vadd.f32 %v1359, %v1401
        %v1403 = vpop.f32.mrf.mxu0
        %v1404 = vpop.f32.mrf.mxu0
        %v1405 = vpop.f32.mrf.mxu0
        %1406 = vdwg.mxu0
        %s1407 = scalar_lea.vmem %s206, 48
        %v1408 = vld [vmem:[%s1407] sm:$0xf]
        %v1410 = vsel %vm247, %v1408, 0
        %1412 = vmatprep.subr.bf16.mxu0 0
        %1413 = vmatpush1.bf16.msra.mxu0 0
        %1414 = vmatprep.subr.bf16.mxu0 0
        %1415 = vmatpush1.bf16.msra.mxu0 0
        %1416 = vmatprep.subr.bf16.mxu0 0
        %1417 = vmatpush1.bf16.msra.mxu0 0
        %1418 = vmatprep.subr.bf16.mxu0 0
        %1419 = vmatpush1.bf16.msra.mxu0 0
        %1420 = vmatprep.subr.bf16.mxu0 0
        %1421 = vmatpush1.bf16.msra.mxu0 0
        %1422 = vmatprep.subr.bf16.mxu0 0
        %1423 = vmatpush1.bf16.msra.mxu0 0
        %1424 = vmatprep.subr.bf16.mxu0 0
        %1425 = vmatpush1.bf16.msra.mxu0 0
        %1426 = vmatprep.subr.bf16.mxu0 0
        %1427 = vmatpush1.bf16.msra.mxu0 %v346
        %1428 = vmatprep.subr.bf16.mxu0 0
        %1429 = vmatpush2.bf16.msra.mxu0 0
        %1430 = vmatprep.subr.bf16.mxu0 0
        %1431 = vmatpush2.bf16.msra.mxu0 0
        %1432 = vmatprep.subr.bf16.mxu0 0
        %1433 = vmatpush2.bf16.msra.mxu0 0
        %1434 = vmatprep.subr.bf16.mxu0 0
        %1435 = vmatpush2.bf16.msra.mxu0 0
        %1436 = vmatprep.subr.bf16.mxu0 0
        %1437 = vmatpush2.bf16.msra.mxu0 0
        %1438 = vmatprep.subr.bf16.mxu0 0
        %1439 = vmatpush2.bf16.msra.mxu0 0
        %1440 = vmatprep.subr.bf16.mxu0 0
        %1441 = vmatpush2.bf16.msra.mxu0 0
        %1442 = vmatprep.subr.bf16.mxu0 0
        %1443 = vmatpush2.bf16.msra.mxu0 0
        %1444 = vmatprep.mubr.bf16.mxu0 0
        %1445 = vmatmul.mubr.bf16.gmra.mxu0 %v1410
        %v1446 = vpop.f32.mrf.mxu0
        %v1447 = vadd.f32 0.0, %v1446
        %v1448 = vpop.f32.mrf.mxu0
        %v1449 = vpop.f32.mrf.mxu0
        %v1450 = vpop.f32.mrf.mxu0
        %1451 = vdwg.mxu0
        %v1452 = vadd.f32 %v1402, %v1447
        %v1453 = vld [vmem:[%s1407] sm:$0xf]
        %v1454 = vld [vmem:[%s1407 + $0x4] sm:$0x1]
        %v1457 = vunpack.c.l.b16 %v1453
        %v1458 = vunpack.c.l.b16 %v1454
        %v1459 = vpack.c.b16 %v1458, %v1457
        %v1461 = vshrl.u32 %v1459, 16
        %v1463 = vshll.u32 %v1459, 16
        %v1465 = vrot.slane %v1463, 1
        %v1466 = vor.u32 %v1461, %v1465
        %v1468 = vsel %vm247, %v1466, 0
        %1470 = vmatprep.subr.bf16.mxu0 0
        %1471 = vmatpush1.bf16.msra.mxu0 0
        %1472 = vmatprep.subr.bf16.mxu0 0
        %1473 = vmatpush1.bf16.msra.mxu0 0
        %1474 = vmatprep.subr.bf16.mxu0 0
        %1475 = vmatpush1.bf16.msra.mxu0 0
        %1476 = vmatprep.subr.bf16.mxu0 0
        %1477 = vmatpush1.bf16.msra.mxu0 0
        %1478 = vmatprep.subr.bf16.mxu0 0
        %1479 = vmatpush1.bf16.msra.mxu0 0
        %1480 = vmatprep.subr.bf16.mxu0 0
        %1481 = vmatpush1.bf16.msra.mxu0 0
        %1482 = vmatprep.subr.bf16.mxu0 0
        %1483 = vmatpush1.bf16.msra.mxu0 0
        %1484 = vmatprep.subr.bf16.mxu0 0
        %1485 = vmatpush1.bf16.msra.mxu0 %v410
        %1486 = vmatprep.subr.bf16.mxu0 0
        %1487 = vmatpush2.bf16.msra.mxu0 0
        %1488 = vmatprep.subr.bf16.mxu0 0
        %1489 = vmatpush2.bf16.msra.mxu0 0
        %1490 = vmatprep.subr.bf16.mxu0 0
        %1491 = vmatpush2.bf16.msra.mxu0 0
        %1492 = vmatprep.subr.bf16.mxu0 0
        %1493 = vmatpush2.bf16.msra.mxu0 0
        %1494 = vmatprep.subr.bf16.mxu0 0
        %1495 = vmatpush2.bf16.msra.mxu0 0
        %1496 = vmatprep.subr.bf16.mxu0 0
        %1497 = vmatpush2.bf16.msra.mxu0 0
        %1498 = vmatprep.subr.bf16.mxu0 0
        %1499 = vmatpush2.bf16.msra.mxu0 0
        %1500 = vmatprep.subr.bf16.mxu0 0
        %1501 = vmatpush2.bf16.msra.mxu0 0
        %1502 = vmatprep.mubr.bf16.mxu0 0
        %1503 = vmatmul.mubr.bf16.gmra.mxu0 %v1468
        %v1504 = vpop.f32.mrf.mxu0
        %v1505 = vadd.f32 0.0, %v1504
        %v1506 = vpop.f32.mrf.mxu0
        %v1507 = vpop.f32.mrf.mxu0
        %v1508 = vpop.f32.mrf.mxu0
        %1509 = vdwg.mxu0
        %v1510 = vadd.f32 %v1452, %v1505
        %v1511 = vadd.f32 %v1510, %v460
        %v1512 = vmul.f32 %v1511, 0.2
        %v1513 = vmax.f32 %v1511, %v1512
        %v1514 = vpack.c.bf16 %v1513, %v1513
        %s1515 = scalar_lea.vmem %s201, 20 [#allocation2]
        %1516 = vst [vmem:[%s1515] sm:$0xf] %v1514
        %v1517 = vld [vmem:[%s1407] sm:$0xf]
        %v1518 = vld [vmem:[%s1407 + $0x4] sm:$0x1]
        %v1521 = vunpack.c.l.b16 %v1517
        %v1522 = vunpack.c.l.b16 %v1518
        %v1523 = vpack.c.b16 %v1522, %v1521
        %v1525 = vshrl.u32 %v1523, 16
        %v1527 = vshll.u32 %v1523, 16
        %v1529 = vrot.slane %v1527, 1
        %v1530 = vor.u32 %v1525, %v1529
        %v1532 = vsel %vm247, %v1530, 0
        %1534 = vmatprep.subr.bf16.mxu0 0
        %1535 = vmatpush1.bf16.msra.mxu0 0
        %1536 = vmatprep.subr.bf16.mxu0 0
        %1537 = vmatpush1.bf16.msra.mxu0 0
        %1538 = vmatprep.subr.bf16.mxu0 0
        %1539 = vmatpush1.bf16.msra.mxu0 0
        %1540 = vmatprep.subr.bf16.mxu0 0
        %1541 = vmatpush1.bf16.msra.mxu0 0
        %1542 = vmatprep.subr.bf16.mxu0 0
        %1543 = vmatpush1.bf16.msra.mxu0 0
        %1544 = vmatprep.subr.bf16.mxu0 0
        %1545 = vmatpush1.bf16.msra.mxu0 0
        %1546 = vmatprep.subr.bf16.mxu0 0
        %1547 = vmatpush1.bf16.msra.mxu0 0
        %1548 = vmatprep.subr.bf16.mxu0 0
        %1549 = vmatpush1.bf16.msra.mxu0 %v245
        %1550 = vmatprep.subr.bf16.mxu0 0
        %1551 = vmatpush2.bf16.msra.mxu0 0
        %1552 = vmatprep.subr.bf16.mxu0 0
        %1553 = vmatpush2.bf16.msra.mxu0 0
        %1554 = vmatprep.subr.bf16.mxu0 0
        %1555 = vmatpush2.bf16.msra.mxu0 0
        %1556 = vmatprep.subr.bf16.mxu0 0
        %1557 = vmatpush2.bf16.msra.mxu0 0
        %1558 = vmatprep.subr.bf16.mxu0 0
        %1559 = vmatpush2.bf16.msra.mxu0 0
        %1560 = vmatprep.subr.bf16.mxu0 0
        %1561 = vmatpush2.bf16.msra.mxu0 0
        %1562 = vmatprep.subr.bf16.mxu0 0
        %1563 = vmatpush2.bf16.msra.mxu0 0
        %1564 = vmatprep.subr.bf16.mxu0 0
        %1565 = vmatpush2.bf16.msra.mxu0 0
        %1566 = vmatprep.mubr.bf16.mxu0 0
        %1567 = vmatmul.mubr.bf16.gmra.mxu0 %v1532
        %v1568 = vpop.f32.mrf.mxu0
        %v1569 = vadd.f32 0.0, %v1568
        %v1570 = vpop.f32.mrf.mxu0
        %v1571 = vpop.f32.mrf.mxu0
        %v1572 = vpop.f32.mrf.mxu0
        %1573 = vdwg.mxu0
        %v1575 = vsel %vm247, %v1517, 0
        %1577 = vmatprep.subr.bf16.mxu0 0
        %1578 = vmatpush1.bf16.msra.mxu0 0
        %1579 = vmatprep.subr.bf16.mxu0 0
        %1580 = vmatpush1.bf16.msra.mxu0 0
        %1581 = vmatprep.subr.bf16.mxu0 0
        %1582 = vmatpush1.bf16.msra.mxu0 0
        %1583 = vmatprep.subr.bf16.mxu0 0
        %1584 = vmatpush1.bf16.msra.mxu0 0
        %1585 = vmatprep.subr.bf16.mxu0 0
        %1586 = vmatpush1.bf16.msra.mxu0 0
        %1587 = vmatprep.subr.bf16.mxu0 0
        %1588 = vmatpush1.bf16.msra.mxu0 0
        %1589 = vmatprep.subr.bf16.mxu0 0
        %1590 = vmatpush1.bf16.msra.mxu0 0
        %1591 = vmatprep.subr.bf16.mxu0 0
        %1592 = vmatpush1.bf16.msra.mxu0 %v295
        %1593 = vmatprep.subr.bf16.mxu0 0
        %1594 = vmatpush2.bf16.msra.mxu0 0
        %1595 = vmatprep.subr.bf16.mxu0 0
        %1596 = vmatpush2.bf16.msra.mxu0 0
        %1597 = vmatprep.subr.bf16.mxu0 0
        %1598 = vmatpush2.bf16.msra.mxu0 0
        %1599 = vmatprep.subr.bf16.mxu0 0
        %1600 = vmatpush2.bf16.msra.mxu0 0
        %1601 = vmatprep.subr.bf16.mxu0 0
        %1602 = vmatpush2.bf16.msra.mxu0 0
        %1603 = vmatprep.subr.bf16.mxu0 0
        %1604 = vmatpush2.bf16.msra.mxu0 0
        %1605 = vmatprep.subr.bf16.mxu0 0
        %1606 = vmatpush2.bf16.msra.mxu0 0
        %1607 = vmatprep.subr.bf16.mxu0 0
        %1608 = vmatpush2.bf16.msra.mxu0 0
        %1609 = vmatprep.mubr.bf16.mxu0 0
        %1610 = vmatmul.mubr.bf16.gmra.mxu0 %v1575
        %v1611 = vpop.f32.mrf.mxu0
        %v1612 = vadd.f32 %v1569, %v1611
        %v1613 = vpop.f32.mrf.mxu0
        %v1614 = vpop.f32.mrf.mxu0
        %v1615 = vpop.f32.mrf.mxu0
        %1616 = vdwg.mxu0
        %s1617 = scalar_lea.vmem %s206, 56
        %v1618 = vld [vmem:[%s1617] sm:$0xf]
        %v1620 = vsel %vm247, %v1618, 0
        %1622 = vmatprep.subr.bf16.mxu0 0
        %1623 = vmatpush1.bf16.msra.mxu0 0
        %1624 = vmatprep.subr.bf16.mxu0 0
        %1625 = vmatpush1.bf16.msra.mxu0 0
        %1626 = vmatprep.subr.bf16.mxu0 0
        %1627 = vmatpush1.bf16.msra.mxu0 0
        %1628 = vmatprep.subr.bf16.mxu0 0
        %1629 = vmatpush1.bf16.msra.mxu0 0
        %1630 = vmatprep.subr.bf16.mxu0 0
        %1631 = vmatpush1.bf16.msra.mxu0 0
        %1632 = vmatprep.subr.bf16.mxu0 0
        %1633 = vmatpush1.bf16.msra.mxu0 0
        %1634 = vmatprep.subr.bf16.mxu0 0
        %1635 = vmatpush1.bf16.msra.mxu0 0
        %1636 = vmatprep.subr.bf16.mxu0 0
        %1637 = vmatpush1.bf16.msra.mxu0 %v346
        %1638 = vmatprep.subr.bf16.mxu0 0
        %1639 = vmatpush2.bf16.msra.mxu0 0
        %1640 = vmatprep.subr.bf16.mxu0 0
        %1641 = vmatpush2.bf16.msra.mxu0 0
        %1642 = vmatprep.subr.bf16.mxu0 0
        %1643 = vmatpush2.bf16.msra.mxu0 0
        %1644 = vmatprep.subr.bf16.mxu0 0
        %1645 = vmatpush2.bf16.msra.mxu0 0
        %1646 = vmatprep.subr.bf16.mxu0 0
        %1647 = vmatpush2.bf16.msra.mxu0 0
        %1648 = vmatprep.subr.bf16.mxu0 0
        %1649 = vmatpush2.bf16.msra.mxu0 0
        %1650 = vmatprep.subr.bf16.mxu0 0
        %1651 = vmatpush2.bf16.msra.mxu0 0
        %1652 = vmatprep.subr.bf16.mxu0 0
        %1653 = vmatpush2.bf16.msra.mxu0 0
        %1654 = vmatprep.mubr.bf16.mxu0 0
        %1655 = vmatmul.mubr.bf16.gmra.mxu0 %v1620
        %v1656 = vpop.f32.mrf.mxu0
        %v1657 = vadd.f32 0.0, %v1656
        %v1658 = vpop.f32.mrf.mxu0
        %v1659 = vpop.f32.mrf.mxu0
        %v1660 = vpop.f32.mrf.mxu0
        %1661 = vdwg.mxu0
        %v1662 = vadd.f32 %v1612, %v1657
        %v1663 = vld [vmem:[%s1617] sm:$0xf]
        %v1664 = vld [vmem:[%s1617 + $0x4] sm:$0x1]
        %v1667 = vunpack.c.l.b16 %v1663
        %v1668 = vunpack.c.l.b16 %v1664
        %v1669 = vpack.c.b16 %v1668, %v1667
        %v1671 = vshrl.u32 %v1669, 16
        %v1673 = vshll.u32 %v1669, 16
        %v1675 = vrot.slane %v1673, 1
        %v1676 = vor.u32 %v1671, %v1675
        %v1678 = vsel %vm247, %v1676, 0
        %1680 = vmatprep.subr.bf16.mxu0 0
        %1681 = vmatpush1.bf16.msra.mxu0 0
        %1682 = vmatprep.subr.bf16.mxu0 0
        %1683 = vmatpush1.bf16.msra.mxu0 0
        %1684 = vmatprep.subr.bf16.mxu0 0
        %1685 = vmatpush1.bf16.msra.mxu0 0
        %1686 = vmatprep.subr.bf16.mxu0 0
        %1687 = vmatpush1.bf16.msra.mxu0 0
        %1688 = vmatprep.subr.bf16.mxu0 0
        %1689 = vmatpush1.bf16.msra.mxu0 0
        %1690 = vmatprep.subr.bf16.mxu0 0
        %1691 = vmatpush1.bf16.msra.mxu0 0
        %1692 = vmatprep.subr.bf16.mxu0 0
        %1693 = vmatpush1.bf16.msra.mxu0 0
        %1694 = vmatprep.subr.bf16.mxu0 0
        %1695 = vmatpush1.bf16.msra.mxu0 %v410
        %1696 = vmatprep.subr.bf16.mxu0 0
        %1697 = vmatpush2.bf16.msra.mxu0 0
        %1698 = vmatprep.subr.bf16.mxu0 0
        %1699 = vmatpush2.bf16.msra.mxu0 0
        %1700 = vmatprep.subr.bf16.mxu0 0
        %1701 = vmatpush2.bf16.msra.mxu0 0
        %1702 = vmatprep.subr.bf16.mxu0 0
        %1703 = vmatpush2.bf16.msra.mxu0 0
        %1704 = vmatprep.subr.bf16.mxu0 0
        %1705 = vmatpush2.bf16.msra.mxu0 0
        %1706 = vmatprep.subr.bf16.mxu0 0
        %1707 = vmatpush2.bf16.msra.mxu0 0
        %1708 = vmatprep.subr.bf16.mxu0 0
        %1709 = vmatpush2.bf16.msra.mxu0 0
        %1710 = vmatprep.subr.bf16.mxu0 0
        %1711 = vmatpush2.bf16.msra.mxu0 0
        %1712 = vmatprep.mubr.bf16.mxu0 0
        %1713 = vmatmul.mubr.bf16.gmra.mxu0 %v1678
        %v1714 = vpop.f32.mrf.mxu0
        %v1715 = vadd.f32 0.0, %v1714
        %v1716 = vpop.f32.mrf.mxu0
        %v1717 = vpop.f32.mrf.mxu0
        %v1718 = vpop.f32.mrf.mxu0
        %1719 = vdwg.mxu0
        %v1720 = vadd.f32 %v1662, %v1715
        %v1721 = vadd.f32 %v1720, %v460
        %v1722 = vmul.f32 %v1721, 0.2
        %v1723 = vmax.f32 %v1721, %v1722
        %v1724 = vpack.c.bf16 %v1723, %v1723
        %s1725 = scalar_lea.vmem %s201, 24 [#allocation2]
        %1726 = vst [vmem:[%s1725] sm:$0xf] %v1724
        %v1727 = vld [vmem:[%s1617] sm:$0xf]
        %v1728 = vld [vmem:[%s1617 + $0x4] sm:$0x1]
        %v1731 = vunpack.c.l.b16 %v1727
        %v1732 = vunpack.c.l.b16 %v1728
        %v1733 = vpack.c.b16 %v1732, %v1731
        %v1735 = vshrl.u32 %v1733, 16
        %v1737 = vshll.u32 %v1733, 16
        %v1739 = vrot.slane %v1737, 1
        %v1740 = vor.u32 %v1735, %v1739
        %v1742 = vsel %vm247, %v1740, 0
        %1744 = vmatprep.subr.bf16.mxu0 0
        %1745 = vmatpush1.bf16.msra.mxu0 0
        %1746 = vmatprep.subr.bf16.mxu0 0
        %1747 = vmatpush1.bf16.msra.mxu0 0
        %1748 = vmatprep.subr.bf16.mxu0 0
        %1749 = vmatpush1.bf16.msra.mxu0 0
        %1750 = vmatprep.subr.bf16.mxu0 0
        %1751 = vmatpush1.bf16.msra.mxu0 0
        %1752 = vmatprep.subr.bf16.mxu0 0
        %1753 = vmatpush1.bf16.msra.mxu0 0
        %1754 = vmatprep.subr.bf16.mxu0 0
        %1755 = vmatpush1.bf16.msra.mxu0 0
        %1756 = vmatprep.subr.bf16.mxu0 0
        %1757 = vmatpush1.bf16.msra.mxu0 0
        %1758 = vmatprep.subr.bf16.mxu0 0
        %1759 = vmatpush1.bf16.msra.mxu0 %v245
        %1760 = vmatprep.subr.bf16.mxu0 0
        %1761 = vmatpush2.bf16.msra.mxu0 0
        %1762 = vmatprep.subr.bf16.mxu0 0
        %1763 = vmatpush2.bf16.msra.mxu0 0
        %1764 = vmatprep.subr.bf16.mxu0 0
        %1765 = vmatpush2.bf16.msra.mxu0 0
        %1766 = vmatprep.subr.bf16.mxu0 0
        %1767 = vmatpush2.bf16.msra.mxu0 0
        %1768 = vmatprep.subr.bf16.mxu0 0
        %1769 = vmatpush2.bf16.msra.mxu0 0
        %1770 = vmatprep.subr.bf16.mxu0 0
        %1771 = vmatpush2.bf16.msra.mxu0 0
        %1772 = vmatprep.subr.bf16.mxu0 0
        %1773 = vmatpush2.bf16.msra.mxu0 0
        %1774 = vmatprep.subr.bf16.mxu0 0
        %1775 = vmatpush2.bf16.msra.mxu0 0
        %1776 = vmatprep.mubr.bf16.mxu0 0
        %1777 = vmatmul.mubr.bf16.gmra.mxu0 %v1742
        %v1778 = vpop.f32.mrf.mxu0
        %v1779 = vadd.f32 0.0, %v1778
        %v1780 = vpop.f32.mrf.mxu0
        %v1781 = vpop.f32.mrf.mxu0
        %v1782 = vpop.f32.mrf.mxu0
        %1783 = vdwg.mxu0
        %v1785 = vsel %vm247, %v1727, 0
        %1787 = vmatprep.subr.bf16.mxu0 0
        %1788 = vmatpush1.bf16.msra.mxu0 0
        %1789 = vmatprep.subr.bf16.mxu0 0
        %1790 = vmatpush1.bf16.msra.mxu0 0
        %1791 = vmatprep.subr.bf16.mxu0 0
        %1792 = vmatpush1.bf16.msra.mxu0 0
        %1793 = vmatprep.subr.bf16.mxu0 0
        %1794 = vmatpush1.bf16.msra.mxu0 0
        %1795 = vmatprep.subr.bf16.mxu0 0
        %1796 = vmatpush1.bf16.msra.mxu0 0
        %1797 = vmatprep.subr.bf16.mxu0 0
        %1798 = vmatpush1.bf16.msra.mxu0 0
        %1799 = vmatprep.subr.bf16.mxu0 0
        %1800 = vmatpush1.bf16.msra.mxu0 0
        %1801 = vmatprep.subr.bf16.mxu0 0
        %1802 = vmatpush1.bf16.msra.mxu0 %v295
        %1803 = vmatprep.subr.bf16.mxu0 0
        %1804 = vmatpush2.bf16.msra.mxu0 0
        %1805 = vmatprep.subr.bf16.mxu0 0
        %1806 = vmatpush2.bf16.msra.mxu0 0
        %1807 = vmatprep.subr.bf16.mxu0 0
        %1808 = vmatpush2.bf16.msra.mxu0 0
        %1809 = vmatprep.subr.bf16.mxu0 0
        %1810 = vmatpush2.bf16.msra.mxu0 0
        %1811 = vmatprep.subr.bf16.mxu0 0
        %1812 = vmatpush2.bf16.msra.mxu0 0
        %1813 = vmatprep.subr.bf16.mxu0 0
        %1814 = vmatpush2.bf16.msra.mxu0 0
        %1815 = vmatprep.subr.bf16.mxu0 0
        %1816 = vmatpush2.bf16.msra.mxu0 0
        %1817 = vmatprep.subr.bf16.mxu0 0
        %1818 = vmatpush2.bf16.msra.mxu0 0
        %1819 = vmatprep.mubr.bf16.mxu0 0
        %1820 = vmatmul.mubr.bf16.gmra.mxu0 %v1785
        %v1821 = vpop.f32.mrf.mxu0
        %v1822 = vadd.f32 %v1779, %v1821
        %v1823 = vpop.f32.mrf.mxu0
        %v1824 = vpop.f32.mrf.mxu0
        %v1825 = vpop.f32.mrf.mxu0
        %1826 = vdwg.mxu0
        %s1827 = scalar_lea.vmem %s206, 64
        %v1828 = vld [vmem:[%s1827] sm:$0xf]
        %v1830 = vsel %vm247, %v1828, 0
        %1832 = vmatprep.subr.bf16.mxu0 0
        %1833 = vmatpush1.bf16.msra.mxu0 0
        %1834 = vmatprep.subr.bf16.mxu0 0
        %1835 = vmatpush1.bf16.msra.mxu0 0
        %1836 = vmatprep.subr.bf16.mxu0 0
        %1837 = vmatpush1.bf16.msra.mxu0 0
        %1838 = vmatprep.subr.bf16.mxu0 0
        %1839 = vmatpush1.bf16.msra.mxu0 0
        %1840 = vmatprep.subr.bf16.mxu0 0
        %1841 = vmatpush1.bf16.msra.mxu0 0
        %1842 = vmatprep.subr.bf16.mxu0 0
        %1843 = vmatpush1.bf16.msra.mxu0 0
        %1844 = vmatprep.subr.bf16.mxu0 0
        %1845 = vmatpush1.bf16.msra.mxu0 0
        %1846 = vmatprep.subr.bf16.mxu0 0
        %1847 = vmatpush1.bf16.msra.mxu0 %v346
        %1848 = vmatprep.subr.bf16.mxu0 0
        %1849 = vmatpush2.bf16.msra.mxu0 0
        %1850 = vmatprep.subr.bf16.mxu0 0
        %1851 = vmatpush2.bf16.msra.mxu0 0
        %1852 = vmatprep.subr.bf16.mxu0 0
        %1853 = vmatpush2.bf16.msra.mxu0 0
        %1854 = vmatprep.subr.bf16.mxu0 0
        %1855 = vmatpush2.bf16.msra.mxu0 0
        %1856 = vmatprep.subr.bf16.mxu0 0
        %1857 = vmatpush2.bf16.msra.mxu0 0
        %1858 = vmatprep.subr.bf16.mxu0 0
        %1859 = vmatpush2.bf16.msra.mxu0 0
        %1860 = vmatprep.subr.bf16.mxu0 0
        %1861 = vmatpush2.bf16.msra.mxu0 0
        %1862 = vmatprep.subr.bf16.mxu0 0
        %1863 = vmatpush2.bf16.msra.mxu0 0
        %1864 = vmatprep.mubr.bf16.mxu0 0
        %1865 = vmatmul.mubr.bf16.gmra.mxu0 %v1830
        %v1866 = vpop.f32.mrf.mxu0
        %v1867 = vadd.f32 0.0, %v1866
        %v1868 = vpop.f32.mrf.mxu0
        %v1869 = vpop.f32.mrf.mxu0
        %v1870 = vpop.f32.mrf.mxu0
        %1871 = vdwg.mxu0
        %v1872 = vadd.f32 %v1822, %v1867
        %v1873 = vld [vmem:[%s1827] sm:$0xf]
        %v1874 = vld [vmem:[%s1827 + $0x4] sm:$0x1]
        %v1877 = vunpack.c.l.b16 %v1873
        %v1878 = vunpack.c.l.b16 %v1874
        %v1879 = vpack.c.b16 %v1878, %v1877
        %v1881 = vshrl.u32 %v1879, 16
        %v1883 = vshll.u32 %v1879, 16
        %v1885 = vrot.slane %v1883, 1
        %v1886 = vor.u32 %v1881, %v1885
        %v1888 = vsel %vm247, %v1886, 0
        %1890 = vmatprep.subr.bf16.mxu0 0
        %1891 = vmatpush1.bf16.msra.mxu0 0
        %1892 = vmatprep.subr.bf16.mxu0 0
        %1893 = vmatpush1.bf16.msra.mxu0 0
        %1894 = vmatprep.subr.bf16.mxu0 0
        %1895 = vmatpush1.bf16.msra.mxu0 0
        %1896 = vmatprep.subr.bf16.mxu0 0
        %1897 = vmatpush1.bf16.msra.mxu0 0
        %1898 = vmatprep.subr.bf16.mxu0 0
        %1899 = vmatpush1.bf16.msra.mxu0 0
        %1900 = vmatprep.subr.bf16.mxu0 0
        %1901 = vmatpush1.bf16.msra.mxu0 0
        %1902 = vmatprep.subr.bf16.mxu0 0
        %1903 = vmatpush1.bf16.msra.mxu0 0
        %1904 = vmatprep.subr.bf16.mxu0 0
        %1905 = vmatpush1.bf16.msra.mxu0 %v410
        %1906 = vmatprep.subr.bf16.mxu0 0
        %1907 = vmatpush2.bf16.msra.mxu0 0
        %1908 = vmatprep.subr.bf16.mxu0 0
        %1909 = vmatpush2.bf16.msra.mxu0 0
        %1910 = vmatprep.subr.bf16.mxu0 0
        %1911 = vmatpush2.bf16.msra.mxu0 0
        %1912 = vmatprep.subr.bf16.mxu0 0
        %1913 = vmatpush2.bf16.msra.mxu0 0
        %1914 = vmatprep.subr.bf16.mxu0 0
        %1915 = vmatpush2.bf16.msra.mxu0 0
        %1916 = vmatprep.subr.bf16.mxu0 0
        %1917 = vmatpush2.bf16.msra.mxu0 0
        %1918 = vmatprep.subr.bf16.mxu0 0
        %1919 = vmatpush2.bf16.msra.mxu0 0
        %1920 = vmatprep.subr.bf16.mxu0 0
        %1921 = vmatpush2.bf16.msra.mxu0 0
        %1922 = vmatprep.mubr.bf16.mxu0 0
        %1923 = vmatmul.mubr.bf16.gmra.mxu0 %v1888
        %v1924 = vpop.f32.mrf.mxu0
        %v1925 = vadd.f32 0.0, %v1924
        %v1926 = vpop.f32.mrf.mxu0
        %v1927 = vpop.f32.mrf.mxu0
        %v1928 = vpop.f32.mrf.mxu0
        %1929 = vdwg.mxu0
        %v1930 = vadd.f32 %v1872, %v1925
        %v1931 = vadd.f32 %v1930, %v460
        %v1932 = vmul.f32 %v1931, 0.2
        %v1933 = vmax.f32 %v1931, %v1932
        %v1934 = vpack.c.bf16 %v1933, %v1933
        %s1935 = scalar_lea.vmem %s201, 28 [#allocation2]
        %1936 = vst [vmem:[%s1935] sm:$0xf] %v1934
        %s1937 = sand.u32 %s117, 1
        %s1938 = scalar_lea.sflag [#allocation3], %s1937
        %s1939 = sand.u32 %s117, 1
        %s1940 = smul.addr %s1939, 32
        %s1941 = scalar_lea.vmem [#allocation2], %s1940
        // Predicated region
        $region33: #{tpu_custom_call.1} parent=31 // pred_check
          %p1942 = pneg %p127
        $region34: #{tpu_custom_call.1} parent=31 // pred_check_branch
          %1944 = sbr.rel (%p1942) target = $region36
        $region35: #{tpu_custom_call.1} parent=31 // pred_region
          %s1946 = ssub.s32 512, 512
          %1947 = vsyncadd %s1938, %s1946
          %s1948 = smul.addr %s21, 8
          %s1949 = sadd.s32 %s22, %s1948
          %s1950 = smul.addr %s1949, 64
          %s1951 = scalar_lea.hbm %s3, %s1950
          %s1952 = sshll.u32 %s1941, 4
          %s1953 = int_to_ptr.vmem [resolvable:$true] %s1952
          %1958 = dma.vmem_to_hbm [thread:$0]  %s1953, 512, %s1951, %s1938, 64, 64, 4
        $region36: #{tpu_custom_call.1} parent=31 // pred_fallthru
          _
      $region32: #{tpu_custom_call.1} parent=5 // pred_fallthru
        _
      %p1959 = scmp.le.s32.totalorder 2, %s12
      // Predicated region
      $region37: #{tpu_custom_call.1} parent=5 // pred_check
        %p1960 = pneg %p1959
      $region38: #{tpu_custom_call.1} parent=5 // pred_check_branch
        %1962 = sbr.rel (%p1960) target = $region40
      $region39: #{tpu_custom_call.1} parent=5 // pred_region
        %s1963 = ssub.s32 %s12, 2
        // Predicated region
        $region41: #{tpu_custom_call.1} parent=39 // pred_check
          %p1964 = pneg %p133
        $region42: #{tpu_custom_call.1} parent=39 // pred_check_branch
          %1966 = sbr.rel (%p1964) target = $region44
        $region43: #{tpu_custom_call.1} parent=39 // pred_region
          %s1967 = sand.u32 %s118, 1
          %s1968 = scalar_lea.sflag [#allocation3], %s1967
          %s1969 = sand.u32 %s118, 1
          %s1970 = smul.addr %s1969, 32
          %s1971 = scalar_lea.vmem [#allocation2], %s1970
          %1972 = dma.done %s1968, 512
        $region44: #{tpu_custom_call.1} parent=39 // pred_fallthru
          _
      $region40: #{tpu_custom_call.1} parent=5 // pred_fallthru
        _
    $region6: #{tpu_custom_call.1} parent=1 // loop_footer
      %s16 = sadd.s32 1, %s12
    $region7: #{tpu_custom_call.1} parent=1 // loop_footer_branch
      %11 = sbr.rel target = $region3
    $region8: #{tpu_custom_call.1} parent=1 // loop_exit
      _
    %1973 = vsyncpa [#allocation3], 1
    %s1974 = scalar_lea.sflag [#allocation3], 1
    %1975 = vsyncpa %s1974, 1

// kernel: tpu_custom_call.1
$region0: #{tpu_custom_call.1}
  #allocation0 [shape = 'u32[]', space=smem, size = 0x4, offset = 0x4, fixed_abs, tag = 'smem constant byte address 0x4 - core index']
  #allocation1 [shape = 'u32[144,128]{1,0:T(1,128)}', space=vmem, size = 0x12000, scoped, tag = 'internal scratch']
  %s0 = inlined_call_operand.vmem [shape: bf16[2,9,9,16], index: 0, kind: input, shape index: {}]
  %s1 = inlined_call_operand.vmem [shape: bf16[4,16,128], index: 1, kind: input, shape index: {}]
  %s2 = inlined_call_operand.vmem [shape: f32[1,128], index: 2, kind: input, shape index: {}]
  %s3 = inlined_call_operand.hbm [shape: bf16[2,8,8,128], index: 3, kind: output, shape index: {}]
  %s4 = sld [smem:[#allocation0]]
  $region45: #{tpu_custom_call.1} parent=0
    _
  %s6 = ssub.s32 1, %s4
  %s7 = scalar_select 0, %s6, %s4
  $region1: #{tpu_custom_call.1} parent=0
    #allocation2 [shape = 'u8[32768]{0}', space=vmem, size = 0x8000, scoped, tag = 'output window, operand 0']
    #allocation3 [shape = 's32[2]{0}', space=sflag, size = 0x8, scoped, tag = 'scoped memory for tpu_custom_call.1']
    %8 = vsyncpa [#allocation3], 0
    %s9 = scalar_lea.sflag [#allocation3], 1
    %10 = vsyncpa %s9, 0
    loop: start=0, step=1, limit=4
    $region2: #{tpu_custom_call.1} parent=1 // loop_pre_header
      _
    $region3: #{tpu_custom_call.1} parent=1 // loop_header
      %s12 = sphi 0, %s16
      %p13 = scmp.ge.s32.totalorder %s12, 4
      %s19 = sphi 0, %s31
      %s20 = sphi 0, %s27
      %s21 = sphi 0, %s19
      %s22 = sphi 0, %s20
      %s23 = sphi 0, %s21
      %s24 = sphi 0, %s22
      %s34 = sphi 0, %s36
      %s37 = sphi 0, %s34
      %s38 = sphi 0, %s37
      %s54 = sphi 0, %s38
      %s60 = sphi 0, %s62
      %s63 = sphi 0, %s60
      %s64 = sphi 0, %s63
      %s80 = sphi 0, %s64
      %s86 = sphi 0, %s88
      %s89 = sphi 0, %s86
      %s90 = sphi 0, %s89
      %s106 = sphi 0, %s90
      %s114 = sphi 0, %s116
      %s117 = sphi 0, %s114
      %s118 = sphi 0, %s117
      %s134 = sphi 0, %s118
    $region4: #{tpu_custom_call.1} parent=1 // loop_header_branch
      %15 = sbr.rel (%p13) target = $region8
    $region5: #{tpu_custom_call.1} parent=1 // loop_body
      %s17 = ssub.s32 %s12, 1
      %s18 = ssub.s32 %s12, 2
      %s25 = sadd.s32 1, %s20
      %p26 = scmp.ge.s32.totalorder %s25, 1
      %s27 = scalar_select %p26, 0, %s25
      %s28 = sadd.s32 1, %s19
      %s29 = scalar_select %p26, %s28, %s19
      %p30 = scmp.ge.s32.totalorder %s29, 2
      %s31 = scalar_select %p30, 0, %s29
      %s32 = ssub.s32 %s19, %s31
      %p33 = scmp.eq.s32.totalorder %s32, 0
      %s35 = sadd.s32 %s34, 1
      %s36 = scalar_select %p33, %s34, %s35
      %p39 = pneg %p33
      %p40 = scmp.eq.s32.totalorder %s12, 1
      %p41 = por %p39, %p40
      %p42 = scmp.ne.s32.totalorder %s34, %s37
      %p43 = scmp.eq.s32.totalorder %s12, 0
      %p44 = por %p42, %p43
      %p45 = scmp.ne.s32.totalorder %s34, %s37
      %p46 = scmp.eq.s32.totalorder %s17, 1
      %p47 = por %p45, %p46
      %p48 = scmp.ne.s32.totalorder %s37, %s38
      %p49 = scmp.eq.s32.totalorder %s17, 0
      %p50 = por %p48, %p49
      %p51 = scmp.ne.s32.totalorder %s37, %s38
      %p52 = scmp.eq.s32.totalorder %s18, 1
      %p53 = por %p51, %p52
      %p55 = scmp.ne.s32.totalorder %s38, %s54
      %p56 = scmp.eq.s32.totalorder %s18, 0
      %p57 = por %p55, %p56
      %s58 = ssub.s32 %s20, %s27
      %p59 = scmp.eq.s32.totalorder %s58, 0
      %s61 = sadd.s32 %s60, 1
      %s62 = scalar_select %p59, %s60, %s61
      %p65 = pneg %p59
      %p66 = scmp.eq.s32.totalorder %s12, 1
      %p67 = por %p65, %p66
      %p68 = scmp.ne.s32.totalorder %s60, %s63
      %p69 = scmp.eq.s32.totalorder %s12, 0
      %p70 = por %p68, %p69
      %p71 = scmp.ne.s32.totalorder %s60, %s63
      %p72 = scmp.eq.s32.totalorder %s17, 1
      %p73 = por %p71, %p72
      %p74 = scmp.ne.s32.totalorder %s63, %s64
      %p75 = scmp.eq.s32.totalorder %s17, 0
      %p76 = por %p74, %p75
      %p77 = scmp.ne.s32.totalorder %s63, %s64
      %p78 = scmp.eq.s32.totalorder %s18, 1
      %p79 = por %p77, %p78
      %p81 = scmp.ne.s32.totalorder %s64, %s80
      %p82 = scmp.eq.s32.totalorder %s18, 0
      %p83 = por %p81, %p82
      %s84 = ssub.s32 %s20, %s27
      %p85 = scmp.eq.s32.totalorder %s84, 0
      %s87 = sadd.s32 %s86, 1
      %s88 = scalar_select %p85, %s86, %s87
      %p91 = pneg %p85
      %p92 = scmp.eq.s32.totalorder %s12, 1
      %p93 = por %p91, %p92
      %p94 = scmp.ne.s32.totalorder %s86, %s89
      %p95 = scmp.eq.s32.totalorder %s12, 0
      %p96 = por %p94, %p95
      %p97 = scmp.ne.s32.totalorder %s86, %s89
      %p98 = scmp.eq.s32.totalorder %s17, 1
      %p99 = por %p97, %p98
      %p100 = scmp.ne.s32.totalorder %s89, %s90
      %p101 = scmp.eq.s32.totalorder %s17, 0
      %p102 = por %p100, %p101
      %p103 = scmp.ne.s32.totalorder %s89, %s90
      %p104 = scmp.eq.s32.totalorder %s18, 1
      %p105 = por %p103, %p104
      %p107 = scmp.ne.s32.totalorder %s90, %s106
      %p108 = scmp.eq.s32.totalorder %s18, 0
      %p109 = por %p107, %p108
      %s110 = ssub.s32 %s19, %s31
      %s111 = ssub.s32 %s20, %s27
      %s112 = sor.u32 %s110, %s111
      %p113 = scmp.eq.s32.totalorder %s112, 0
      %s115 = sadd.s32 %s114, 1
      %s116 = scalar_select %p113, %s114, %s115
      %p119 = pneg %p113
      %p120 = scmp.eq.s32.totalorder %s12, 1
      %p121 = por %p119, %p120
      %p122 = scmp.ne.s32.totalorder %s114, %s117
      %p123 = scmp.eq.s32.totalorder %s12, 0
      %p124 = por %p122, %p123
      %p125 = scmp.ne.s32.totalorder %s114, %s117
      %p126 = scmp.eq.s32.totalorder %s17, 1
      %p127 = por %p125, %p126
      %p128 = scmp.ne.s32.totalorder %s117, %s118
      %p129 = scmp.eq.s32.totalorder %s17, 0
      %p130 = por %p128, %p129
      %p131 = scmp.ne.s32.totalorder %s117, %s118
      %p132 = scmp.eq.s32.totalorder %s18, 1
      %p133 = por %p131, %p132
      %p135 = scmp.ne.s32.totalorder %s118, %s134
      %p136 = scmp.eq.s32.totalorder %s18, 0
      %p137 = por %p135, %p136
      %p138 = scmp.le.s32.totalorder 1, %s12
      %p139 = scmp.lt.s32.totalorder %s12, 3
      %p140 = pnand %p138, %p139
      %p141 = pneg %p140
      // Predicated region
      $region9: #{tpu_custom_call.1} parent=5 // pred_check
        _
      $region10: #{tpu_custom_call.1} parent=5 // pred_check_branch
        %143 = sbr.rel (%p140) target = $region12
      $region11: #{tpu_custom_call.1} parent=5 // pred_region
        %s144 = ssub.s32 %s12, 1
        // Predicated region
        $region13: #{tpu_custom_call.1} parent=11 // pred_check
          %p145 = pneg %p76
        $region14: #{tpu_custom_call.1} parent=11 // pred_check_branch
          %147 = sbr.rel (%p145) target = $region16
        $region15: #{tpu_custom_call.1} parent=11 // pred_region
          %p148 = scmp.lt.s32.totalorder %s22, 0
          %s149 = scalar_select %p148, %s22, 0
          %s150 = smul.addr %s149, 4
          %s151 = scalar_lea.vmem %s1, %s150
        $region16: #{tpu_custom_call.1} parent=11 // pred_fallthru
          _
        // Predicated region
        $region17: #{tpu_custom_call.1} parent=11 // pred_check
          %p152 = pneg %p102
        $region18: #{tpu_custom_call.1} parent=11 // pred_check_branch
          %154 = sbr.rel (%p152) target = $region20
        $region19: #{tpu_custom_call.1} parent=11 // pred_region
          %p155 = scmp.lt.s32.totalorder %s22, 0
          %s156 = scalar_select %p155, %s22, 0
          %s157 = scalar_lea.vmem %s2, %s156
        $region20: #{tpu_custom_call.1} parent=11 // pred_fallthru
          _
      $region12: #{tpu_custom_call.1} parent=5 // pred_fallthru
        _
      %p158 = scmp.lt.s32.totalorder %s12, 2
      // Predicated region
      $region21: #{tpu_custom_call.1} parent=5 // pred_check
        %p159 = pneg %p158
      $region22: #{tpu_custom_call.1} parent=5 // pred_check_branch
        %161 = sbr.rel (%p159) target = $region24
      $region23: #{tpu_custom_call.1} parent=5 // pred_region
        // Predicated region
        $region25: #{tpu_custom_call.1} parent=23 // pred_check
          %p162 = pneg %p44
        $region26: #{tpu_custom_call.1} parent=23 // pred_check_branch
          %164 = sbr.rel (%p162) target = $region28
        $region27: #{tpu_custom_call.1} parent=23 // pred_region
          %p165 = scmp.lt.s32.totalorder %s19, 1
          %s166 = scalar_select %p165, %s19, 1
          %s167 = smul.addr %s166, 18
          %s168 = smul.addr %s167, 4
          %s169 = scalar_lea.vmem %s0, %s168
        $region28: #{tpu_custom_call.1} parent=23 // pred_fallthru
          _
      $region24: #{tpu_custom_call.1} parent=5 // pred_fallthru
        _
      %p170 = scmp.le.s32.totalorder 1, %s12
      %p171 = scmp.lt.s32.totalorder %s12, 3
      %p172 = pnand %p170, %p171
      %p173 = pneg %p172
      // Predicated region
      $region29: #{tpu_custom_call.1} parent=5 // pred_check
        _
      $region30: #{tpu_custom_call.1} parent=5 // pred_check_branch
        %175 = sbr.rel (%p172) target = $region32
      $region31: #{tpu_custom_call.1} parent=5 // pred_region
        %s176 = ssub.s32 %s12, 1
        %p177 = scmp.lt.s32.totalorder %s21, 1
        %s178 = scalar_select %p177, %s21, 1
        %s179 = smul.addr %s178, 18
        %s180 = smul.addr %s179, 4
        %s181 = scalar_lea.vmem %s0, %s180
        %p182 = pneg %p50
        %p183 = pneg %p47
        %p184 = scmp.lt.s32.totalorder %s22, 0
        %s185 = scalar_select %p184, %s22, 0
        %s186 = smul.addr %s185, 4
        %s187 = scalar_lea.vmem %s1, %s186
        %p188 = pneg %p76
        %p189 = pneg %p73
        %p190 = scmp.lt.s32.totalorder %s22, 0
        %s191 = scalar_select %p190, %s22, 0
        %s192 = scalar_lea.vmem %s2, %s191
        %p193 = pneg %p102
        %p194 = pneg %p99
        %p195 = pneg %p130
        %p196 = pneg %p127
        %s197 = sand.u32 %s117, 1
        %s198 = scalar_lea.sflag [#allocation3], %s197
        %s199 = sand.u32 %s117, 1
        %s200 = smul.addr %s199, 32
        %s201 = scalar_lea.vmem [#allocation2], %s200
        %p202 = scmp.lt.s32.totalorder %s21, 1
        %s203 = scalar_select %p202, %s21, 1
        %s204 = smul.addr %s203, 18
        %s205 = smul.addr %s204, 4
        %s206 = scalar_lea.vmem %s0, %s205
        %p207 = scmp.lt.s32.totalorder %s22, 0
        %s208 = scalar_select %p207, %s22, 0
        %s209 = smul.addr %s208, 4
        %s210 = scalar_lea.vmem %s1, %s209
        %p211 = scmp.lt.s32.totalorder %s22, 0
        %s212 = scalar_select %p211, %s22, 0
        %s213 = scalar_lea.vmem %s2, %s212
        %v215 = vld [vmem:[%s213] sm:$0x1]
        %v216 = vld [vmem:[%s210] sm:$0xf]
        %v217 = vld [vmem:[%s210 + $0x4] sm:$0xf]
        %s218 = scalar_lea.vmem %s210, 8
        %v219 = vld [vmem:[%s218] sm:$0xf]
        %v220 = vld [vmem:[%s218 + $0x4] sm:$0xf]
        %s221 = scalar_lea.vmem %s210, 16
        %v222 = vld [vmem:[%s221] sm:$0xf]
        %v223 = vld [vmem:[%s221 + $0x4] sm:$0xf]
        %s224 = scalar_lea.vmem %s210, 24
        %v225 = vld [vmem:[%s224] sm:$0xf]
        %v226 = vld [vmem:[%s224 + $0x4] sm:$0xf]
        %v227 = vld [vmem:[%s206] sm:$0xf]
        %v228 = vld [vmem:[%s206 + $0x4] sm:$0x1]
        %v231 = vunpack.c.l.b16 %v227
        %v232 = vunpack.c.l.b16 %v228
        %v233 = vpack.c.b16 %v232, %v231
        %v235 = vshrl.u32 %v233, 16
        %v237 = vshll.u32 %v233, 16
        %v239 = vrot.slane %v237, 1
        %v240 = vor.u32 %v235, %v239
        %v243 = vunpack.c.l.b16 %v219
        %v244 = vunpack.c.l.b16 %v220
        %v245 = vpack.c.b16 %v244, %v243
        %vm247 = vcmask 130048
        %v249 = vsel %vm247, %v240, 0
        %251 = vmatprep.subr.bf16.mxu0 0
        %252 = vmatpush1.bf16.msra.mxu0 0
        %253 = vmatprep.subr.bf16.mxu0 0
        %254 = vmatpush1.bf16.msra.mxu0 0
        %255 = vmatprep.subr.bf16.mxu0 0
        %256 = vmatpush1.bf16.msra.mxu0 0
        %257 = vmatprep.subr.bf16.mxu0 0
        %258 = vmatpush1.bf16.msra.mxu0 0
        %259 = vmatprep.subr.bf16.mxu0 0
        %260 = vmatpush1.bf16.msra.mxu0 0
        %261 = vmatprep.subr.bf16.mxu0 0
        %262 = vmatpush1.bf16.msra.mxu0 0
        %263 = vmatprep.subr.bf16.mxu0 0
        %264 = vmatpush1.bf16.msra.mxu0 0
        %265 = vmatprep.subr.bf16.mxu0 0
        %266 = vmatpush1.bf16.msra.mxu0 %v245
        %267 = vmatprep.subr.bf16.mxu0 0
        %268 = vmatpush2.bf16.msra.mxu0 0
        %269 = vmatprep.subr.bf16.mxu0 0
        %270 = vmatpush2.bf16.msra.mxu0 0
        %271 = vmatprep.subr.bf16.mxu0 0
        %272 = vmatpush2.bf16.msra.mxu0 0
        %273 = vmatprep.subr.bf16.mxu0 0
        %274 = vmatpush2.bf16.msra.mxu0 0
        %275 = vmatprep.subr.bf16.mxu0 0
        %276 = vmatpush2.bf16.msra.mxu0 0
        %277 = vmatprep.subr.bf16.mxu0 0
        %278 = vmatpush2.bf16.msra.mxu0 0
        %279 = vmatprep.subr.bf16.mxu0 0
        %280 = vmatpush2.bf16.msra.mxu0 0
        %281 = vmatprep.subr.bf16.mxu0 0
        %282 = vmatpush2.bf16.msra.mxu0 0
        %283 = vmatprep.mubr.bf16.mxu0 0
        %284 = vmatmul.mubr.bf16.gmra.mxu0 %v249
        %v285 = vpop.f32.mrf.mxu0
        %v286 = vadd.f32 0.0, %v285
        %v287 = vpop.f32.mrf.mxu0
        %v288 = vpop.f32.mrf.mxu0
        %v289 = vpop.f32.mrf.mxu0
        %290 = vdwg.mxu0
        %v293 = vunpack.c.l.b16 %v216
        %v294 = vunpack.c.l.b16 %v217
        %v295 = vpack.c.b16 %v294, %v293
        %v298 = vsel %vm247, %v227, 0
        %300 = vmatprep.subr.bf16.mxu0 0
        %301 = vmatpush1.bf16.msra.mxu0 0
        %302 = vmatprep.subr.bf16.mxu0 0
        %303 = vmatpush1.bf16.msra.mxu0 0
        %304 = vmatprep.subr.bf16.mxu0 0
        %305 = vmatpush1.bf16.msra.mxu0 0
        %306 = vmatprep.subr.bf16.mxu0 0
        %307 = vmatpush1.bf16.msra.mxu0 0
        %308 = vmatprep.subr.bf16.mxu0 0
        %309 = vmatpush1.bf16.msra.mxu0 0
        %310 = vmatprep.subr.bf16.mxu0 0
        %311 = vmatpush1.bf16.msra.mxu0 0
        %312 = vmatprep.subr.bf16.mxu0 0
        %313 = vmatpush1.bf16.msra.mxu0 0
        %314 = vmatprep.subr.bf16.mxu0 0
        %315 = vmatpush1.bf16.msra.mxu0 %v295
        %316 = vmatprep.subr.bf16.mxu0 0
        %317 = vmatpush2.bf16.msra.mxu0 0
        %318 = vmatprep.subr.bf16.mxu0 0
        %319 = vmatpush2.bf16.msra.mxu0 0
        %320 = vmatprep.subr.bf16.mxu0 0
        %321 = vmatpush2.bf16.msra.mxu0 0
        %322 = vmatprep.subr.bf16.mxu0 0
        %323 = vmatpush2.bf16.msra.mxu0 0
        %324 = vmatprep.subr.bf16.mxu0 0
        %325 = vmatpush2.bf16.msra.mxu0 0
        %326 = vmatprep.subr.bf16.mxu0 0
        %327 = vmatpush2.bf16.msra.mxu0 0
        %328 = vmatprep.subr.bf16.mxu0 0
        %329 = vmatpush2.bf16.msra.mxu0 0
        %330 = vmatprep.subr.bf16.mxu0 0
        %331 = vmatpush2.bf16.msra.mxu0 0
        %332 = vmatprep.mubr.bf16.mxu0 0
        %333 = vmatmul.mubr.bf16.gmra.mxu0 %v298
        %v334 = vpop.f32.mrf.mxu0
        %v335 = vadd.f32 %v286, %v334
        %v336 = vpop.f32.mrf.mxu0
        %v337 = vpop.f32.mrf.mxu0
        %v338 = vpop.f32.mrf.mxu0
        %339 = vdwg.mxu0
        %s340 = scalar_lea.vmem %s206, 8
        %v341 = vld [vmem:[%s340] sm:$0xf]
        %v344 = vunpack.c.l.b16 %v222
        %v345 = vunpack.c.l.b16 %v223
        %v346 = vpack.c.b16 %v345, %v344
        %v349 = vsel %vm247, %v341, 0
        %351 = vmatprep.subr.bf16.mxu0 0
        %352 = vmatpush1.bf16.msra.mxu0 0
        %353 = vmatprep.subr.bf16.mxu0 0
        %354 = vmatpush1.bf16.msra.mxu0 0
        %355 = vmatprep.subr.bf16.mxu0 0
        %356 = vmatpush1.bf16.msra.mxu0 0
        %357 = vmatprep.subr.bf16.mxu0 0
        %358 = vmatpush1.bf16.msra.mxu0 0
        %359 = vmatprep.subr.bf16.mxu0 0
        %360 = vmatpush1.bf16.msra.mxu0 0
        %361 = vmatprep.subr.bf16.mxu0 0
        %362 = vmatpush1.bf16.msra.mxu0 0
        %363 = vmatprep.subr.bf16.mxu0 0
        %364 = vmatpush1.bf16.msra.mxu0 0
        %365 = vmatprep.subr.bf16.mxu0 0
        %366 = vmatpush1.bf16.msra.mxu0 %v346
        %367 = vmatprep.subr.bf16.mxu0 0
        %368 = vmatpush2.bf16.msra.mxu0 0
        %369 = vmatprep.subr.bf16.mxu0 0
        %370 = vmatpush2.bf16.msra.mxu0 0
        %371 = vmatprep.subr.bf16.mxu0 0
        %372 = vmatpush2.bf16.msra.mxu0 0
        %373 = vmatprep.subr.bf16.mxu0 0
        %374 = vmatpush2.bf16.msra.mxu0 0
        %375 = vmatprep.subr.bf16.mxu0 0
        %376 = vmatpush2.bf16.msra.mxu0 0
        %377 = vmatprep.subr.bf16.mxu0 0
        %378 = vmatpush2.bf16.msra.mxu0 0
        %379 = vmatprep.subr.bf16.mxu0 0
        %380 = vmatpush2.bf16.msra.mxu0 0
        %381 = vmatprep.subr.bf16.mxu0 0
        %382 = vmatpush2.bf16.msra.mxu0 0
        %383 = vmatprep.mubr.bf16.mxu0 0
        %384 = vmatmul.mubr.bf16.gmra.mxu0 %v349
        %v385 = vpop.f32.mrf.mxu0
        %v386 = vadd.f32 0.0, %v385
        %v387 = vpop.f32.mrf.mxu0
        %v388 = vpop.f32.mrf.mxu0
        %v389 = vpop.f32.mrf.mxu0
        %390 = vdwg.mxu0
        %v391 = vadd.f32 %v335, %v386
        %v392 = vld [vmem:[%s340] sm:$0xf]
        %v393 = vld [vmem:[%s340 + $0x4] sm:$0x1]
        %v396 = vunpack.c.l.b16 %v392
        %v397 = vunpack.c.l.b16 %v393
        %v398 = vpack.c.b16 %v397, %v396
        %v400 = vshrl.u32 %v398, 16
        %v402 = vshll.u32 %v398, 16
        %v404 = vrot.slane %v402, 1
        %v405 = vor.u32 %v400, %v404
        %v408 = vunpack.c.l.b16 %v225
        %v409 = vunpack.c.l.b16 %v226
        %v410 = vpack.c.b16 %v409, %v408
        %v413 = vsel %vm247, %v405, 0
        %415 = vmatprep.subr.bf16.mxu0 0
        %416 = vmatpush1.bf16.msra.mxu0 0
        %417 = vmatprep.subr.bf16.mxu0 0
        %418 = vmatpush1.bf16.msra.mxu0 0
        %419 = vmatprep.subr.bf16.mxu0 0
        %420 = vmatpush1.bf16.msra.mxu0 0
        %421 = vmatprep.subr.bf16.mxu0 0
        %422 = vmatpush1.bf16.msra.mxu0 0
        %423 = vmatprep.subr.bf16.mxu0 0
        %424 = vmatpush1.bf16.msra.mxu0 0
        %425 = vmatprep.subr.bf16.mxu0 0
        %426 = vmatpush1.bf16.msra.mxu0 0
        %427 = vmatprep.subr.bf16.mxu0 0
        %428 = vmatpush1.bf16.msra.mxu0 0
        %429 = vmatprep.subr.bf16.mxu0 0
        %430 = vmatpush1.bf16.msra.mxu0 %v410
        %431 = vmatprep.subr.bf16.mxu0 0
        %432 = vmatpush2.bf16.msra.mxu0 0
        %433 = vmatprep.subr.bf16.mxu0 0
        %434 = vmatpush2.bf16.msra.mxu0 0
        %435 = vmatprep.subr.bf16.mxu0 0
        %436 = vmatpush2.bf16.msra.mxu0 0
        %437 = vmatprep.subr.bf16.mxu0 0
        %438 = vmatpush2.bf16.msra.mxu0 0
        %439 = vmatprep.subr.bf16.mxu0 0
        %440 = vmatpush2.bf16.msra.mxu0 0
        %441 = vmatprep.subr.bf16.mxu0 0
        %442 = vmatpush2.bf16.msra.mxu0 0
        %443 = vmatprep.subr.bf16.mxu0 0
        %444 = vmatpush2.bf16.msra.mxu0 0
        %445 = vmatprep.subr.bf16.mxu0 0
        %446 = vmatpush2.bf16.msra.mxu0 0
        %447 = vmatprep.mubr.bf16.mxu0 0
        %448 = vmatmul.mubr.bf16.gmra.mxu0 %v413
        %v449 = vpop.f32.mrf.mxu0
        %v450 = vadd.f32 0.0, %v449
        %v451 = vpop.f32.mrf.mxu0
        %v452 = vpop.f32.mrf.mxu0
        %v453 = vpop.f32.mrf.mxu0
        %454 = vdwg.mxu0
        %v455 = vadd.f32 %v391, %v450
        %v457 = vlaneseq
        %v458 = vshrl.u32 %v457, 7
        %v459 = vsub.s32 0, %v458
        %v460 = vrot.slane %v215, %v459
        %v462 = vadd.f32 %v455, %v460
        %v463 = vmul.f32 %v462, 0.2
        %v464 = vmax.f32 %v462, %v463
        %v465 = vpack.c.bf16 %v464, %v464
        %466 = vst [vmem:[%s201] sm:$0xf] %v465
        %v467 = vld [vmem:[%s340] sm:$0xf]
        %v468 = vld [vmem:[%s340 + $0x4] sm:$0x1]
        %v471 = vunpack.c.l.b16 %v467
        %v472 = vunpack.c.l.b16 %v468
        %v473 = vpack.c.b16 %v472, %v471
        %v475 = vshrl.u32 %v473, 16
        %v477 = vshll.u32 %v473, 16
        %v479 = vrot.slane %v477, 1
        %v480 = vor.u32 %v475, %v479
        %v482 = vsel %vm247, %v480, 0
        %484 = vmatprep.subr.bf16.mxu0 0
        %485 = vmatpush1.bf16.msra.mxu0 0
        %486 = vmatprep.subr.bf16.mxu0 0
        %487 = vmatpush1.bf16.msra.mxu0 0
        %488 = vmatprep.subr.bf16.mxu0 0
        %489 = vmatpush1.bf16.msra.mxu0 0
        %490 = vmatprep.subr.bf16.mxu0 0
        %491 = vmatpush1.bf16.msra.mxu0 0
        %492 = vmatprep.subr.bf16.mxu0 0
        %493 = vmatpush1.bf16.msra.mxu0 0
        %494 = vmatprep.subr.bf16.mxu0 0
        %495 = vmatpush1.bf16.msra.mxu0 0
        %496 = vmatprep.subr.bf16.mxu0 0
        %497 = vmatpush1.bf16.msra.mxu0 0
        %498 = vmatprep.subr.bf16.mxu0 0
        %499 = vmatpush1.bf16.msra.mxu0 %v245
        %500 = vmatprep.subr.bf16.mxu0 0
        %501 = vmatpush2.bf16.msra.mxu0 0
        %502 = vmatprep.subr.bf16.mxu0 0
        %503 = vmatpush2.bf16.msra.mxu0 0
        %504 = vmatprep.subr.bf16.mxu0 0
        %505 = vmatpush2.bf16.msra.mxu0 0
        %506 = vmatprep.subr.bf16.mxu0 0
        %507 = vmatpush2.bf16.msra.mxu0 0
        %508 = vmatprep.subr.bf16.mxu0 0
        %509 = vmatpush2.bf16.msra.mxu0 0
        %510 = vmatprep.subr.bf16.mxu0 0
        %511 = vmatpush2.bf16.msra.mxu0 0
        %512 = vmatprep.subr.bf16.mxu0 0
        %513 = vmatpush2.bf16.msra.mxu0 0
        %514 = vmatprep.subr.bf16.mxu0 0
        %515 = vmatpush2.bf16.msra.mxu0 0
        %516 = vmatprep.mubr.bf16.mxu0 0
        %517 = vmatmul.mubr.bf16.gmra.mxu0 %v482
        %v518 = vpop.f32.mrf.mxu0
        %v519 = vadd.f32 0.0, %v518
        %v520 = vpop.f32.mrf.mxu0
        %v521 = vpop.f32.mrf.mxu0
        %v522 = vpop.f32.mrf.mxu0
        %523 = vdwg.mxu0
        %v525 = vsel %vm247, %v467, 0
        %527 = vmatprep.subr.bf16.mxu0 0
        %528 = vmatpush1.bf16.msra.mxu0 0
        %529 = vmatprep.subr.bf16.mxu0 0
        %530 = vmatpush1.bf16.msra.mxu0 0
        %531 = vmatprep.subr.bf16.mxu0 0
        %532 = vmatpush1.bf16.msra.mxu0 0
        %533 = vmatprep.subr.bf16.mxu0 0
        %534 = vmatpush1.bf16.msra.mxu0 0
        %535 = vmatprep.subr.bf16.mxu0 0
        %536 = vmatpush1.bf16.msra.mxu0 0
        %537 = vmatprep.subr.bf16.mxu0 0
        %538 = vmatpush1.bf16.msra.mxu0 0
        %539 = vmatprep.subr.bf16.mxu0 0
        %540 = vmatpush1.bf16.msra.mxu0 0
        %541 = vmatprep.subr.bf16.mxu0 0
        %542 = vmatpush1.bf16.msra.mxu0 %v295
        %543 = vmatprep.subr.bf16.mxu0 0
        %544 = vmatpush2.bf16.msra.mxu0 0
        %545 = vmatprep.subr.bf16.mxu0 0
        %546 = vmatpush2.bf16.msra.mxu0 0
        %547 = vmatprep.subr.bf16.mxu0 0
        %548 = vmatpush2.bf16.msra.mxu0 0
        %549 = vmatprep.subr.bf16.mxu0 0
        %550 = vmatpush2.bf16.msra.mxu0 0
        %551 = vmatprep.subr.bf16.mxu0 0
        %552 = vmatpush2.bf16.msra.mxu0 0
        %553 = vmatprep.subr.bf16.mxu0 0
        %554 = vmatpush2.bf16.msra.mxu0 0
        %555 = vmatprep.subr.bf16.mxu0 0
        %556 = vmatpush2.bf16.msra.mxu0 0
        %557 = vmatprep.subr.bf16.mxu0 0
        %558 = vmatpush2.bf16.msra.mxu0 0
        %559 = vmatprep.mubr.bf16.mxu0 0
        %560 = vmatmul.mubr.bf16.gmra.mxu0 %v525
        %v561 = vpop.f32.mrf.mxu0
        %v562 = vadd.f32 %v519, %v561
        %v563 = vpop.f32.mrf.mxu0
        %v564 = vpop.f32.mrf.mxu0
        %v565 = vpop.f32.mrf.mxu0
        %566 = vdwg.mxu0
        %s567 = scalar_lea.vmem %s206, 16
        %v568 = vld [vmem:[%s567] sm:$0xf]
        %v570 = vsel %vm247, %v568, 0
        %572 = vmatprep.subr.bf16.mxu0 0
        %573 = vmatpush1.bf16.msra.mxu0 0
        %574 = vmatprep.subr.bf16.mxu0 0
        %575 = vmatpush1.bf16.msra.mxu0 0
        %576 = vmatprep.subr.bf16.mxu0 0
        %577 = vmatpush1.bf16.msra.mxu0 0
        %578 = vmatprep.subr.bf16.mxu0 0
        %579 = vmatpush1.bf16.msra.mxu0 0
        %580 = vmatprep.subr.bf16.mxu0 0
        %581 = vmatpush1.bf16.msra.mxu0 0
        %582 = vmatprep.subr.bf16.mxu0 0
        %583 = vmatpush1.bf16.msra.mxu0 0
        %584 = vmatprep.subr.bf16.mxu0 0
        %585 = vmatpush1.bf16.msra.mxu0 0
        %586 = vmatprep.subr.bf16.mxu0 0
        %587 = vmatpush1.bf16.msra.mxu0 %v346
        %588 = vmatprep.subr.bf16.mxu0 0
        %589 = vmatpush2.bf16.msra.mxu0 0
        %590 = vmatprep.subr.bf16.mxu0 0
        %591 = vmatpush2.bf16.msra.mxu0 0
        %592 = vmatprep.subr.bf16.mxu0 0
        %593 = vmatpush2.bf16.msra.mxu0 0
        %594 = vmatprep.subr.bf16.mxu0 0
        %595 = vmatpush2.bf16.msra.mxu0 0
        %596 = vmatprep.subr.bf16.mxu0 0
        %597 = vmatpush2.bf16.msra.mxu0 0
        %598 = vmatprep.subr.bf16.mxu0 0
        %599 = vmatpush2.bf16.msra.mxu0 0
        %600 = vmatprep.subr.bf16.mxu0 0
        %601 = vmatpush2.bf16.msra.mxu0 0
        %602 = vmatprep.subr.bf16.mxu0 0
        %603 = vmatpush2.bf16.msra.mxu0 0
        %604 = vmatprep.mubr.bf16.mxu0 0
        %605 = vmatmul.mubr.bf16.gmra.mxu0 %v570
        %v606 = vpop.f32.mrf.mxu0
        %v607 = vadd.f32 0.0, %v606
        %v608 = vpop.f32.mrf.mxu0
        %v609 = vpop.f32.mrf.mxu0
        %v610 = vpop.f32.mrf.mxu0
        %611 = vdwg.mxu0
        %v612 = vadd.f32 %v562, %v607
        %v613 = vld [vmem:[%s567] sm:$0xf]
        %v614 = vld [vmem:[%s567 + $0x4] sm:$0x1]
        %v617 = vunpack.c.l.b16 %v613
        %v618 = vunpack.c.l.b16 %v614
        %v619 = vpack.c.b16 %v618, %v617
        %v621 = vshrl.u32 %v619, 16
        %v623 = vshll.u32 %v619, 16
        %v625 = vrot.slane %v623, 1
        %v626 = vor.u32 %v621, %v625
        %v628 = vsel %vm247, %v626, 0
        %630 = vmatprep.subr.bf16.mxu0 0
        %631 = vmatpush1.bf16.msra.mxu0 0
        %632 = vmatprep.subr.bf16.mxu0 0
        %633 = vmatpush1.bf16.msra.mxu0 0
        %634 = vmatprep.subr.bf16.mxu0 0
        %635 = vmatpush1.bf16.msra.mxu0 0
        %636 = vmatprep.subr.bf16.mxu0 0
        %637 = vmatpush1.bf16.msra.mxu0 0
        %638 = vmatprep.subr.bf16.mxu0 0
        %639 = vmatpush1.bf16.msra.mxu0 0
        %640 = vmatprep.subr.bf16.mxu0 0
        %641 = vmatpush1.bf16.msra.mxu0 0
        %642 = vmatprep.subr.bf16.mxu0 0
        %643 = vmatpush1.bf16.msra.mxu0 0
        %644 = vmatprep.subr.bf16.mxu0 0
        %645 = vmatpush1.bf16.msra.mxu0 %v410
        %646 = vmatprep.subr.bf16.mxu0 0
        %647 = vmatpush2.bf16.msra.mxu0 0
        %648 = vmatprep.subr.bf16.mxu0 0
        %649 = vmatpush2.bf16.msra.mxu0 0
        %650 = vmatprep.subr.bf16.mxu0 0
        %651 = vmatpush2.bf16.msra.mxu0 0
        %652 = vmatprep.subr.bf16.mxu0 0
        %653 = vmatpush2.bf16.msra.mxu0 0
        %654 = vmatprep.subr.bf16.mxu0 0
        %655 = vmatpush2.bf16.msra.mxu0 0
        %656 = vmatprep.subr.bf16.mxu0 0
        %657 = vmatpush2.bf16.msra.mxu0 0
        %658 = vmatprep.subr.bf16.mxu0 0
        %659 = vmatpush2.bf16.msra.mxu0 0
        %660 = vmatprep.subr.bf16.mxu0 0
        %661 = vmatpush2.bf16.msra.mxu0 0
        %662 = vmatprep.mubr.bf16.mxu0 0
        %663 = vmatmul.mubr.bf16.gmra.mxu0 %v628
        %v664 = vpop.f32.mrf.mxu0
        %v665 = vadd.f32 0.0, %v664
        %v666 = vpop.f32.mrf.mxu0
        %v667 = vpop.f32.mrf.mxu0
        %v668 = vpop.f32.mrf.mxu0
        %669 = vdwg.mxu0
        %v670 = vadd.f32 %v612, %v665
        %v671 = vadd.f32 %v670, %v460
        %v672 = vmul.f32 %v671, 0.2
        %v673 = vmax.f32 %v671, %v672
        %v674 = vpack.c.bf16 %v673, %v673
        %s675 = scalar_lea.vmem %s201, 4 [#allocation2]
        %676 = vst [vmem:[%s675] sm:$0xf] %v674
        %v677 = vld [vmem:[%s567] sm:$0xf]
        %v678 = vld [vmem:[%s567 + $0x4] sm:$0x1]
        %v681 = vunpack.c.l.b16 %v677
        %v682 = vunpack.c.l.b16 %v678
        %v683 = vpack.c.b16 %v682, %v681
        %v685 = vshrl.u32 %v683, 16
        %v687 = vshll.u32 %v683, 16
        %v689 = vrot.slane %v687, 1
        %v690 = vor.u32 %v685, %v689
        %v692 = vsel %vm247, %v690, 0
        %694 = vmatprep.subr.bf16.mxu0 0
        %695 = vmatpush1.bf16.msra.mxu0 0
        %696 = vmatprep.subr.bf16.mxu0 0
        %697 = vmatpush1.bf16.msra.mxu0 0
        %698 = vmatprep.subr.bf16.mxu0 0
        %699 = vmatpush1.bf16.msra.mxu0 0
        %700 = vmatprep.subr.bf16.mxu0 0
        %701 = vmatpush1.bf16.msra.mxu0 0
        %702 = vmatprep.subr.bf16.mxu0 0
        %703 = vmatpush1.bf16.msra.mxu0 0
        %704 = vmatprep.subr.bf16.mxu0 0
        %705 = vmatpush1.bf16.msra.mxu0 0
        %706 = vmatprep.subr.bf16.mxu0 0
        %707 = vmatpush1.bf16.msra.mxu0 0
        %708 = vmatprep.subr.bf16.mxu0 0
        %709 = vmatpush1.bf16.msra.mxu0 %v245
        %710 = vmatprep.subr.bf16.mxu0 0
        %711 = vmatpush2.bf16.msra.mxu0 0
        %712 = vmatprep.subr.bf16.mxu0 0
        %713 = vmatpush2.bf16.msra.mxu0 0
        %714 = vmatprep.subr.bf16.mxu0 0
        %715 = vmatpush2.bf16.msra.mxu0 0
        %716 = vmatprep.subr.bf16.mxu0 0
        %717 = vmatpush2.bf16.msra.mxu0 0
        %718 = vmatprep.subr.bf16.mxu0 0
        %719 = vmatpush2.bf16.msra.mxu0 0
        %720 = vmatprep.subr.bf16.mxu0 0
        %721 = vmatpush2.bf16.msra.mxu0 0
        %722 = vmatprep.subr.bf16.mxu0 0
        %723 = vmatpush2.bf16.msra.mxu0 0
        %724 = vmatprep.subr.bf16.mxu0 0
        %725 = vmatpush2.bf16.msra.mxu0 0
        %726 = vmatprep.mubr.bf16.mxu0 0
        %727 = vmatmul.mubr.bf16.gmra.mxu0 %v692
        %v728 = vpop.f32.mrf.mxu0
        %v729 = vadd.f32 0.0, %v728
        %v730 = vpop.f32.mrf.mxu0
        %v731 = vpop.f32.mrf.mxu0
        %v732 = vpop.f32.mrf.mxu0
        %733 = vdwg.mxu0
        %v735 = vsel %vm247, %v677, 0
        %737 = vmatprep.subr.bf16.mxu0 0
        %738 = vmatpush1.bf16.msra.mxu0 0
        %739 = vmatprep.subr.bf16.mxu0 0
        %740 = vmatpush1.bf16.msra.mxu0 0
        %741 = vmatprep.subr.bf16.mxu0 0
        %742 = vmatpush1.bf16.msra.mxu0 0
        %743 = vmatprep.subr.bf16.mxu0 0
        %744 = vmatpush1.bf16.msra.mxu0 0
        %745 = vmatprep.subr.bf16.mxu0 0
        %746 = vmatpush1.bf16.msra.mxu0 0
        %747 = vmatprep.subr.bf16.mxu0 0
        %748 = vmatpush1.bf16.msra.mxu0 0
        %749 = vmatprep.subr.bf16.mxu0 0
        %750 = vmatpush1.bf16.msra.mxu0 0
        %751 = vmatprep.subr.bf16.mxu0 0
        %752 = vmatpush1.bf16.msra.mxu0 %v295
        %753 = vmatprep.subr.bf16.mxu0 0
        %754 = vmatpush2.bf16.msra.mxu0 0
        %755 = vmatprep.subr.bf16.mxu0 0
        %756 = vmatpush2.bf16.msra.mxu0 0
        %757 = vmatprep.subr.bf16.mxu0 0
        %758 = vmatpush2.bf16.msra.mxu0 0
        %759 = vmatprep.subr.bf16.mxu0 0
        %760 = vmatpush2.bf16.msra.mxu0 0
        %761 = vmatprep.subr.bf16.mxu0 0
        %762 = vmatpush2.bf16.msra.mxu0 0
        %763 = vmatprep.subr.bf16.mxu0 0
        %764 = vmatpush2.bf16.msra.mxu0 0
        %765 = vmatprep.subr.bf16.mxu0 0
        %766 = vmatpush2.bf16.msra.mxu0 0
        %767 = vmatprep.subr.bf16.mxu0 0
        %768 = vmatpush2.bf16.msra.mxu0 0
        %769 = vmatprep.mubr.bf16.mxu0 0
        %770 = vmatmul.mubr.bf16.gmra.mxu0 %v735
        %v771 = vpop.f32.mrf.mxu0
        %v772 = vadd.f32 %v729, %v771
        %v773 = vpop.f32.mrf.mxu0
        %v774 = vpop.f32.mrf.mxu0
        %v775 = vpop.f32.mrf.mxu0
        %776 = vdwg.mxu0
        %s777 = scalar_lea.vmem %s206, 24
        %v778 = vld [vmem:[%s777] sm:$0xf]
        %v780 = vsel %vm247, %v778, 0
        %782 = vmatprep.subr.bf16.mxu0 0
        %783 = vmatpush1.bf16.msra.mxu0 0
        %784 = vmatprep.subr.bf16.mxu0 0
        %785 = vmatpush1.bf16.msra.mxu0 0
        %786 = vmatprep.subr.bf16.mxu0 0
        %787 = vmatpush1.bf16.msra.mxu0 0
        %788 = vmatprep.subr.bf16.mxu0 0
        %789 = vmatpush1.bf16.msra.mxu0 0
        %790 = vmatprep.subr.bf16.mxu0 0
        %791 = vmatpush1.bf16.msra.mxu0 0
        %792 = vmatprep.subr.bf16.mxu0 0
        %793 = vmatpush1.bf16.msra.mxu0 0
        %794 = vmatprep.subr.bf16.mxu0 0
        %795 = vmatpush1.bf16.msra.mxu0 0
        %796 = vmatprep.subr.bf16.mxu0 0
        %797 = vmatpush1.bf16.msra.mxu0 %v346
        %798 = vmatprep.subr.bf16.mxu0 0
        %799 = vmatpush2.bf16.msra.mxu0 0
        %800 = vmatprep.subr.bf16.mxu0 0
        %801 = vmatpush2.bf16.msra.mxu0 0
        %802 = vmatprep.subr.bf16.mxu0 0
        %803 = vmatpush2.bf16.msra.mxu0 0
        %804 = vmatprep.subr.bf16.mxu0 0
        %805 = vmatpush2.bf16.msra.mxu0 0
        %806 = vmatprep.subr.bf16.mxu0 0
        %807 = vmatpush2.bf16.msra.mxu0 0
        %808 = vmatprep.subr.bf16.mxu0 0
        %809 = vmatpush2.bf16.msra.mxu0 0
        %810 = vmatprep.subr.bf16.mxu0 0
        %811 = vmatpush2.bf16.msra.mxu0 0
        %812 = vmatprep.subr.bf16.mxu0 0
        %813 = vmatpush2.bf16.msra.mxu0 0
        %814 = vmatprep.mubr.bf16.mxu0 0
        %815 = vmatmul.mubr.bf16.gmra.mxu0 %v780
        %v816 = vpop.f32.mrf.mxu0
        %v817 = vadd.f32 0.0, %v816
        %v818 = vpop.f32.mrf.mxu0
        %v819 = vpop.f32.mrf.mxu0
        %v820 = vpop.f32.mrf.mxu0
        %821 = vdwg.mxu0
        %v822 = vadd.f32 %v772, %v817
        %v823 = vld [vmem:[%s777] sm:$0xf]
        %v824 = vld [vmem:[%s777 + $0x4] sm:$0x1]
        %v827 = vunpack.c.l.b16 %v823
        %v828 = vunpack.c.l.b16 %v824
        %v829 = vpack.c.b16 %v828, %v827
        %v831 = vshrl.u32 %v829, 16
        %v833 = vshll.u32 %v829, 16
        %v835 = vrot.slane %v833, 1
        %v836 = vor.u32 %v831, %v835
        %v838 = vsel %vm247, %v836, 0
        %840 = vmatprep.subr.bf16.mxu0 0
        %841 = vmatpush1.bf16.msra.mxu0 0
        %842 = vmatprep.subr.bf16.mxu0 0
        %843 = vmatpush1.bf16.msra.mxu0 0
        %844 = vmatprep.subr.bf16.mxu0 0
        %845 = vmatpush1.bf16.msra.mxu0 0
        %846 = vmatprep.subr.bf16.mxu0 0
        %847 = vmatpush1.bf16.msra.mxu0 0
        %848 = vmatprep.subr.bf16.mxu0 0
        %849 = vmatpush1.bf16.msra.mxu0 0
        %850 = vmatprep.subr.bf16.mxu0 0
        %851 = vmatpush1.bf16.msra.mxu0 0
        %852 = vmatprep.subr.bf16.mxu0 0
        %853 = vmatpush1.bf16.msra.mxu0 0
        %854 = vmatprep.subr.bf16.mxu0 0
        %855 = vmatpush1.bf16.msra.mxu0 %v410
        %856 = vmatprep.subr.bf16.mxu0 0
        %857 = vmatpush2.bf16.msra.mxu0 0
        %858 = vmatprep.subr.bf16.mxu0 0
        %859 = vmatpush2.bf16.msra.mxu0 0
        %860 = vmatprep.subr.bf16.mxu0 0
        %861 = vmatpush2.bf16.msra.mxu0 0
        %862 = vmatprep.subr.bf16.mxu0 0
        %863 = vmatpush2.bf16.msra.mxu0 0
        %864 = vmatprep.subr.bf16.mxu0 0
        %865 = vmatpush2.bf16.msra.mxu0 0
        %866 = vmatprep.subr.bf16.mxu0 0
        %867 = vmatpush2.bf16.msra.mxu0 0
        %868 = vmatprep.subr.bf16.mxu0 0
        %869 = vmatpush2.bf16.msra.mxu0 0
        %870 = vmatprep.subr.bf16.mxu0 0
        %871 = vmatpush2.bf16.msra.mxu0 0
        %872 = vmatprep.mubr.bf16.mxu0 0
        %873 = vmatmul.mubr.bf16.gmra.mxu0 %v838
        %v874 = vpop.f32.mrf.mxu0
        %v875 = vadd.f32 0.0, %v874
        %v876 = vpop.f32.mrf.mxu0
        %v877 = vpop.f32.mrf.mxu0
        %v878 = vpop.f32.mrf.mxu0
        %879 = vdwg.mxu0
        %v880 = vadd.f32 %v822, %v875
        %v881 = vadd.f32 %v880, %v460
        %v882 = vmul.f32 %v881, 0.2
        %v883 = vmax.f32 %v881, %v882
        %v884 = vpack.c.bf16 %v883, %v883
        %s885 = scalar_lea.vmem %s201, 8 [#allocation2]
        %886 = vst [vmem:[%s885] sm:$0xf] %v884
        %v887 = vld [vmem:[%s777] sm:$0xf]
        %v888 = vld [vmem:[%s777 + $0x4] sm:$0x1]
        %v891 = vunpack.c.l.b16 %v887
        %v892 = vunpack.c.l.b16 %v888
        %v893 = vpack.c.b16 %v892, %v891
        %v895 = vshrl.u32 %v893, 16
        %v897 = vshll.u32 %v893, 16
        %v899 = vrot.slane %v897, 1
        %v900 = vor.u32 %v895, %v899
        %v902 = vsel %vm247, %v900, 0
        %904 = vmatprep.subr.bf16.mxu0 0
        %905 = vmatpush1.bf16.msra.mxu0 0
        %906 = vmatprep.subr.bf16.mxu0 0
        %907 = vmatpush1.bf16.msra.mxu0 0
        %908 = vmatprep.subr.bf16.mxu0 0
        %909 = vmatpush1.bf16.msra.mxu0 0
        %910 = vmatprep.subr.bf16.mxu0 0
        %911 = vmatpush1.bf16.msra.mxu0 0
        %912 = vmatprep.subr.bf16.mxu0 0
        %913 = vmatpush1.bf16.msra.mxu0 0
        %914 = vmatprep.subr.bf16.mxu0 0
        %915 = vmatpush1.bf16.msra.mxu0 0
        %916 = vmatprep.subr.bf16.mxu0 0
        %917 = vmatpush1.bf16.msra.mxu0 0
        %918 = vmatprep.subr.bf16.mxu0 0
        %919 = vmatpush1.bf16.msra.mxu0 %v245
        %920 = vmatprep.subr.bf16.mxu0 0
        %921 = vmatpush2.bf16.msra.mxu0 0
        %922 = vmatprep.subr.bf16.mxu0 0
        %923 = vmatpush2.bf16.msra.mxu0 0
        %924 = vmatprep.subr.bf16.mxu0 0
        %925 = vmatpush2.bf16.msra.mxu0 0
        %926 = vmatprep.subr.bf16.mxu0 0
        %927 = vmatpush2.bf16.msra.mxu0 0
        %928 = vmatprep.subr.bf16.mxu0 0
        %929 = vmatpush2.bf16.msra.mxu0 0
        %930 = vmatprep.subr.bf16.mxu0 0
        %931 = vmatpush2.bf16.msra.mxu0 0
        %932 = vmatprep.subr.bf16.mxu0 0
        %933 = vmatpush2.bf16.msra.mxu0 0
        %934 = vmatprep.subr.bf16.mxu0 0
        %935 = vmatpush2.bf16.msra.mxu0 0
        %936 = vmatprep.mubr.bf16.mxu0 0
        %937 = vmatmul.mubr.bf16.gmra.mxu0 %v902
        %v938 = vpop.f32.mrf.mxu0
        %v939 = vadd.f32 0.0, %v938
        %v940 = vpop.f32.mrf.mxu0
        %v941 = vpop.f32.mrf.mxu0
        %v942 = vpop.f32.mrf.mxu0
        %943 = vdwg.mxu0
        %v945 = vsel %vm247, %v887, 0
        %947 = vmatprep.subr.bf16.mxu0 0
        %948 = vmatpush1.bf16.msra.mxu0 0
        %949 = vmatprep.subr.bf16.mxu0 0
        %950 = vmatpush1.bf16.msra.mxu0 0
        %951 = vmatprep.subr.bf16.mxu0 0
        %952 = vmatpush1.bf16.msra.mxu0 0
        %953 = vmatprep.subr.bf16.mxu0 0
        %954 = vmatpush1.bf16.msra.mxu0 0
        %955 = vmatprep.subr.bf16.mxu0 0
        %956 = vmatpush1.bf16.msra.mxu0 0
        %957 = vmatprep.subr.bf16.mxu0 0
        %958 = vmatpush1.bf16.msra.mxu0 0
        %959 = vmatprep.subr.bf16.mxu0 0
        %960 = vmatpush1.bf16.msra.mxu0 0
        %961 = vmatprep.subr.bf16.mxu0 0
        %962 = vmatpush1.bf16.msra.mxu0 %v295
        %963 = vmatprep.subr.bf16.mxu0 0
        %964 = vmatpush2.bf16.msra.mxu0 0
        %965 = vmatprep.subr.bf16.mxu0 0
        %966 = vmatpush2.bf16.msra.mxu0 0
        %967 = vmatprep.subr.bf16.mxu0 0
        %968 = vmatpush2.bf16.msra.mxu0 0
        %969 = vmatprep.subr.bf16.mxu0 0
        %970 = vmatpush2.bf16.msra.mxu0 0
        %971 = vmatprep.subr.bf16.mxu0 0
        %972 = vmatpush2.bf16.msra.mxu0 0
        %973 = vmatprep.subr.bf16.mxu0 0
        %974 = vmatpush2.bf16.msra.mxu0 0
        %975 = vmatprep.subr.bf16.mxu0 0
        %976 = vmatpush2.bf16.msra.mxu0 0
        %977 = vmatprep.subr.bf16.mxu0 0
        %978 = vmatpush2.bf16.msra.mxu0 0
        %979 = vmatprep.mubr.bf16.mxu0 0
        %980 = vmatmul.mubr.bf16.gmra.mxu0 %v945
        %v981 = vpop.f32.mrf.mxu0
        %v982 = vadd.f32 %v939, %v981
        %v983 = vpop.f32.mrf.mxu0
        %v984 = vpop.f32.mrf.mxu0
        %v985 = vpop.f32.mrf.mxu0
        %986 = vdwg.mxu0
        %s987 = scalar_lea.vmem %s206, 32
        %v988 = vld [vmem:[%s987] sm:$0xf]
        %v990 = vsel %vm247, %v988, 0
        %992 = vmatprep.subr.bf16.mxu0 0
        %993 = vmatpush1.bf16.msra.mxu0 0
        %994 = vmatprep.subr.bf16.mxu0 0
        %995 = vmatpush1.bf16.msra.mxu0 0
        %996 = vmatprep.subr.bf16.mxu0 0
        %997 = vmatpush1.bf16.msra.mxu0 0
        %998 = vmatprep.subr.bf16.mxu0 0
        %999 = vmatpush1.bf16.msra.mxu0 0
        %1000 = vmatprep.subr.bf16.mxu0 0
        %1001 = vmatpush1.bf16.msra.mxu0 0
        %1002 = vmatprep.subr.bf16.mxu0 0
        %1003 = vmatpush1.bf16.msra.mxu0 0
        %1004 = vmatprep.subr.bf16.mxu0 0
        %1005 = vmatpush1.bf16.msra.mxu0 0
        %1006 = vmatprep.subr.bf16.mxu0 0
        %1007 = vmatpush1.bf16.msra.mxu0 %v346
        %1008 = vmatprep.subr.bf16.mxu0 0
        %1009 = vmatpush2.bf16.msra.mxu0 0
        %1010 = vmatprep.subr.bf16.mxu0 0
        %1011 = vmatpush2.bf16.msra.mxu0 0
        %1012 = vmatprep.subr.bf16.mxu0 0
        %1013 = vmatpush2.bf16.msra.mxu0 0
        %1014 = vmatprep.subr.bf16.mxu0 0
        %1015 = vmatpush2.bf16.msra.mxu0 0
        %1016 = vmatprep.subr.bf16.mxu0 0
        %1017 = vmatpush2.bf16.msra.mxu0 0
        %1018 = vmatprep.subr.bf16.mxu0 0
        %1019 = vmatpush2.bf16.msra.mxu0 0
        %1020 = vmatprep.subr.bf16.mxu0 0
        %1021 = vmatpush2.bf16.msra.mxu0 0
        %1022 = vmatprep.subr.bf16.mxu0 0
        %1023 = vmatpush2.bf16.msra.mxu0 0
        %1024 = vmatprep.mubr.bf16.mxu0 0
        %1025 = vmatmul.mubr.bf16.gmra.mxu0 %v990
        %v1026 = vpop.f32.mrf.mxu0
        %v1027 = vadd.f32 0.0, %v1026
        %v1028 = vpop.f32.mrf.mxu0
        %v1029 = vpop.f32.mrf.mxu0
        %v1030 = vpop.f32.mrf.mxu0
        %1031 = vdwg.mxu0
        %v1032 = vadd.f32 %v982, %v1027
        %v1033 = vld [vmem:[%s987] sm:$0xf]
        %v1034 = vld [vmem:[%s987 + $0x4] sm:$0x1]
        %v1037 = vunpack.c.l.b16 %v1033
        %v1038 = vunpack.c.l.b16 %v1034
        %v1039 = vpack.c.b16 %v1038, %v1037
        %v1041 = vshrl.u32 %v1039, 16
        %v1043 = vshll.u32 %v1039, 16
        %v1045 = vrot.slane %v1043, 1
        %v1046 = vor.u32 %v1041, %v1045
        %v1048 = vsel %vm247, %v1046, 0
        %1050 = vmatprep.subr.bf16.mxu0 0
        %1051 = vmatpush1.bf16.msra.mxu0 0
        %1052 = vmatprep.subr.bf16.mxu0 0
        %1053 = vmatpush1.bf16.msra.mxu0 0
        %1054 = vmatprep.subr.bf16.mxu0 0
        %1055 = vmatpush1.bf16.msra.mxu0 0
        %1056 = vmatprep.subr.bf16.mxu0 0
        %1057 = vmatpush1.bf16.msra.mxu0 0
        %1058 = vmatprep.subr.bf16.mxu0 0
        %1059 = vmatpush1.bf16.msra.mxu0 0
        %1060 = vmatprep.subr.bf16.mxu0 0
        %1061 = vmatpush1.bf16.msra.mxu0 0
        %1062 = vmatprep.subr.bf16.mxu0 0
        %1063 = vmatpush1.bf16.msra.mxu0 0
        %1064 = vmatprep.subr.bf16.mxu0 0
        %1065 = vmatpush1.bf16.msra.mxu0 %v410
        %1066 = vmatprep.subr.bf16.mxu0 0
        %1067 = vmatpush2.bf16.msra.mxu0 0
        %1068 = vmatprep.subr.bf16.mxu0 0
        %1069 = vmatpush2.bf16.msra.mxu0 0
        %1070 = vmatprep.subr.bf16.mxu0 0
        %1071 = vmatpush2.bf16.msra.mxu0 0
        %1072 = vmatprep.subr.bf16.mxu0 0
        %1073 = vmatpush2.bf16.msra.mxu0 0
        %1074 = vmatprep.subr.bf16.mxu0 0
        %1075 = vmatpush2.bf16.msra.mxu0 0
        %1076 = vmatprep.subr.bf16.mxu0 0
        %1077 = vmatpush2.bf16.msra.mxu0 0
        %1078 = vmatprep.subr.bf16.mxu0 0
        %1079 = vmatpush2.bf16.msra.mxu0 0
        %1080 = vmatprep.subr.bf16.mxu0 0
        %1081 = vmatpush2.bf16.msra.mxu0 0
        %1082 = vmatprep.mubr.bf16.mxu0 0
        %1083 = vmatmul.mubr.bf16.gmra.mxu0 %v1048
        %v1084 = vpop.f32.mrf.mxu0
        %v1085 = vadd.f32 0.0, %v1084
        %v1086 = vpop.f32.mrf.mxu0
        %v1087 = vpop.f32.mrf.mxu0
        %v1088 = vpop.f32.mrf.mxu0
        %1089 = vdwg.mxu0
        %v1090 = vadd.f32 %v1032, %v1085
        %v1091 = vadd.f32 %v1090, %v460
        %v1092 = vmul.f32 %v1091, 0.2
        %v1093 = vmax.f32 %v1091, %v1092
        %v1094 = vpack.c.bf16 %v1093, %v1093
        %s1095 = scalar_lea.vmem %s201, 12 [#allocation2]
        %1096 = vst [vmem:[%s1095] sm:$0xf] %v1094
        %v1097 = vld [vmem:[%s987] sm:$0xf]
        %v1098 = vld [vmem:[%s987 + $0x4] sm:$0x1]
        %v1101 = vunpack.c.l.b16 %v1097
        %v1102 = vunpack.c.l.b16 %v1098
        %v1103 = vpack.c.b16 %v1102, %v1101
        %v1105 = vshrl.u32 %v1103, 16
        %v1107 = vshll.u32 %v1103, 16
        %v1109 = vrot.slane %v1107, 1
        %v1110 = vor.u32 %v1105, %v1109
        %v1112 = vsel %vm247, %v1110, 0
        %1114 = vmatprep.subr.bf16.mxu0 0
        %1115 = vmatpush1.bf16.msra.mxu0 0
        %1116 = vmatprep.subr.bf16.mxu0 0
        %1117 = vmatpush1.bf16.msra.mxu0 0
        %1118 = vmatprep.subr.bf16.mxu0 0
        %1119 = vmatpush1.bf16.msra.mxu0 0
        %1120 = vmatprep.subr.bf16.mxu0 0
        %1121 = vmatpush1.bf16.msra.mxu0 0
        %1122 = vmatprep.subr.bf16.mxu0 0
        %1123 = vmatpush1.bf16.msra.mxu0 0
        %1124 = vmatprep.subr.bf16.mxu0 0
        %1125 = vmatpush1.bf16.msra.mxu0 0
        %1126 = vmatprep.subr.bf16.mxu0 0
        %1127 = vmatpush1.bf16.msra.mxu0 0
        %1128 = vmatprep.subr.bf16.mxu0 0
        %1129 = vmatpush1.bf16.msra.mxu0 %v245
        %1130 = vmatprep.subr.bf16.mxu0 0
        %1131 = vmatpush2.bf16.msra.mxu0 0
        %1132 = vmatprep.subr.bf16.mxu0 0
        %1133 = vmatpush2.bf16.msra.mxu0 0
        %1134 = vmatprep.subr.bf16.mxu0 0
        %1135 = vmatpush2.bf16.msra.mxu0 0
        %1136 = vmatprep.subr.bf16.mxu0 0
        %1137 = vmatpush2.bf16.msra.mxu0 0
        %1138 = vmatprep.subr.bf16.mxu0 0
        %1139 = vmatpush2.bf16.msra.mxu0 0
        %1140 = vmatprep.subr.bf16.mxu0 0
        %1141 = vmatpush2.bf16.msra.mxu0 0
        %1142 = vmatprep.subr.bf16.mxu0 0
        %1143 = vmatpush2.bf16.msra.mxu0 0
        %1144 = vmatprep.subr.bf16.mxu0 0
        %1145 = vmatpush2.bf16.msra.mxu0 0
        %1146 = vmatprep.mubr.bf16.mxu0 0
        %1147 = vmatmul.mubr.bf16.gmra.mxu0 %v1112
        %v1148 = vpop.f32.mrf.mxu0
        %v1149 = vadd.f32 0.0, %v1148
        %v1150 = vpop.f32.mrf.mxu0
        %v1151 = vpop.f32.mrf.mxu0
        %v1152 = vpop.f32.mrf.mxu0
        %1153 = vdwg.mxu0
        %v1155 = vsel %vm247, %v1097, 0
        %1157 = vmatprep.subr.bf16.mxu0 0
        %1158 = vmatpush1.bf16.msra.mxu0 0
        %1159 = vmatprep.subr.bf16.mxu0 0
        %1160 = vmatpush1.bf16.msra.mxu0 0
        %1161 = vmatprep.subr.bf16.mxu0 0
        %1162 = vmatpush1.bf16.msra.mxu0 0
        %1163 = vmatprep.subr.bf16.mxu0 0
        %1164 = vmatpush1.bf16.msra.mxu0 0
        %1165 = vmatprep.subr.bf16.mxu0 0
        %1166 = vmatpush1.bf16.msra.mxu0 0
        %1167 = vmatprep.subr.bf16.mxu0 0
        %1168 = vmatpush1.bf16.msra.mxu0 0
        %1169 = vmatprep.subr.bf16.mxu0 0
        %1170 = vmatpush1.bf16.msra.mxu0 0
        %1171 = vmatprep.subr.bf16.mxu0 0
        %1172 = vmatpush1.bf16.msra.mxu0 %v295
        %1173 = vmatprep.subr.bf16.mxu0 0
        %1174 = vmatpush2.bf16.msra.mxu0 0
        %1175 = vmatprep.subr.bf16.mxu0 0
        %1176 = vmatpush2.bf16.msra.mxu0 0
        %1177 = vmatprep.subr.bf16.mxu0 0
        %1178 = vmatpush2.bf16.msra.mxu0 0
        %1179 = vmatprep.subr.bf16.mxu0 0
        %1180 = vmatpush2.bf16.msra.mxu0 0
        %1181 = vmatprep.subr.bf16.mxu0 0
        %1182 = vmatpush2.bf16.msra.mxu0 0
        %1183 = vmatprep.subr.bf16.mxu0 0
        %1184 = vmatpush2.bf16.msra.mxu0 0
        %1185 = vmatprep.subr.bf16.mxu0 0
        %1186 = vmatpush2.bf16.msra.mxu0 0
        %1187 = vmatprep.subr.bf16.mxu0 0
        %1188 = vmatpush2.bf16.msra.mxu0 0
        %1189 = vmatprep.mubr.bf16.mxu0 0
        %1190 = vmatmul.mubr.bf16.gmra.mxu0 %v1155
        %v1191 = vpop.f32.mrf.mxu0
        %v1192 = vadd.f32 %v1149, %v1191
        %v1193 = vpop.f32.mrf.mxu0
        %v1194 = vpop.f32.mrf.mxu0
        %v1195 = vpop.f32.mrf.mxu0
        %1196 = vdwg.mxu0
        %s1197 = scalar_lea.vmem %s206, 40
        %v1198 = vld [vmem:[%s1197] sm:$0xf]
        %v1200 = vsel %vm247, %v1198, 0
        %1202 = vmatprep.subr.bf16.mxu0 0
        %1203 = vmatpush1.bf16.msra.mxu0 0
        %1204 = vmatprep.subr.bf16.mxu0 0
        %1205 = vmatpush1.bf16.msra.mxu0 0
        %1206 = vmatprep.subr.bf16.mxu0 0
        %1207 = vmatpush1.bf16.msra.mxu0 0
        %1208 = vmatprep.subr.bf16.mxu0 0
        %1209 = vmatpush1.bf16.msra.mxu0 0
        %1210 = vmatprep.subr.bf16.mxu0 0
        %1211 = vmatpush1.bf16.msra.mxu0 0
        %1212 = vmatprep.subr.bf16.mxu0 0
        %1213 = vmatpush1.bf16.msra.mxu0 0
        %1214 = vmatprep.subr.bf16.mxu0 0
        %1215 = vmatpush1.bf16.msra.mxu0 0
        %1216 = vmatprep.subr.bf16.mxu0 0
        %1217 = vmatpush1.bf16.msra.mxu0 %v346
        %1218 = vmatprep.subr.bf16.mxu0 0
        %1219 = vmatpush2.bf16.msra.mxu0 0
        %1220 = vmatprep.subr.bf16.mxu0 0
        %1221 = vmatpush2.bf16.msra.mxu0 0
        %1222 = vmatprep.subr.bf16.mxu0 0
        %1223 = vmatpush2.bf16.msra.mxu0 0
        %1224 = vmatprep.subr.bf16.mxu0 0
        %1225 = vmatpush2.bf16.msra.mxu0 0
        %1226 = vmatprep.subr.bf16.mxu0 0
        %1227 = vmatpush2.bf16.msra.mxu0 0
        %1228 = vmatprep.subr.bf16.mxu0 0
        %1229 = vmatpush2.bf16.msra.mxu0 0
        %1230 = vmatprep.subr.bf16.mxu0 0
        %1231 = vmatpush2.bf16.msra.mxu0 0
        %1232 = vmatprep.subr.bf16.mxu0 0
        %1233 = vmatpush2.bf16.msra.mxu0 0
        %1234 = vmatprep.mubr.bf16.mxu0 0
        %1235 = vmatmul.mubr.bf16.gmra.mxu0 %v1200
        %v1236 = vpop.f32.mrf.mxu0
        %v1237 = vadd.f32 0.0, %v1236
        %v1238 = vpop.f32.mrf.mxu0
        %v1239 = vpop.f32.mrf.mxu0
        %v1240 = vpop.f32.mrf.mxu0
        %1241 = vdwg.mxu0
        %v1242 = vadd.f32 %v1192, %v1237
        %v1243 = vld [vmem:[%s1197] sm:$0xf]
        %v1244 = vld [vmem:[%s1197 + $0x4] sm:$0x1]
        %v1247 = vunpack.c.l.b16 %v1243
        %v1248 = vunpack.c.l.b16 %v1244
        %v1249 = vpack.c.b16 %v1248, %v1247
        %v1251 = vshrl.u32 %v1249, 16
        %v1253 = vshll.u32 %v1249, 16
        %v1255 = vrot.slane %v1253, 1
        %v1256 = vor.u32 %v1251, %v1255
        %v1258 = vsel %vm247, %v1256, 0
        %1260 = vmatprep.subr.bf16.mxu0 0
        %1261 = vmatpush1.bf16.msra.mxu0 0
        %1262 = vmatprep.subr.bf16.mxu0 0
        %1263 = vmatpush1.bf16.msra.mxu0 0
        %1264 = vmatprep.subr.bf16.mxu0 0
        %1265 = vmatpush1.bf16.msra.mxu0 0
        %1266 = vmatprep.subr.bf16.mxu0 0
        %1267 = vmatpush1.bf16.msra.mxu0 0
        %1268 = vmatprep.subr.bf16.mxu0 0
        %1269 = vmatpush1.bf16.msra.mxu0 0
        %1270 = vmatprep.subr.bf16.mxu0 0
        %1271 = vmatpush1.bf16.msra.mxu0 0
        %1272 = vmatprep.subr.bf16.mxu0 0
        %1273 = vmatpush1.bf16.msra.mxu0 0
        %1274 = vmatprep.subr.bf16.mxu0 0
        %1275 = vmatpush1.bf16.msra.mxu0 %v410
        %1276 = vmatprep.subr.bf16.mxu0 0
        %1277 = vmatpush2.bf16.msra.mxu0 0
        %1278 = vmatprep.subr.bf16.mxu0 0
        %1279 = vmatpush2.bf16.msra.mxu0 0
        %1280 = vmatprep.subr.bf16.mxu0 0
        %1281 = vmatpush2.bf16.msra.mxu0 0
        %1282 = vmatprep.subr.bf16.mxu0 0
        %1283 = vmatpush2.bf16.msra.mxu0 0
        %1284 = vmatprep.subr.bf16.mxu0 0
        %1285 = vmatpush2.bf16.msra.mxu0 0
        %1286 = vmatprep.subr.bf16.mxu0 0
        %1287 = vmatpush2.bf16.msra.mxu0 0
        %1288 = vmatprep.subr.bf16.mxu0 0
        %1289 = vmatpush2.bf16.msra.mxu0 0
        %1290 = vmatprep.subr.bf16.mxu0 0
        %1291 = vmatpush2.bf16.msra.mxu0 0
        %1292 = vmatprep.mubr.bf16.mxu0 0
        %1293 = vmatmul.mubr.bf16.gmra.mxu0 %v1258
        %v1294 = vpop.f32.mrf.mxu0
        %v1295 = vadd.f32 0.0, %v1294
        %v1296 = vpop.f32.mrf.mxu0
        %v1297 = vpop.f32.mrf.mxu0
        %v1298 = vpop.f32.mrf.mxu0
        %1299 = vdwg.mxu0
        %v1300 = vadd.f32 %v1242, %v1295
        %v1301 = vadd.f32 %v1300, %v460
        %v1302 = vmul.f32 %v1301, 0.2
        %v1303 = vmax.f32 %v1301, %v1302
        %v1304 = vpack.c.bf16 %v1303, %v1303
        %s1305 = scalar_lea.vmem %s201, 16 [#allocation2]
        %1306 = vst [vmem:[%s1305] sm:$0xf] %v1304
        %v1307 = vld [vmem:[%s1197] sm:$0xf]
        %v1308 = vld [vmem:[%s1197 + $0x4] sm:$0x1]
        %v1311 = vunpack.c.l.b16 %v1307
        %v1312 = vunpack.c.l.b16 %v1308
        %v1313 = vpack.c.b16 %v1312, %v1311
        %v1315 = vshrl.u32 %v1313, 16
        %v1317 = vshll.u32 %v1313, 16
        %v1319 = vrot.slane %v1317, 1
        %v1320 = vor.u32 %v1315, %v1319
        %v1322 = vsel %vm247, %v1320, 0
        %1324 = vmatprep.subr.bf16.mxu0 0
        %1325 = vmatpush1.bf16.msra.mxu0 0
        %1326 = vmatprep.subr.bf16.mxu0 0
        %1327 = vmatpush1.bf16.msra.mxu0 0
        %1328 = vmatprep.subr.bf16.mxu0 0
        %1329 = vmatpush1.bf16.msra.mxu0 0
        %1330 = vmatprep.subr.bf16.mxu0 0
        %1331 = vmatpush1.bf16.msra.mxu0 0
        %1332 = vmatprep.subr.bf16.mxu0 0
        %1333 = vmatpush1.bf16.msra.mxu0 0
        %1334 = vmatprep.subr.bf16.mxu0 0
        %1335 = vmatpush1.bf16.msra.mxu0 0
        %1336 = vmatprep.subr.bf16.mxu0 0
        %1337 = vmatpush1.bf16.msra.mxu0 0
        %1338 = vmatprep.subr.bf16.mxu0 0
        %1339 = vmatpush1.bf16.msra.mxu0 %v245
        %1340 = vmatprep.subr.bf16.mxu0 0
        %1341 = vmatpush2.bf16.msra.mxu0 0
        %1342 = vmatprep.subr.bf16.mxu0 0
        %1343 = vmatpush2.bf16.msra.mxu0 0
        %1344 = vmatprep.subr.bf16.mxu0 0
        %1345 = vmatpush2.bf16.msra.mxu0 0
        %1346 = vmatprep.subr.bf16.mxu0 0
        %1347 = vmatpush2.bf16.msra.mxu0 0
        %1348 = vmatprep.subr.bf16.mxu0 0
        %1349 = vmatpush2.bf16.msra.mxu0 0
        %1350 = vmatprep.subr.bf16.mxu0 0
        %1351 = vmatpush2.bf16.msra.mxu0 0
        %1352 = vmatprep.subr.bf16.mxu0 0
        %1353 = vmatpush2.bf16.msra.mxu0 0
        %1354 = vmatprep.subr.bf16.mxu0 0
        %1355 = vmatpush2.bf16.msra.mxu0 0
        %1356 = vmatprep.mubr.bf16.mxu0 0
        %1357 = vmatmul.mubr.bf16.gmra.mxu0 %v1322
        %v1358 = vpop.f32.mrf.mxu0
        %v1359 = vadd.f32 0.0, %v1358
        %v1360 = vpop.f32.mrf.mxu0
        %v1361 = vpop.f32.mrf.mxu0
        %v1362 = vpop.f32.mrf.mxu0
        %1363 = vdwg.mxu0
        %v1365 = vsel %vm247, %v1307, 0
        %1367 = vmatprep.subr.bf16.mxu0 0
        %1368 = vmatpush1.bf16.msra.mxu0 0
        %1369 = vmatprep.subr.bf16.mxu0 0
        %1370 = vmatpush1.bf16.msra.mxu0 0
        %1371 = vmatprep.subr.bf16.mxu0 0
        %1372 = vmatpush1.bf16.msra.mxu0 0
        %1373 = vmatprep.subr.bf16.mxu0 0
        %1374 = vmatpush1.bf16.msra.mxu0 0
        %1375 = vmatprep.subr.bf16.mxu0 0
        %1376 = vmatpush1.bf16.msra.mxu0 0
        %1377 = vmatprep.subr.bf16.mxu0 0
        %1378 = vmatpush1.bf16.msra.mxu0 0
        %1379 = vmatprep.subr.bf16.mxu0 0
        %1380 = vmatpush1.bf16.msra.mxu0 0
        %1381 = vmatprep.subr.bf16.mxu0 0
        %1382 = vmatpush1.bf16.msra.mxu0 %v295
        %1383 = vmatprep.subr.bf16.mxu0 0
        %1384 = vmatpush2.bf16.msra.mxu0 0
        %1385 = vmatprep.subr.bf16.mxu0 0
        %1386 = vmatpush2.bf16.msra.mxu0 0
        %1387 = vmatprep.subr.bf16.mxu0 0
        %1388 = vmatpush2.bf16.msra.mxu0 0
        %1389 = vmatprep.subr.bf16.mxu0 0
        %1390 = vmatpush2.bf16.msra.mxu0 0
        %1391 = vmatprep.subr.bf16.mxu0 0
        %1392 = vmatpush2.bf16.msra.mxu0 0
        %1393 = vmatprep.subr.bf16.mxu0 0
        %1394 = vmatpush2.bf16.msra.mxu0 0
        %1395 = vmatprep.subr.bf16.mxu0 0
        %1396 = vmatpush2.bf16.msra.mxu0 0
        %1397 = vmatprep.subr.bf16.mxu0 0
        %1398 = vmatpush2.bf16.msra.mxu0 0
        %1399 = vmatprep.mubr.bf16.mxu0 0
        %1400 = vmatmul.mubr.bf16.gmra.mxu0 %v1365
        %v1401 = vpop.f32.mrf.mxu0
        %v1402 = vadd.f32 %v1359, %v1401
        %v1403 = vpop.f32.mrf.mxu0
        %v1404 = vpop.f32.mrf.mxu0
        %v1405 = vpop.f32.mrf.mxu0
        %1406 = vdwg.mxu0
        %s1407 = scalar_lea.vmem %s206, 48
        %v1408 = vld [vmem:[%s1407] sm:$0xf]
        %v1410 = vsel %vm247, %v1408, 0
        %1412 = vmatprep.subr.bf16.mxu0 0
        %1413 = vmatpush1.bf16.msra.mxu0 0
        %1414 = vmatprep.subr.bf16.mxu0 0
        %1415 = vmatpush1.bf16.msra.mxu0 0
        %1416 = vmatprep.subr.bf16.mxu0 0
        %1417 = vmatpush1.bf16.msra.mxu0 0
        %1418 = vmatprep.subr.bf16.mxu0 0
        %1419 = vmatpush1.bf16.msra.mxu0 0
        %1420 = vmatprep.subr.bf16.mxu0 0
        %1421 = vmatpush1.bf16.msra.mxu0 0
        %1422 = vmatprep.subr.bf16.mxu0 0
        %1423 = vmatpush1.bf16.msra.mxu0 0
        %1424 = vmatprep.subr.bf16.mxu0 0
        %1425 = vmatpush1.bf16.msra.mxu0 0
        %1426 = vmatprep.subr.bf16.mxu0 0
        %1427 = vmatpush1.bf16.msra.mxu0 %v346
        %1428 = vmatprep.subr.bf16.mxu0 0
        %1429 = vmatpush2.bf16.msra.mxu0 0
        %1430 = vmatprep.subr.bf16.mxu0 0
        %1431 = vmatpush2.bf16.msra.mxu0 0
        %1432 = vmatprep.subr.bf16.mxu0 0
        %1433 = vmatpush2.bf16.msra.mxu0 0
        %1434 = vmatprep.subr.bf16.mxu0 0
        %1435 = vmatpush2.bf16.msra.mxu0 0
        %1436 = vmatprep.subr.bf16.mxu0 0
        %1437 = vmatpush2.bf16.msra.mxu0 0
        %1438 = vmatprep.subr.bf16.mxu0 0
        %1439 = vmatpush2.bf16.msra.mxu0 0
        %1440 = vmatprep.subr.bf16.mxu0 0
        %1441 = vmatpush2.bf16.msra.mxu0 0
        %1442 = vmatprep.subr.bf16.mxu0 0
        %1443 = vmatpush2.bf16.msra.mxu0 0
        %1444 = vmatprep.mubr.bf16.mxu0 0
        %1445 = vmatmul.mubr.bf16.gmra.mxu0 %v1410
        %v1446 = vpop.f32.mrf.mxu0
        %v1447 = vadd.f32 0.0, %v1446
        %v1448 = vpop.f32.mrf.mxu0
        %v1449 = vpop.f32.mrf.mxu0
        %v1450 = vpop.f32.mrf.mxu0
        %1451 = vdwg.mxu0
        %v1452 = vadd.f32 %v1402, %v1447
        %v1453 = vld [vmem:[%s1407] sm:$0xf]
        %v1454 = vld [vmem:[%s1407 + $0x4] sm:$0x1]
        %v1457 = vunpack.c.l.b16 %v1453
        %v1458 = vunpack.c.l.b16 %v1454
        %v1459 = vpack.c.b16 %v1458, %v1457
        %v1461 = vshrl.u32 %v1459, 16
        %v1463 = vshll.u32 %v1459, 16
        %v1465 = vrot.slane %v1463, 1
        %v1466 = vor.u32 %v1461, %v1465
        %v1468 = vsel %vm247, %v1466, 0
        %1470 = vmatprep.subr.bf16.mxu0 0
        %1471 = vmatpush1.bf16.msra.mxu0 0
        %1472 = vmatprep.subr.bf16.mxu0 0
        %1473 = vmatpush1.bf16.msra.mxu0 0
        %1474 = vmatprep.subr.bf16.mxu0 0
        %1475 = vmatpush1.bf16.msra.mxu0 0
        %1476 = vmatprep.subr.bf16.mxu0 0
        %1477 = vmatpush1.bf16.msra.mxu0 0
        %1478 = vmatprep.subr.bf16.mxu0 0
        %1479 = vmatpush1.bf16.msra.mxu0 0
        %1480 = vmatprep.subr.bf16.mxu0 0
        %1481 = vmatpush1.bf16.msra.mxu0 0
        %1482 = vmatprep.subr.bf16.mxu0 0
        %1483 = vmatpush1.bf16.msra.mxu0 0
        %1484 = vmatprep.subr.bf16.mxu0 0
        %1485 = vmatpush1.bf16.msra.mxu0 %v410
        %1486 = vmatprep.subr.bf16.mxu0 0
        %1487 = vmatpush2.bf16.msra.mxu0 0
        %1488 = vmatprep.subr.bf16.mxu0 0
        %1489 = vmatpush2.bf16.msra.mxu0 0
        %1490 = vmatprep.subr.bf16.mxu0 0
        %1491 = vmatpush2.bf16.msra.mxu0 0
        %1492 = vmatprep.subr.bf16.mxu0 0
        %1493 = vmatpush2.bf16.msra.mxu0 0
        %1494 = vmatprep.subr.bf16.mxu0 0
        %1495 = vmatpush2.bf16.msra.mxu0 0
        %1496 = vmatprep.subr.bf16.mxu0 0
        %1497 = vmatpush2.bf16.msra.mxu0 0
        %1498 = vmatprep.subr.bf16.mxu0 0
        %1499 = vmatpush2.bf16.msra.mxu0 0
        %1500 = vmatprep.subr.bf16.mxu0 0
        %1501 = vmatpush2.bf16.msra.mxu0 0
        %1502 = vmatprep.mubr.bf16.mxu0 0
        %1503 = vmatmul.mubr.bf16.gmra.mxu0 %v1468
        %v1504 = vpop.f32.mrf.mxu0
        %v1505 = vadd.f32 0.0, %v1504
        %v1506 = vpop.f32.mrf.mxu0
        %v1507 = vpop.f32.mrf.mxu0
        %v1508 = vpop.f32.mrf.mxu0
        %1509 = vdwg.mxu0
        %v1510 = vadd.f32 %v1452, %v1505
        %v1511 = vadd.f32 %v1510, %v460
        %v1512 = vmul.f32 %v1511, 0.2
        %v1513 = vmax.f32 %v1511, %v1512
        %v1514 = vpack.c.bf16 %v1513, %v1513
        %s1515 = scalar_lea.vmem %s201, 20 [#allocation2]
        %1516 = vst [vmem:[%s1515] sm:$0xf] %v1514
        %v1517 = vld [vmem:[%s1407] sm:$0xf]
        %v1518 = vld [vmem:[%s1407 + $0x4] sm:$0x1]
        %v1521 = vunpack.c.l.b16 %v1517
        %v1522 = vunpack.c.l.b16 %v1518
        %v1523 = vpack.c.b16 %v1522, %v1521
        %v1525 = vshrl.u32 %v1523, 16
        %v1527 = vshll.u32 %v1523, 16
        %v1529 = vrot.slane %v1527, 1
        %v1530 = vor.u32 %v1525, %v1529
        %v1532 = vsel %vm247, %v1530, 0
        %1534 = vmatprep.subr.bf16.mxu0 0
        %1535 = vmatpush1.bf16.msra.mxu0 0
        %1536 = vmatprep.subr.bf16.mxu0 0
        %1537 = vmatpush1.bf16.msra.mxu0 0
        %1538 = vmatprep.subr.bf16.mxu0 0
        %1539 = vmatpush1.bf16.msra.mxu0 0
        %1540 = vmatprep.subr.bf16.mxu0 0
        %1541 = vmatpush1.bf16.msra.mxu0 0
        %1542 = vmatprep.subr.bf16.mxu0 0
        %1543 = vmatpush1.bf16.msra.mxu0 0
        %1544 = vmatprep.subr.bf16.mxu0 0
        %1545 = vmatpush1.bf16.msra.mxu0 0
        %1546 = vmatprep.subr.bf16.mxu0 0
        %1547 = vmatpush1.bf16.msra.mxu0 0
        %1548 = vmatprep.subr.bf16.mxu0 0
        %1549 = vmatpush1.bf16.msra.mxu0 %v245
        %1550 = vmatprep.subr.bf16.mxu0 0
        %1551 = vmatpush2.bf16.msra.mxu0 0
        %1552 = vmatprep.subr.bf16.mxu0 0
        %1553 = vmatpush2.bf16.msra.mxu0 0
        %1554 = vmatprep.subr.bf16.mxu0 0
        %1555 = vmatpush2.bf16.msra.mxu0 0
        %1556 = vmatprep.subr.bf16.mxu0 0
        %1557 = vmatpush2.bf16.msra.mxu0 0
        %1558 = vmatprep.subr.bf16.mxu0 0
        %1559 = vmatpush2.bf16.msra.mxu0 0
        %1560 = vmatprep.subr.bf16.mxu0 0
        %1561 = vmatpush2.bf16.msra.mxu0 0
        %1562 = vmatprep.subr.bf16.mxu0 0
        %1563 = vmatpush2.bf16.msra.mxu0 0
        %1564 = vmatprep.subr.bf16.mxu0 0
        %1565 = vmatpush2.bf16.msra.mxu0 0
        %1566 = vmatprep.mubr.bf16.mxu0 0
        %1567 = vmatmul.mubr.bf16.gmra.mxu0 %v1532
        %v1568 = vpop.f32.mrf.mxu0
        %v1569 = vadd.f32 0.0, %v1568
        %v1570 = vpop.f32.mrf.mxu0
        %v1571 = vpop.f32.mrf.mxu0
        %v1572 = vpop.f32.mrf.mxu0
        %1573 = vdwg.mxu0
        %v1575 = vsel %vm247, %v1517, 0
        %1577 = vmatprep.subr.bf16.mxu0 0
        %1578 = vmatpush1.bf16.msra.mxu0 0
        %1579 = vmatprep.subr.bf16.mxu0 0
        %1580 = vmatpush1.bf16.msra.mxu0 0
        %1581 = vmatprep.subr.bf16.mxu0 0
        %1582 = vmatpush1.bf16.msra.mxu0 0
        %1583 = vmatprep.subr.bf16.mxu0 0
        %1584 = vmatpush1.bf16.msra.mxu0 0
        %1585 = vmatprep.subr.bf16.mxu0 0
        %1586 = vmatpush1.bf16.msra.mxu0 0
        %1587 = vmatprep.subr.bf16.mxu0 0
        %1588 = vmatpush1.bf16.msra.mxu0 0
        %1589 = vmatprep.subr.bf16.mxu0 0
        %1590 = vmatpush1.bf16.msra.mxu0 0
        %1591 = vmatprep.subr.bf16.mxu0 0
        %1592 = vmatpush1.bf16.msra.mxu0 %v295
        %1593 = vmatprep.subr.bf16.mxu0 0
        %1594 = vmatpush2.bf16.msra.mxu0 0
        %1595 = vmatprep.subr.bf16.mxu0 0
        %1596 = vmatpush2.bf16.msra.mxu0 0
        %1597 = vmatprep.subr.bf16.mxu0 0
        %1598 = vmatpush2.bf16.msra.mxu0 0
        %1599 = vmatprep.subr.bf16.mxu0 0
        %1600 = vmatpush2.bf16.msra.mxu0 0
        %1601 = vmatprep.subr.bf16.mxu0 0
        %1602 = vmatpush2.bf16.msra.mxu0 0
        %1603 = vmatprep.subr.bf16.mxu0 0
        %1604 = vmatpush2.bf16.msra.mxu0 0
        %1605 = vmatprep.subr.bf16.mxu0 0
        %1606 = vmatpush2.bf16.msra.mxu0 0
        %1607 = vmatprep.subr.bf16.mxu0 0
        %1608 = vmatpush2.bf16.msra.mxu0 0
        %1609 = vmatprep.mubr.bf16.mxu0 0
        %1610 = vmatmul.mubr.bf16.gmra.mxu0 %v1575
        %v1611 = vpop.f32.mrf.mxu0
        %v1612 = vadd.f32 %v1569, %v1611
        %v1613 = vpop.f32.mrf.mxu0
        %v1614 = vpop.f32.mrf.mxu0
        %v1615 = vpop.f32.mrf.mxu0
        %1616 = vdwg.mxu0
        %s1617 = scalar_lea.vmem %s206, 56
        %v1618 = vld [vmem:[%s1617] sm:$0xf]
        %v1620 = vsel %vm247, %v1618, 0
        %1622 = vmatprep.subr.bf16.mxu0 0
        %1623 = vmatpush1.bf16.msra.mxu0 0
        %1624 = vmatprep.subr.bf16.mxu0 0
        %1625 = vmatpush1.bf16.msra.mxu0 0
        %1626 = vmatprep.subr.bf16.mxu0 0
        %1627 = vmatpush1.bf16.msra.mxu0 0
        %1628 = vmatprep.subr.bf16.mxu0 0
        %1629 = vmatpush1.bf16.msra.mxu0 0
        %1630 = vmatprep.subr.bf16.mxu0 0
        %1631 = vmatpush1.bf16.msra.mxu0 0
        %1632 = vmatprep.subr.bf16.mxu0 0
        %1633 = vmatpush1.bf16.msra.mxu0 0
        %1634 = vmatprep.subr.bf16.mxu0 0
        %1635 = vmatpush1.bf16.msra.mxu0 0
        %1636 = vmatprep.subr.bf16.mxu0 0
        %1637 = vmatpush1.bf16.msra.mxu0 %v346
        %1638 = vmatprep.subr.bf16.mxu0 0
        %1639 = vmatpush2.bf16.msra.mxu0 0
        %1640 = vmatprep.subr.bf16.mxu0 0
        %1641 = vmatpush2.bf16.msra.mxu0 0
        %1642 = vmatprep.subr.bf16.mxu0 0
        %1643 = vmatpush2.bf16.msra.mxu0 0
        %1644 = vmatprep.subr.bf16.mxu0 0
        %1645 = vmatpush2.bf16.msra.mxu0 0
        %1646 = vmatprep.subr.bf16.mxu0 0
        %1647 = vmatpush2.bf16.msra.mxu0 0
        %1648 = vmatprep.subr.bf16.mxu0 0
        %1649 = vmatpush2.bf16.msra.mxu0 0
        %1650 = vmatprep.subr.bf16.mxu0 0
        %1651 = vmatpush2.bf16.msra.mxu0 0
        %1652 = vmatprep.subr.bf16.mxu0 0
        %1653 = vmatpush2.bf16.msra.mxu0 0
        %1654 = vmatprep.mubr.bf16.mxu0 0
        %1655 = vmatmul.mubr.bf16.gmra.mxu0 %v1620
        %v1656 = vpop.f32.mrf.mxu0
        %v1657 = vadd.f32 0.0, %v1656
        %v1658 = vpop.f32.mrf.mxu0
        %v1659 = vpop.f32.mrf.mxu0
        %v1660 = vpop.f32.mrf.mxu0
        %1661 = vdwg.mxu0
        %v1662 = vadd.f32 %v1612, %v1657
        %v1663 = vld [vmem:[%s1617] sm:$0xf]
        %v1664 = vld [vmem:[%s1617 + $0x4] sm:$0x1]
        %v1667 = vunpack.c.l.b16 %v1663
        %v1668 = vunpack.c.l.b16 %v1664
        %v1669 = vpack.c.b16 %v1668, %v1667
        %v1671 = vshrl.u32 %v1669, 16
        %v1673 = vshll.u32 %v1669, 16
        %v1675 = vrot.slane %v1673, 1
        %v1676 = vor.u32 %v1671, %v1675
        %v1678 = vsel %vm247, %v1676, 0
        %1680 = vmatprep.subr.bf16.mxu0 0
        %1681 = vmatpush1.bf16.msra.mxu0 0
        %1682 = vmatprep.subr.bf16.mxu0 0
        %1683 = vmatpush1.bf16.msra.mxu0 0
        %1684 = vmatprep.subr.bf16.mxu0 0
        %1685 = vmatpush1.bf16.msra.mxu0 0
        %1686 = vmatprep.subr.bf16.mxu0 0
        %1687 = vmatpush1.bf16.msra.mxu0 0
        %1688 = vmatprep.subr.bf16.mxu0 0
        %1689 = vmatpush1.bf16.msra.mxu0 0
        %1690 = vmatprep.subr.bf16.mxu0 0
        %1691 = vmatpush1.bf16.msra.mxu0 0
        %1692 = vmatprep.subr.bf16.mxu0 0
        %1693 = vmatpush1.bf16.msra.mxu0 0
        %1694 = vmatprep.subr.bf16.mxu0 0
        %1695 = vmatpush1.bf16.msra.mxu0 %v410
        %1696 = vmatprep.subr.bf16.mxu0 0
        %1697 = vmatpush2.bf16.msra.mxu0 0
        %1698 = vmatprep.subr.bf16.mxu0 0
        %1699 = vmatpush2.bf16.msra.mxu0 0
        %1700 = vmatprep.subr.bf16.mxu0 0
        %1701 = vmatpush2.bf16.msra.mxu0 0
        %1702 = vmatprep.subr.bf16.mxu0 0
        %1703 = vmatpush2.bf16.msra.mxu0 0
        %1704 = vmatprep.subr.bf16.mxu0 0
        %1705 = vmatpush2.bf16.msra.mxu0 0
        %1706 = vmatprep.subr.bf16.mxu0 0
        %1707 = vmatpush2.bf16.msra.mxu0 0
        %1708 = vmatprep.subr.bf16.mxu0 0
        %1709 = vmatpush2.bf16.msra.mxu0 0
        %1710 = vmatprep.subr.bf16.mxu0 0
        %1711 = vmatpush2.bf16.msra.mxu0 0
        %1712 = vmatprep.mubr.bf16.mxu0 0
        %1713 = vmatmul.mubr.bf16.gmra.mxu0 %v1678
        %v1714 = vpop.f32.mrf.mxu0
        %v1715 = vadd.f32 0.0, %v1714
        %v1716 = vpop.f32.mrf.mxu0
        %v1717 = vpop.f32.mrf.mxu0
        %v1718 = vpop.f32.mrf.mxu0
        %1719 = vdwg.mxu0
        %v1720 = vadd.f32 %v1662, %v1715
        %v1721 = vadd.f32 %v1720, %v460
        %v1722 = vmul.f32 %v1721, 0.2
        %v1723 = vmax.f32 %v1721, %v1722
        %v1724 = vpack.c.bf16 %v1723, %v1723
        %s1725 = scalar_lea.vmem %s201, 24 [#allocation2]
        %1726 = vst [vmem:[%s1725] sm:$0xf] %v1724
        %v1727 = vld [vmem:[%s1617] sm:$0xf]
        %v1728 = vld [vmem:[%s1617 + $0x4] sm:$0x1]
        %v1731 = vunpack.c.l.b16 %v1727
        %v1732 = vunpack.c.l.b16 %v1728
        %v1733 = vpack.c.b16 %v1732, %v1731
        %v1735 = vshrl.u32 %v1733, 16
        %v1737 = vshll.u32 %v1733, 16
        %v1739 = vrot.slane %v1737, 1
        %v1740 = vor.u32 %v1735, %v1739
        %v1742 = vsel %vm247, %v1740, 0
        %1744 = vmatprep.subr.bf16.mxu0 0
        %1745 = vmatpush1.bf16.msra.mxu0 0
        %1746 = vmatprep.subr.bf16.mxu0 0
        %1747 = vmatpush1.bf16.msra.mxu0 0
        %1748 = vmatprep.subr.bf16.mxu0 0
        %1749 = vmatpush1.bf16.msra.mxu0 0
        %1750 = vmatprep.subr.bf16.mxu0 0
        %1751 = vmatpush1.bf16.msra.mxu0 0
        %1752 = vmatprep.subr.bf16.mxu0 0
        %1753 = vmatpush1.bf16.msra.mxu0 0
        %1754 = vmatprep.subr.bf16.mxu0 0
        %1755 = vmatpush1.bf16.msra.mxu0 0
        %1756 = vmatprep.subr.bf16.mxu0 0
        %1757 = vmatpush1.bf16.msra.mxu0 0
        %1758 = vmatprep.subr.bf16.mxu0 0
        %1759 = vmatpush1.bf16.msra.mxu0 %v245
        %1760 = vmatprep.subr.bf16.mxu0 0
        %1761 = vmatpush2.bf16.msra.mxu0 0
        %1762 = vmatprep.subr.bf16.mxu0 0
        %1763 = vmatpush2.bf16.msra.mxu0 0
        %1764 = vmatprep.subr.bf16.mxu0 0
        %1765 = vmatpush2.bf16.msra.mxu0 0
        %1766 = vmatprep.subr.bf16.mxu0 0
        %1767 = vmatpush2.bf16.msra.mxu0 0
        %1768 = vmatprep.subr.bf16.mxu0 0
        %1769 = vmatpush2.bf16.msra.mxu0 0
        %1770 = vmatprep.subr.bf16.mxu0 0
        %1771 = vmatpush2.bf16.msra.mxu0 0
        %1772 = vmatprep.subr.bf16.mxu0 0
        %1773 = vmatpush2.bf16.msra.mxu0 0
        %1774 = vmatprep.subr.bf16.mxu0 0
        %1775 = vmatpush2.bf16.msra.mxu0 0
        %1776 = vmatprep.mubr.bf16.mxu0 0
        %1777 = vmatmul.mubr.bf16.gmra.mxu0 %v1742
        %v1778 = vpop.f32.mrf.mxu0
        %v1779 = vadd.f32 0.0, %v1778
        %v1780 = vpop.f32.mrf.mxu0
        %v1781 = vpop.f32.mrf.mxu0
        %v1782 = vpop.f32.mrf.mxu0
        %1783 = vdwg.mxu0
        %v1785 = vsel %vm247, %v1727, 0
        %1787 = vmatprep.subr.bf16.mxu0 0
        %1788 = vmatpush1.bf16.msra.mxu0 0
        %1789 = vmatprep.subr.bf16.mxu0 0
        %1790 = vmatpush1.bf16.msra.mxu0 0
        %1791 = vmatprep.subr.bf16.mxu0 0
        %1792 = vmatpush1.bf16.msra.mxu0 0
        %1793 = vmatprep.subr.bf16.mxu0 0
        %1794 = vmatpush1.bf16.msra.mxu0 0
        %1795 = vmatprep.subr.bf16.mxu0 0
        %1796 = vmatpush1.bf16.msra.mxu0 0
        %1797 = vmatprep.subr.bf16.mxu0 0
        %1798 = vmatpush1.bf16.msra.mxu0 0
        %1799 = vmatprep.subr.bf16.mxu0 0
        %1800 = vmatpush1.bf16.msra.mxu0 0
        %1801 = vmatprep.subr.bf16.mxu0 0
        %1802 = vmatpush1.bf16.msra.mxu0 %v295
        %1803 = vmatprep.subr.bf16.mxu0 0
        %1804 = vmatpush2.bf16.msra.mxu0 0
        %1805 = vmatprep.subr.bf16.mxu0 0
        %1806 = vmatpush2.bf16.msra.mxu0 0
        %1807 = vmatprep.subr.bf16.mxu0 0
        %1808 = vmatpush2.bf16.msra.mxu0 0
        %1809 = vmatprep.subr.bf16.mxu0 0
        %1810 = vmatpush2.bf16.msra.mxu0 0
        %1811 = vmatprep.subr.bf16.mxu0 0
        %1812 = vmatpush2.bf16.msra.mxu0 0
        %1813 = vmatprep.subr.bf16.mxu0 0
        %1814 = vmatpush2.bf16.msra.mxu0 0
        %1815 = vmatprep.subr.bf16.mxu0 0
        %1816 = vmatpush2.bf16.msra.mxu0 0
        %1817 = vmatprep.subr.bf16.mxu0 0
        %1818 = vmatpush2.bf16.msra.mxu0 0
        %1819 = vmatprep.mubr.bf16.mxu0 0
        %1820 = vmatmul.mubr.bf16.gmra.mxu0 %v1785
        %v1821 = vpop.f32.mrf.mxu0
        %v1822 = vadd.f32 %v1779, %v1821
        %v1823 = vpop.f32.mrf.mxu0
        %v1824 = vpop.f32.mrf.mxu0
        %v1825 = vpop.f32.mrf.mxu0
        %1826 = vdwg.mxu0
        %s1827 = scalar_lea.vmem %s206, 64
        %v1828 = vld [vmem:[%s1827] sm:$0xf]
        %v1830 = vsel %vm247, %v1828, 0
        %1832 = vmatprep.subr.bf16.mxu0 0
        %1833 = vmatpush1.bf16.msra.mxu0 0
        %1834 = vmatprep.subr.bf16.mxu0 0
        %1835 = vmatpush1.bf16.msra.mxu0 0
        %1836 = vmatprep.subr.bf16.mxu0 0
        %1837 = vmatpush1.bf16.msra.mxu0 0
        %1838 = vmatprep.subr.bf16.mxu0 0
        %1839 = vmatpush1.bf16.msra.mxu0 0
        %1840 = vmatprep.subr.bf16.mxu0 0
        %1841 = vmatpush1.bf16.msra.mxu0 0
        %1842 = vmatprep.subr.bf16.mxu0 0
        %1843 = vmatpush1.bf16.msra.mxu0 0
        %1844 = vmatprep.subr.bf16.mxu0 0
        %1845 = vmatpush1.bf16.msra.mxu0 0
        %1846 = vmatprep.subr.bf16.mxu0 0
        %1847 = vmatpush1.bf16.msra.mxu0 %v346
        %1848 = vmatprep.subr.bf16.mxu0 0
        %1849 = vmatpush2.bf16.msra.mxu0 0
        %1850 = vmatprep.subr.bf16.mxu0 0
        %1851 = vmatpush2.bf16.msra.mxu0 0
        %1852 = vmatprep.subr.bf16.mxu0 0
        %1853 = vmatpush2.bf16.msra.mxu0 0
        %1854 = vmatprep.subr.bf16.mxu0 0
        %1855 = vmatpush2.bf16.msra.mxu0 0
        %1856 = vmatprep.subr.bf16.mxu0 0
        %1857 = vmatpush2.bf16.msra.mxu0 0
        %1858 = vmatprep.subr.bf16.mxu0 0
        %1859 = vmatpush2.bf16.msra.mxu0 0
        %1860 = vmatprep.subr.bf16.mxu0 0
        %1861 = vmatpush2.bf16.msra.mxu0 0
        %1862 = vmatprep.subr.bf16.mxu0 0
        %1863 = vmatpush2.bf16.msra.mxu0 0
        %1864 = vmatprep.mubr.bf16.mxu0 0
        %1865 = vmatmul.mubr.bf16.gmra.mxu0 %v1830
        %v1866 = vpop.f32.mrf.mxu0
        %v1867 = vadd.f32 0.0, %v1866
        %v1868 = vpop.f32.mrf.mxu0
        %v1869 = vpop.f32.mrf.mxu0
        %v1870 = vpop.f32.mrf.mxu0
        %1871 = vdwg.mxu0
        %v1872 = vadd.f32 %v1822, %v1867
        %v1873 = vld [vmem:[%s1827] sm:$0xf]
        %v1874 = vld [vmem:[%s1827 + $0x4] sm:$0x1]
        %v1877 = vunpack.c.l.b16 %v1873
        %v1878 = vunpack.c.l.b16 %v1874
        %v1879 = vpack.c.b16 %v1878, %v1877
        %v1881 = vshrl.u32 %v1879, 16
        %v1883 = vshll.u32 %v1879, 16
        %v1885 = vrot.slane %v1883, 1
        %v1886 = vor.u32 %v1881, %v1885
        %v1888 = vsel %vm247, %v1886, 0
        %1890 = vmatprep.subr.bf16.mxu0 0
        %1891 = vmatpush1.bf16.msra.mxu0 0
        %1892 = vmatprep.subr.bf16.mxu0 0
        %1893 = vmatpush1.bf16.msra.mxu0 0
        %1894 = vmatprep.subr.bf16.mxu0 0
        %1895 = vmatpush1.bf16.msra.mxu0 0
        %1896 = vmatprep.subr.bf16.mxu0 0
        %1897 = vmatpush1.bf16.msra.mxu0 0
        %1898 = vmatprep.subr.bf16.mxu0 0
        %1899 = vmatpush1.bf16.msra.mxu0 0
        %1900 = vmatprep.subr.bf16.mxu0 0
        %1901 = vmatpush1.bf16.msra.mxu0 0
        %1902 = vmatprep.subr.bf16.mxu0 0
        %1903 = vmatpush1.bf16.msra.mxu0 0
        %1904 = vmatprep.subr.bf16.mxu0 0
        %1905 = vmatpush1.bf16.msra.mxu0 %v410
        %1906 = vmatprep.subr.bf16.mxu0 0
        %1907 = vmatpush2.bf16.msra.mxu0 0
        %1908 = vmatprep.subr.bf16.mxu0 0
        %1909 = vmatpush2.bf16.msra.mxu0 0
        %1910 = vmatprep.subr.bf16.mxu0 0
        %1911 = vmatpush2.bf16.msra.mxu0 0
        %1912 = vmatprep.subr.bf16.mxu0 0
        %1913 = vmatpush2.bf16.msra.mxu0 0
        %1914 = vmatprep.subr.bf16.mxu0 0
        %1915 = vmatpush2.bf16.msra.mxu0 0
        %1916 = vmatprep.subr.bf16.mxu0 0
        %1917 = vmatpush2.bf16.msra.mxu0 0
        %1918 = vmatprep.subr.bf16.mxu0 0
        %1919 = vmatpush2.bf16.msra.mxu0 0
        %1920 = vmatprep.subr.bf16.mxu0 0
        %1921 = vmatpush2.bf16.msra.mxu0 0
        %1922 = vmatprep.mubr.bf16.mxu0 0
        %1923 = vmatmul.mubr.bf16.gmra.mxu0 %v1888
        %v1924 = vpop.f32.mrf.mxu0
        %v1925 = vadd.f32 0.0, %v1924
        %v1926 = vpop.f32.mrf.mxu0
        %v1927 = vpop.f32.mrf.mxu0
        %v1928 = vpop.f32.mrf.mxu0
        %1929 = vdwg.mxu0
        %v1930 = vadd.f32 %v1872, %v1925
        %v1931 = vadd.f32 %v1930, %v460
        %v1932 = vmul.f32 %v1931, 0.2
        %v1933 = vmax.f32 %v1931, %v1932
        %v1934 = vpack.c.bf16 %v1933, %v1933
        %s1935 = scalar_lea.vmem %s201, 28 [#allocation2]
        %1936 = vst [vmem:[%s1935] sm:$0xf] %v1934
        %s1937 = sand.u32 %s117, 1
        %s1938 = scalar_lea.sflag [#allocation3], %s1937
        %s1939 = sand.u32 %s117, 1
        %s1940 = smul.addr %s1939, 32
        %s1941 = scalar_lea.vmem [#allocation2], %s1940
        // Predicated region
        $region33: #{tpu_custom_call.1} parent=31 // pred_check
          %p1942 = pneg %p127
        $region34: #{tpu_custom_call.1} parent=31 // pred_check_branch
          %1944 = sbr.rel (%p1942) target = $region36
        $region35: #{tpu_custom_call.1} parent=31 // pred_region
          %s1946 = ssub.s32 512, 512
          %1947 = vsyncadd %s1938, %s1946
          %s1948 = smul.addr %s21, 8
          %s1949 = sadd.s32 %s22, %s1948
          %s1950 = smul.addr %s1949, 64
          %s1951 = scalar_lea.hbm %s3, %s1950
          %s1952 = sshll.u32 %s1941, 4
          %s1953 = int_to_ptr.vmem [resolvable:$true] %s1952
          %1958 = dma.vmem_to_hbm [thread:$0]  %s1953, 512, %s1951, %s1938, 64, 64, 4
        $region36: #{tpu_custom_call.1} parent=31 // pred_fallthru
          _
      $region32: #{tpu_custom_call.1} parent=5 // pred_fallthru
        _
      %p1959 = scmp.le.s32.totalorder 2, %s12
      // Predicated region
      $region37: #{tpu_custom_call.1} parent=5 // pred_check
        %p1960 = pneg %p1959
      $region38: #{tpu_custom_call.1} parent=5 // pred_check_branch
        %1962 = sbr.rel (%p1960) target = $region40
      $region39: #{tpu_custom_call.1} parent=5 // pred_region
        %s1963 = ssub.s32 %s12, 2
        // Predicated region
        $region41: #{tpu_custom_call.1} parent=39 // pred_check
          %p1964 = pneg %p133
        $region42: #{tpu_custom_call.1} parent=39 // pred_check_branch
          %1966 = sbr.rel (%p1964) target = $region44
        $region43: #{tpu_custom_call.1} parent=39 // pred_region
          %s1967 = sand.u32 %s118, 1
          %s1968 = scalar_lea.sflag [#allocation3], %s1967
          %s1969 = sand.u32 %s118, 1
          %s1970 = smul.addr %s1969, 32
          %s1971 = scalar_lea.vmem [#allocation2], %s1970
          %1972 = dma.done %s1968, 512
        $region44: #{tpu_custom_call.1} parent=39 // pred_fallthru
          _
      $region40: #{tpu_custom_call.1} parent=5 // pred_fallthru
        _
    $region6: #{tpu_custom_call.1} parent=1 // loop_footer
      %s16 = sadd.s32 1, %s12
    $region7: #{tpu_custom_call.1} parent=1 // loop_footer_branch
      %11 = sbr.rel target = $region3
    $region8: #{tpu_custom_call.1} parent=1 // loop_exit
      _
    %1973 = vsyncpa [#allocation3], 1
    %s1974 = scalar_lea.sflag [#allocation3], 1
    %1975 = vsyncpa %s1974, 1

</llo_original>
